<compile_context>
chip_gen: v7x
topology: tpu7x:2x2x1
jax: 0.10.0
libtpu: 0.0.40
codegen_flags: <defaults>
</compile_context>

<pallas_src>
import math

import jax
import jax.numpy as jnp
from jax.experimental import pallas as pl
from jax.experimental.pallas import tpu as pltpu

D_MODEL = 32
N_HEADS = 4
D_HEAD = D_MODEL // N_HEADS
D_FF = 64
EPS = 1e-6
SCALE = 1.0 / math.sqrt(D_HEAD)


# ------------------------------------------------------------------ kernel

def _decoder_layer_kernel(
    x_ref, mem_ref, src_mask_ref, tgt_mask_ref,
    ln0_g, ln0_b, self_wqkv, self_bqkv, self_wo, self_bo,
    ln1_g, ln1_b, src_wq, src_bq, src_wkv, src_bkv, src_wo, src_bo,
    ln2_g, ln2_b, ffn_w1, ffn_b1, ffn_w2, ffn_b2,
    o_ref,
):
    x = x_ref[0].astype(jnp.float32)          # (Tq, D)
    mem = mem_ref[0].astype(jnp.float32)      # (Tk, D)
    src_mask = src_mask_ref[0]                # (Tq, Tk), 1.0 = attend
    tgt_mask = tgt_mask_ref[0]                # (Tq, Tq), 1.0 = attend

    def layer_norm(v, g_ref, b_ref):
        mean = jnp.mean(v, axis=-1, keepdims=True)
        var = jnp.mean(jnp.square(v - mean), axis=-1, keepdims=True)
        inv = jax.lax.rsqrt(var + EPS)
        return (v - mean) * inv * g_ref[...] + b_ref[...]

    def mha(q_src, q_off, kv_src, k_off, v_off, mask):
        """Multi-head attention on packed projections; heads unrolled."""
        heads = []
        for h in range(N_HEADS):
            lo = h * D_HEAD
            qh = q_src[:, q_off + lo:q_off + lo + D_HEAD]      # (Tq, dh)
            kh = kv_src[:, k_off + lo:k_off + lo + D_HEAD]     # (Tk, dh)
            vh = kv_src[:, v_off + lo:v_off + lo + D_HEAD]     # (Tk, dh)
            s = jnp.dot(qh, kh.T, preferred_element_type=jnp.float32) * SCALE
            s = jnp.where(mask > 0.0, s, -1e9)                 # masked_fill
            s = s - jnp.max(s, axis=-1, keepdims=True)
            p = jnp.exp(s)
            p = p * pl.reciprocal(jnp.sum(p, axis=-1, keepdims=True),
                                  approx=True)
            heads.append(jnp.dot(p, vh, preferred_element_type=jnp.float32))
        return jnp.concatenate(heads, axis=-1)                 # (Tq, D)

    # -------- sublayer 0: self-attention (fused QKV) + residual
    xn = layer_norm(x, ln0_g, ln0_b)
    qkv = (jnp.dot(xn, self_wqkv[...], preferred_element_type=jnp.float32)
           + self_bqkv[...])                                   # (Tq, 3D)
    attn = mha(qkv, 0, qkv, D_MODEL, 2 * D_MODEL, tgt_mask)
    x = x + (jnp.dot(attn, self_wo[...], preferred_element_type=jnp.float32)
             + self_bo[...])

    # -------- sublayer 1: cross-attention (fused KV on memory) + residual
    xn = layer_norm(x, ln1_g, ln1_b)
    q = (jnp.dot(xn, src_wq[...], preferred_element_type=jnp.float32)
         + src_bq[...])                                        # (Tq, D)
    kv = (jnp.dot(mem, src_wkv[...], preferred_element_type=jnp.float32)
          + src_bkv[...])                                      # (Tk, 2D)
    attn = mha(q, 0, kv, 0, D_MODEL, src_mask)
    x = x + (jnp.dot(attn, src_wo[...], preferred_element_type=jnp.float32)
             + src_bo[...])

    # -------- sublayer 2: feed-forward + residual
    xn = layer_norm(x, ln2_g, ln2_b)
    h1 = jnp.maximum(
        jnp.dot(xn, ffn_w1[...], preferred_element_type=jnp.float32)
        + ffn_b1[...], 0.0)                                    # (Tq, D_FF)
    x = x + (jnp.dot(h1, ffn_w2[...], preferred_element_type=jnp.float32)
             + ffn_b2[...])

    o_ref[0] = x.astype(o_ref.dtype)


# ------------------------------------------------------------------ wrapper

def decoder_layer(x, memory, src_mask, tgt_mask, params):
    B, Tq, D = x.shape
    _, Tk, _ = memory.shape
    sa, ca, ff = params["self_attn"], params["src_attn"], params["ffn"]

    # Fuse projection weights once in the wrapper (one MXU matmul each).
    self_wqkv = jnp.concatenate([sa["wq"], sa["wk"], sa["wv"]], axis=1)
    self_bqkv = jnp.concatenate([sa["bq"], sa["bk"], sa["bv"]]).reshape(1, 3 * D)
    src_wkv = jnp.concatenate([ca["wk"], ca["wv"]], axis=1)
    src_bkv = jnp.concatenate([ca["bk"], ca["bv"]]).reshape(1, 2 * D)

    row = lambda a: a.reshape(1, -1)

    def full(shape):
        return pl.BlockSpec(shape, lambda b, _n=len(shape): (0,) * _n)

    in_specs = [
        pl.BlockSpec((1, Tq, D), lambda b: (b, 0, 0)),     # x
        pl.BlockSpec((1, Tk, D), lambda b: (b, 0, 0)),     # memory
        pl.BlockSpec((1, Tq, Tk), lambda b: (b, 0, 0)),    # src_mask
        pl.BlockSpec((1, Tq, Tq), lambda b: (b, 0, 0)),    # tgt_mask
        full((1, D)), full((1, D)),                        # ln0 gamma/beta
        full((D, 3 * D)), full((1, 3 * D)),                # self wqkv / bqkv
        full((D, D)), full((1, D)),                        # self wo / bo
        full((1, D)), full((1, D)),                        # ln1 gamma/beta
        full((D, D)), full((1, D)),                        # src wq / bq
        full((D, 2 * D)), full((1, 2 * D)),                # src wkv / bkv
        full((D, D)), full((1, D)),                        # src wo / bo
        full((1, D)), full((1, D)),                        # ln2 gamma/beta
        full((D, D_FF)), full((1, D_FF)),                  # ffn w1 / b1
        full((D_FF, D)), full((1, D)),                     # ffn w2 / b2
    ]

    return pl.pallas_call(
        _decoder_layer_kernel,
        out_shape=jax.ShapeDtypeStruct((B, Tq, D), x.dtype),
        grid=(B,),
        in_specs=in_specs,
        out_specs=pl.BlockSpec((1, Tq, D), lambda b: (b, 0, 0)),
        compiler_params=pltpu.CompilerParams(
            dimension_semantics=("parallel",)),    # v7x: one batch per TC
    )(
        x, memory, src_mask.astype(jnp.float32), tgt_mask.astype(jnp.float32),
        row(params["ln0_g"]), row(params["ln0_b"]),
        self_wqkv, self_bqkv, sa["wo"], row(sa["bo"]),
        row(params["ln1_g"]), row(params["ln1_b"]),
        ca["wq"], row(ca["bq"]), src_wkv, src_bkv, ca["wo"], row(ca["bo"]),
        row(params["ln2_g"]), row(params["ln2_b"]),
        ff["w1"], row(ff["b1"]), ff["w2"], row(ff["b2"]),
    )


# ------------------------------------------------------------------ reference

def reference_decoder_layer(x, memory, src_mask, tgt_mask, params):
    """Pure-JAX reference matching the PyTorch module semantics."""
    def ln(v, g, b):
        mean = jnp.mean(v, axis=-1, keepdims=True)
        var = jnp.mean(jnp.square(v - mean), axis=-1, keepdims=True)
        return (v - mean) * jax.lax.rsqrt(var + EPS) * g + b

    def mha(xq, xkv, mask, p):
        B, Tq, D = xq.shape
        Tk = xkv.shape[1]
        q = xq @ p["wq"] + p["bq"]
        k = xkv @ p["wk"] + p["bk"]
        v = xkv @ p["wv"] + p["bv"]
        split = lambda t, T: t.reshape(B, T, N_HEADS, D_HEAD).transpose(0, 2, 1, 3)
        qh, kh, vh = split(q, Tq), split(k, Tk), split(v, Tk)
        s = jnp.einsum("bhqd,bhkd->bhqk", qh, kh) * SCALE
        s = jnp.where(mask[:, None] > 0, s, -1e9)
        pa = jax.nn.softmax(s, axis=-1)
        o = jnp.einsum("bhqk,bhkd->bhqd", pa, vh)
        o = o.transpose(0, 2, 1, 3).reshape(B, Tq, D)
        return o @ p["wo"] + p["bo"]

    def ffn(v, p):
        return jnp.maximum(v @ p["w1"] + p["b1"], 0.0) @ p["w2"] + p["b2"]

    xn = ln(x, params["ln0_g"], params["ln0_b"])
    x = x + mha(xn, xn, tgt_mask, params["self_attn"])
    xn = ln(x, params["ln1_g"], params["ln1_b"])
    x = x + mha(xn, memory, src_mask, params["src_attn"])
    xn = ln(x, params["ln2_g"], params["ln2_b"])
    return x + ffn(xn, params["ffn"])


# ------------------------------------------------------------------ params

def init_params(key):
    def dense(k, fan_in, fan_out):
        kw, kb = jax.random.split(k)
        lim = 1.0 / math.sqrt(fan_in)
        w = jax.random.uniform(kw, (fan_in, fan_out), jnp.float32, -lim, lim)
        b = jax.random.uniform(kb, (fan_out,), jnp.float32, -lim, lim)
        return w, b

    keys = jax.random.split(key, 12)

    def attn_params(ks):
        p = {}
        for name, k in zip(("q", "k", "v", "o"), ks):
            w, b = dense(k, D_MODEL, D_MODEL)
            p["w" + name], p["b" + name] = w, b
        return p

    w1, b1 = dense(keys[8], D_MODEL, D_FF)
    w2, b2 = dense(keys[9], D_FF, D_MODEL)
    return {
        "self_attn": attn_params(keys[0:4]),
        "src_attn": attn_params(keys[4:8]),
        "ffn": {"w1": w1, "b1": b1, "w2": w2, "b2": b2},
        "ln0_g": jnp.ones((D_MODEL,), jnp.float32),
        "ln0_b": jnp.zeros((D_MODEL,), jnp.float32),
        "ln1_g": jnp.ones((D_MODEL,), jnp.float32),
        "ln1_b": jnp.zeros((D_MODEL,), jnp.float32),
        "ln2_g": jnp.ones((D_MODEL,), jnp.float32),
        "ln2_b": jnp.zeros((D_MODEL,), jnp.float32),
    }


# ------------------------------------------------------------------ main

if __name__ == "__main__":
    B, T_TGT, T_SRC = 2, 8, 8
    key = jax.random.PRNGKey(0)
    kx, km, kp = jax.random.split(key, 3)

    x = jax.random.normal(kx, (B, T_TGT, D_MODEL), jnp.float32)
    memory = jax.random.normal(km, (B, T_SRC, D_MODEL), jnp.float32)
    # tgt_mask: causal; src_mask: all-ones (1 = attend, 0 = masked)
    tgt_mask = jnp.broadcast_to(
        jnp.tril(jnp.ones((T_TGT, T_TGT), jnp.float32)), (B, T_TGT, T_TGT))
    src_mask = jnp.ones((B, T_TGT, T_SRC), jnp.float32)

    params = init_params(kp)

    out = jax.jit(decoder_layer)(x, memory, src_mask, tgt_mask, params)
    jax.block_until_ready(out)
    assert out.shape == (B, T_TGT, D_MODEL)

    # Correctness check vs pure-JAX reference (tolerance covers the
    # approx-reciprocal softmax denominator).
    ref = reference_decoder_layer(x, memory, src_mask, tgt_mask, params)
    max_err = float(jnp.max(jnp.abs(out - ref)))
    assert max_err < 1e-2, f"mismatch vs reference: {max_err}"

    print("KERNEL_OK")
</pallas_src>

<mosaic_0001>
module attributes {stable_mosaic.version = 11 : i64} {
  func.func @_decoder_layer_kernel(%arg0: i32, %arg1: memref<1x8x32xf32, #tpu.memory_space<vmem>>, %arg2: memref<1x8x32xf32, #tpu.memory_space<vmem>>, %arg3: memref<1x8x8xf32, #tpu.memory_space<vmem>>, %arg4: memref<1x8x8xf32, #tpu.memory_space<vmem>>, %arg5: memref<1x32xf32, #tpu.memory_space<vmem>>, %arg6: memref<1x32xf32, #tpu.memory_space<vmem>>, %arg7: memref<32x96xf32, #tpu.memory_space<vmem>>, %arg8: memref<1x96xf32, #tpu.memory_space<vmem>>, %arg9: memref<32x32xf32, #tpu.memory_space<vmem>>, %arg10: memref<1x32xf32, #tpu.memory_space<vmem>>, %arg11: memref<1x32xf32, #tpu.memory_space<vmem>>, %arg12: memref<1x32xf32, #tpu.memory_space<vmem>>, %arg13: memref<32x32xf32, #tpu.memory_space<vmem>>, %arg14: memref<1x32xf32, #tpu.memory_space<vmem>>, %arg15: memref<32x64xf32, #tpu.memory_space<vmem>>, %arg16: memref<1x64xf32, #tpu.memory_space<vmem>>, %arg17: memref<32x32xf32, #tpu.memory_space<vmem>>, %arg18: memref<1x32xf32, #tpu.memory_space<vmem>>, %arg19: memref<1x32xf32, #tpu.memory_space<vmem>>, %arg20: memref<1x32xf32, #tpu.memory_space<vmem>>, %arg21: memref<32x64xf32, #tpu.memory_space<vmem>>, %arg22: memref<1x64xf32, #tpu.memory_space<vmem>>, %arg23: memref<64x32xf32, #tpu.memory_space<vmem>>, %arg24: memref<1x32xf32, #tpu.memory_space<vmem>>, %arg25: memref<1x8x32xf32, #tpu.memory_space<vmem>>) attributes {dimension_semantics = [#tpu.dimension_semantics<parallel>], iteration_bounds = array<i64: 2>, scalar_prefetch = 0 : i64, scratch_operands = 0 : i64, tpu.core_type = #tpu.core_type<tc>, window_params = [{transform_indices = @transform_0, window_bounds = array<i64: 1, 8, 32>}, {transform_indices = @transform_1, window_bounds = array<i64: 1, 8, 32>}, {transform_indices = @transform_2, window_bounds = array<i64: 1, 8, 8>}, {transform_indices = @transform_3, window_bounds = array<i64: 1, 8, 8>}, {pipeline_mode = #tpu.pipeline_mode<synchronous>, transform_indices = @transform_4, window_bounds = array<i64: 1, 32>}, {pipeline_mode = #tpu.pipeline_mode<synchronous>, transform_indices = @transform_5, window_bounds = array<i64: 1, 32>}, {pipeline_mode = #tpu.pipeline_mode<synchronous>, transform_indices = @transform_6, window_bounds = array<i64: 32, 96>}, {pipeline_mode = #tpu.pipeline_mode<synchronous>, transform_indices = @transform_7, window_bounds = array<i64: 1, 96>}, {pipeline_mode = #tpu.pipeline_mode<synchronous>, transform_indices = @transform_8, window_bounds = array<i64: 32, 32>}, {pipeline_mode = #tpu.pipeline_mode<synchronous>, transform_indices = @transform_9, window_bounds = array<i64: 1, 32>}, {pipeline_mode = #tpu.pipeline_mode<synchronous>, transform_indices = @transform_10, window_bounds = array<i64: 1, 32>}, {pipeline_mode = #tpu.pipeline_mode<synchronous>, transform_indices = @transform_11, window_bounds = array<i64: 1, 32>}, {pipeline_mode = #tpu.pipeline_mode<synchronous>, transform_indices = @transform_12, window_bounds = array<i64: 32, 32>}, {pipeline_mode = #tpu.pipeline_mode<synchronous>, transform_indices = @transform_13, window_bounds = array<i64: 1, 32>}, {pipeline_mode = #tpu.pipeline_mode<synchronous>, transform_indices = @transform_14, window_bounds = array<i64: 32, 64>}, {pipeline_mode = #tpu.pipeline_mode<synchronous>, transform_indices = @transform_15, window_bounds = array<i64: 1, 64>}, {pipeline_mode = #tpu.pipeline_mode<synchronous>, transform_indices = @transform_16, window_bounds = array<i64: 32, 32>}, {pipeline_mode = #tpu.pipeline_mode<synchronous>, transform_indices = @transform_17, window_bounds = array<i64: 1, 32>}, {pipeline_mode = #tpu.pipeline_mode<synchronous>, transform_indices = @transform_18, window_bounds = array<i64: 1, 32>}, {pipeline_mode = #tpu.pipeline_mode<synchronous>, transform_indices = @transform_19, window_bounds = array<i64: 1, 32>}, {pipeline_mode = #tpu.pipeline_mode<synchronous>, transform_indices = @transform_20, window_bounds = array<i64: 32, 64>}, {pipeline_mode = #tpu.pipeline_mode<synchronous>, transform_indices = @transform_21, window_bounds = array<i64: 1, 64>}, {pipeline_mode = #tpu.pipeline_mode<synchronous>, transform_indices = @transform_22, window_bounds = array<i64: 64, 32>}, {pipeline_mode = #tpu.pipeline_mode<synchronous>, transform_indices = @transform_23, window_bounds = array<i64: 1, 32>}, {transform_indices = @transform_24, window_bounds = array<i64: 1, 8, 32>}]} {
    %c0 = arith.constant 0 : index
    %c0_0 = arith.constant 0 : index
    %c0_1 = arith.constant 0 : index
    %0 = vector.load %arg1[%c0, %c0_0, %c0_1] : memref<1x8x32xf32, #tpu.memory_space<vmem>>, vector<1x8x32xf32>
    %1 = vector.shape_cast %0 : vector<1x8x32xf32> to vector<8x32xf32>
    %c0_2 = arith.constant 0 : index
    %c0_3 = arith.constant 0 : index
    %c0_4 = arith.constant 0 : index
    %2 = vector.load %arg2[%c0_2, %c0_3, %c0_4] : memref<1x8x32xf32, #tpu.memory_space<vmem>>, vector<1x8x32xf32>
    %3 = vector.shape_cast %2 : vector<1x8x32xf32> to vector<8x32xf32>
    %c0_5 = arith.constant 0 : index
    %c0_6 = arith.constant 0 : index
    %c0_7 = arith.constant 0 : index
    %4 = vector.load %arg3[%c0_5, %c0_6, %c0_7] : memref<1x8x8xf32, #tpu.memory_space<vmem>>, vector<1x8x8xf32>
    %5 = vector.shape_cast %4 : vector<1x8x8xf32> to vector<8x8xf32>
    %c0_8 = arith.constant 0 : index
    %c0_9 = arith.constant 0 : index
    %c0_10 = arith.constant 0 : index
    %6 = vector.load %arg4[%c0_8, %c0_9, %c0_10] : memref<1x8x8xf32, #tpu.memory_space<vmem>>, vector<1x8x8xf32>
    %7 = vector.shape_cast %6 : vector<1x8x8xf32> to vector<8x8xf32>
    %cst = arith.constant dense<0.000000e+00> : vector<8xf32>
    %8 = vector.multi_reduction <add>, %1, %cst [1] : vector<8x32xf32> to vector<8xf32>
    %9 = vector.shape_cast %8 : vector<8xf32> to vector<8x1xf32>
    %cst_11 = arith.constant 3.200000e+01 : f32
    %10 = vector.broadcast %cst_11 : f32 to vector<8x1xf32>
    %11 = arith.divf %9, %10 : vector<8x1xf32>
    %12 = vector.broadcast %11 : vector<8x1xf32> to vector<8x32xf32>
    %13 = arith.subf %1, %12 : vector<8x32xf32>
    %14 = arith.mulf %13, %13 : vector<8x32xf32>
    %cst_12 = arith.constant dense<0.000000e+00> : vector<8xf32>
    %15 = vector.multi_reduction <add>, %14, %cst_12 [1] : vector<8x32xf32> to vector<8xf32>
    %16 = vector.shape_cast %15 : vector<8xf32> to vector<8x1xf32>
    %cst_13 = arith.constant 3.200000e+01 : f32
    %17 = vector.broadcast %cst_13 : f32 to vector<8x1xf32>
    %18 = arith.divf %16, %17 : vector<8x1xf32>
    %cst_14 = arith.constant 9.99999997E-7 : f32
    %19 = vector.broadcast %cst_14 : f32 to vector<8x1xf32>
    %20 = arith.addf %18, %19 : vector<8x1xf32>
    %21 = math.rsqrt %20 : vector<8x1xf32>
    %22 = vector.broadcast %11 : vector<8x1xf32> to vector<8x32xf32>
    %23 = arith.subf %1, %22 : vector<8x32xf32>
    %24 = vector.broadcast %21 : vector<8x1xf32> to vector<8x32xf32>
    %25 = arith.mulf %23, %24 : vector<8x32xf32>
    %c0_15 = arith.constant 0 : index
    %c0_16 = arith.constant 0 : index
    %26 = vector.load %arg5[%c0_15, %c0_16] : memref<1x32xf32, #tpu.memory_space<vmem>>, vector<1x32xf32>
    %27 = vector.broadcast %26 : vector<1x32xf32> to vector<8x32xf32>
    %28 = arith.mulf %25, %27 : vector<8x32xf32>
    %c0_17 = arith.constant 0 : index
    %c0_18 = arith.constant 0 : index
    %29 = vector.load %arg6[%c0_17, %c0_18] : memref<1x32xf32, #tpu.memory_space<vmem>>, vector<1x32xf32>
    %30 = vector.broadcast %29 : vector<1x32xf32> to vector<8x32xf32>
    %31 = arith.addf %28, %30 : vector<8x32xf32>
    %c0_19 = arith.constant 0 : index
    %c0_20 = arith.constant 0 : index
    %32 = vector.load %arg7[%c0_19, %c0_20] : memref<32x96xf32, #tpu.memory_space<vmem>>, vector<32x96xf32>
    %cst_21 = arith.constant dense<0.000000e+00> : vector<8x96xf32>
    %33 = tpu.matmul %31, %32, %cst_21 {dimension_numbers = #tpu.dot_dimension_numbers<[1], [0], [0], [1], [0, 0, 1, 1], [], []>} : vector<8x32xf32>, vector<32x96xf32>, vector<8x96xf32> -> vector<8x96xf32>
    %c0_22 = arith.constant 0 : index
    %c0_23 = arith.constant 0 : index
    %34 = vector.load %arg8[%c0_22, %c0_23] : memref<1x96xf32, #tpu.memory_space<vmem>>, vector<1x96xf32>
    %35 = vector.broadcast %34 : vector<1x96xf32> to vector<8x96xf32>
    %36 = arith.addf %33, %35 : vector<8x96xf32>
    %37 = vector.extract_strided_slice %36 {offsets = [0, 0], sizes = [8, 8], strides = [1, 1]} : vector<8x96xf32> to vector<8x8xf32>
    %38 = vector.extract_strided_slice %36 {offsets = [0, 32], sizes = [8, 8], strides = [1, 1]} : vector<8x96xf32> to vector<8x8xf32>
    %39 = vector.extract_strided_slice %36 {offsets = [0, 64], sizes = [8, 8], strides = [1, 1]} : vector<8x96xf32> to vector<8x8xf32>
    %40 = tpu.transpose %38, [1, 0] : vector<8x8xf32> -> vector<8x8xf32>
    %cst_24 = arith.constant dense<0.000000e+00> : vector<8x8xf32>
    %41 = tpu.matmul %37, %40, %cst_24 {dimension_numbers = #tpu.dot_dimension_numbers<[1], [0], [0], [1], [0, 0, 1, 1], [], []>} : vector<8x8xf32>, vector<8x8xf32>, vector<8x8xf32> -> vector<8x8xf32>
    %cst_25 = arith.constant 0.353553385 : f32
    %42 = vector.broadcast %cst_25 : f32 to vector<8x8xf32>
    %43 = arith.mulf %41, %42 : vector<8x8xf32>
    %cst_26 = arith.constant 0.000000e+00 : f32
    %44 = vector.broadcast %cst_26 : f32 to vector<8x8xf32>
    %45 = arith.cmpf ogt, %7, %44 : vector<8x8xf32>
    %cst_27 = arith.constant -1.000000e+09 : f32
    %46 = vector.broadcast %cst_27 : f32 to vector<8x8xf32>
    %47 = arith.select %45, %43, %46 : vector<8x8xi1>, vector<8x8xf32>
    %cst_28 = arith.constant dense<0xFF800000> : vector<8xf32>
    %48 = vector.multi_reduction <maximumf>, %47, %cst_28 [1] : vector<8x8xf32> to vector<8xf32>
    %49 = vector.shape_cast %48 : vector<8xf32> to vector<8x1xf32>
    %50 = vector.broadcast %49 : vector<8x1xf32> to vector<8x8xf32>
    %51 = arith.subf %47, %50 : vector<8x8xf32>
    %52 = math.exp %51 : vector<8x8xf32>
    %cst_29 = arith.constant dense<0.000000e+00> : vector<8xf32>
    %53 = vector.multi_reduction <add>, %52, %cst_29 [1] : vector<8x8xf32> to vector<8xf32>
    %54 = vector.shape_cast %53 : vector<8xf32> to vector<8x1xf32>
    %55 = tpu.reciprocal %54 {approx = true} : vector<8x1xf32> -> vector<8x1xf32>
    %56 = vector.broadcast %55 : vector<8x1xf32> to vector<8x8xf32>
    %57 = arith.mulf %52, %56 : vector<8x8xf32>
    %cst_30 = arith.constant dense<0.000000e+00> : vector<8x8xf32>
    %58 = tpu.matmul %57, %39, %cst_30 {dimension_numbers = #tpu.dot_dimension_numbers<[1], [0], [0], [1], [0, 0, 1, 1], [], []>} : vector<8x8xf32>, vector<8x8xf32>, vector<8x8xf32> -> vector<8x8xf32>
    %59 = vector.extract_strided_slice %36 {offsets = [0, 8], sizes = [8, 8], strides = [1, 1]} : vector<8x96xf32> to vector<8x8xf32>
    %60 = vector.extract_strided_slice %36 {offsets = [0, 40], sizes = [8, 8], strides = [1, 1]} : vector<8x96xf32> to vector<8x8xf32>
    %61 = vector.extract_strided_slice %36 {offsets = [0, 72], sizes = [8, 8], strides = [1, 1]} : vector<8x96xf32> to vector<8x8xf32>
    %62 = tpu.transpose %60, [1, 0] : vector<8x8xf32> -> vector<8x8xf32>
    %cst_31 = arith.constant dense<0.000000e+00> : vector<8x8xf32>
    %63 = tpu.matmul %59, %62, %cst_31 {dimension_numbers = #tpu.dot_dimension_numbers<[1], [0], [0], [1], [0, 0, 1, 1], [], []>} : vector<8x8xf32>, vector<8x8xf32>, vector<8x8xf32> -> vector<8x8xf32>
    %cst_32 = arith.constant 0.353553385 : f32
    %64 = vector.broadcast %cst_32 : f32 to vector<8x8xf32>
    %65 = arith.mulf %63, %64 : vector<8x8xf32>
    %cst_33 = arith.constant 0.000000e+00 : f32
    %66 = vector.broadcast %cst_33 : f32 to vector<8x8xf32>
    %67 = arith.cmpf ogt, %7, %66 : vector<8x8xf32>
    %cst_34 = arith.constant -1.000000e+09 : f32
    %68 = vector.broadcast %cst_34 : f32 to vector<8x8xf32>
    %69 = arith.select %67, %65, %68 : vector<8x8xi1>, vector<8x8xf32>
    %cst_35 = arith.constant dense<0xFF800000> : vector<8xf32>
    %70 = vector.multi_reduction <maximumf>, %69, %cst_35 [1] : vector<8x8xf32> to vector<8xf32>
    %71 = vector.shape_cast %70 : vector<8xf32> to vector<8x1xf32>
    %72 = vector.broadcast %71 : vector<8x1xf32> to vector<8x8xf32>
    %73 = arith.subf %69, %72 : vector<8x8xf32>
    %74 = math.exp %73 : vector<8x8xf32>
    %cst_36 = arith.constant dense<0.000000e+00> : vector<8xf32>
    %75 = vector.multi_reduction <add>, %74, %cst_36 [1] : vector<8x8xf32> to vector<8xf32>
    %76 = vector.shape_cast %75 : vector<8xf32> to vector<8x1xf32>
    %77 = tpu.reciprocal %76 {approx = true} : vector<8x1xf32> -> vector<8x1xf32>
    %78 = vector.broadcast %77 : vector<8x1xf32> to vector<8x8xf32>
    %79 = arith.mulf %74, %78 : vector<8x8xf32>
    %cst_37 = arith.constant dense<0.000000e+00> : vector<8x8xf32>
    %80 = tpu.matmul %79, %61, %cst_37 {dimension_numbers = #tpu.dot_dimension_numbers<[1], [0], [0], [1], [0, 0, 1, 1], [], []>} : vector<8x8xf32>, vector<8x8xf32>, vector<8x8xf32> -> vector<8x8xf32>
    %81 = vector.extract_strided_slice %36 {offsets = [0, 16], sizes = [8, 8], strides = [1, 1]} : vector<8x96xf32> to vector<8x8xf32>
    %82 = vector.extract_strided_slice %36 {offsets = [0, 48], sizes = [8, 8], strides = [1, 1]} : vector<8x96xf32> to vector<8x8xf32>
    %83 = vector.extract_strided_slice %36 {offsets = [0, 80], sizes = [8, 8], strides = [1, 1]} : vector<8x96xf32> to vector<8x8xf32>
    %84 = tpu.transpose %82, [1, 0] : vector<8x8xf32> -> vector<8x8xf32>
    %cst_38 = arith.constant dense<0.000000e+00> : vector<8x8xf32>
    %85 = tpu.matmul %81, %84, %cst_38 {dimension_numbers = #tpu.dot_dimension_numbers<[1], [0], [0], [1], [0, 0, 1, 1], [], []>} : vector<8x8xf32>, vector<8x8xf32>, vector<8x8xf32> -> vector<8x8xf32>
    %cst_39 = arith.constant 0.353553385 : f32
    %86 = vector.broadcast %cst_39 : f32 to vector<8x8xf32>
    %87 = arith.mulf %85, %86 : vector<8x8xf32>
    %cst_40 = arith.constant 0.000000e+00 : f32
    %88 = vector.broadcast %cst_40 : f32 to vector<8x8xf32>
    %89 = arith.cmpf ogt, %7, %88 : vector<8x8xf32>
    %cst_41 = arith.constant -1.000000e+09 : f32
    %90 = vector.broadcast %cst_41 : f32 to vector<8x8xf32>
    %91 = arith.select %89, %87, %90 : vector<8x8xi1>, vector<8x8xf32>
    %cst_42 = arith.constant dense<0xFF800000> : vector<8xf32>
    %92 = vector.multi_reduction <maximumf>, %91, %cst_42 [1] : vector<8x8xf32> to vector<8xf32>
    %93 = vector.shape_cast %92 : vector<8xf32> to vector<8x1xf32>
    %94 = vector.broadcast %93 : vector<8x1xf32> to vector<8x8xf32>
    %95 = arith.subf %91, %94 : vector<8x8xf32>
    %96 = math.exp %95 : vector<8x8xf32>
    %cst_43 = arith.constant dense<0.000000e+00> : vector<8xf32>
    %97 = vector.multi_reduction <add>, %96, %cst_43 [1] : vector<8x8xf32> to vector<8xf32>
    %98 = vector.shape_cast %97 : vector<8xf32> to vector<8x1xf32>
    %99 = tpu.reciprocal %98 {approx = true} : vector<8x1xf32> -> vector<8x1xf32>
    %100 = vector.broadcast %99 : vector<8x1xf32> to vector<8x8xf32>
    %101 = arith.mulf %96, %100 : vector<8x8xf32>
    %cst_44 = arith.constant dense<0.000000e+00> : vector<8x8xf32>
    %102 = tpu.matmul %101, %83, %cst_44 {dimension_numbers = #tpu.dot_dimension_numbers<[1], [0], [0], [1], [0, 0, 1, 1], [], []>} : vector<8x8xf32>, vector<8x8xf32>, vector<8x8xf32> -> vector<8x8xf32>
    %103 = vector.extract_strided_slice %36 {offsets = [0, 24], sizes = [8, 8], strides = [1, 1]} : vector<8x96xf32> to vector<8x8xf32>
    %104 = vector.extract_strided_slice %36 {offsets = [0, 56], sizes = [8, 8], strides = [1, 1]} : vector<8x96xf32> to vector<8x8xf32>
    %105 = vector.extract_strided_slice %36 {offsets = [0, 88], sizes = [8, 8], strides = [1, 1]} : vector<8x96xf32> to vector<8x8xf32>
    %106 = tpu.transpose %104, [1, 0] : vector<8x8xf32> -> vector<8x8xf32>
    %cst_45 = arith.constant dense<0.000000e+00> : vector<8x8xf32>
    %107 = tpu.matmul %103, %106, %cst_45 {dimension_numbers = #tpu.dot_dimension_numbers<[1], [0], [0], [1], [0, 0, 1, 1], [], []>} : vector<8x8xf32>, vector<8x8xf32>, vector<8x8xf32> -> vector<8x8xf32>
    %cst_46 = arith.constant 0.353553385 : f32
    %108 = vector.broadcast %cst_46 : f32 to vector<8x8xf32>
    %109 = arith.mulf %107, %108 : vector<8x8xf32>
    %cst_47 = arith.constant 0.000000e+00 : f32
    %110 = vector.broadcast %cst_47 : f32 to vector<8x8xf32>
    %111 = arith.cmpf ogt, %7, %110 : vector<8x8xf32>
    %cst_48 = arith.constant -1.000000e+09 : f32
    %112 = vector.broadcast %cst_48 : f32 to vector<8x8xf32>
    %113 = arith.select %111, %109, %112 : vector<8x8xi1>, vector<8x8xf32>
    %cst_49 = arith.constant dense<0xFF800000> : vector<8xf32>
    %114 = vector.multi_reduction <maximumf>, %113, %cst_49 [1] : vector<8x8xf32> to vector<8xf32>
    %115 = vector.shape_cast %114 : vector<8xf32> to vector<8x1xf32>
    %116 = vector.broadcast %115 : vector<8x1xf32> to vector<8x8xf32>
    %117 = arith.subf %113, %116 : vector<8x8xf32>
    %118 = math.exp %117 : vector<8x8xf32>
    %cst_50 = arith.constant dense<0.000000e+00> : vector<8xf32>
    %119 = vector.multi_reduction <add>, %118, %cst_50 [1] : vector<8x8xf32> to vector<8xf32>
    %120 = vector.shape_cast %119 : vector<8xf32> to vector<8x1xf32>
    %121 = tpu.reciprocal %120 {approx = true} : vector<8x1xf32> -> vector<8x1xf32>
    %122 = vector.broadcast %121 : vector<8x1xf32> to vector<8x8xf32>
    %123 = arith.mulf %118, %122 : vector<8x8xf32>
    %cst_51 = arith.constant dense<0.000000e+00> : vector<8x8xf32>
    %124 = tpu.matmul %123, %105, %cst_51 {dimension_numbers = #tpu.dot_dimension_numbers<[1], [0], [0], [1], [0, 0, 1, 1], [], []>} : vector<8x8xf32>, vector<8x8xf32>, vector<8x8xf32> -> vector<8x8xf32>
    %125 = tpu.concatenate %58, %80, %102, %124 in 1 : vector<8x8xf32>, vector<8x8xf32>, vector<8x8xf32>, vector<8x8xf32> -> vector<8x32xf32>
    %c0_52 = arith.constant 0 : index
    %c0_53 = arith.constant 0 : index
    %126 = vector.load %arg9[%c0_52, %c0_53] : memref<32x32xf32, #tpu.memory_space<vmem>>, vector<32x32xf32>
    %cst_54 = arith.constant dense<0.000000e+00> : vector<8x32xf32>
    %127 = tpu.matmul %125, %126, %cst_54 {dimension_numbers = #tpu.dot_dimension_numbers<[1], [0], [0], [1], [0, 0, 1, 1], [], []>} : vector<8x32xf32>, vector<32x32xf32>, vector<8x32xf32> -> vector<8x32xf32>
    %c0_55 = arith.constant 0 : index
    %c0_56 = arith.constant 0 : index
    %128 = vector.load %arg10[%c0_55, %c0_56] : memref<1x32xf32, #tpu.memory_space<vmem>>, vector<1x32xf32>
    %129 = vector.broadcast %128 : vector<1x32xf32> to vector<8x32xf32>
    %130 = arith.addf %127, %129 : vector<8x32xf32>
    %131 = arith.addf %1, %130 : vector<8x32xf32>
    %cst_57 = arith.constant dense<0.000000e+00> : vector<8xf32>
    %132 = vector.multi_reduction <add>, %131, %cst_57 [1] : vector<8x32xf32> to vector<8xf32>
    %133 = vector.shape_cast %132 : vector<8xf32> to vector<8x1xf32>
    %cst_58 = arith.constant 3.200000e+01 : f32
    %134 = vector.broadcast %cst_58 : f32 to vector<8x1xf32>
    %135 = arith.divf %133, %134 : vector<8x1xf32>
    %136 = vector.broadcast %135 : vector<8x1xf32> to vector<8x32xf32>
    %137 = arith.subf %131, %136 : vector<8x32xf32>
    %138 = arith.mulf %137, %137 : vector<8x32xf32>
    %cst_59 = arith.constant dense<0.000000e+00> : vector<8xf32>
    %139 = vector.multi_reduction <add>, %138, %cst_59 [1] : vector<8x32xf32> to vector<8xf32>
    %140 = vector.shape_cast %139 : vector<8xf32> to vector<8x1xf32>
    %cst_60 = arith.constant 3.200000e+01 : f32
    %141 = vector.broadcast %cst_60 : f32 to vector<8x1xf32>
    %142 = arith.divf %140, %141 : vector<8x1xf32>
    %cst_61 = arith.constant 9.99999997E-7 : f32
    %143 = vector.broadcast %cst_61 : f32 to vector<8x1xf32>
    %144 = arith.addf %142, %143 : vector<8x1xf32>
    %145 = math.rsqrt %144 : vector<8x1xf32>
    %146 = vector.broadcast %135 : vector<8x1xf32> to vector<8x32xf32>
    %147 = arith.subf %131, %146 : vector<8x32xf32>
    %148 = vector.broadcast %145 : vector<8x1xf32> to vector<8x32xf32>
    %149 = arith.mulf %147, %148 : vector<8x32xf32>
    %c0_62 = arith.constant 0 : index
    %c0_63 = arith.constant 0 : index
    %150 = vector.load %arg11[%c0_62, %c0_63] : memref<1x32xf32, #tpu.memory_space<vmem>>, vector<1x32xf32>
    %151 = vector.broadcast %150 : vector<1x32xf32> to vector<8x32xf32>
    %152 = arith.mulf %149, %151 : vector<8x32xf32>
    %c0_64 = arith.constant 0 : index
    %c0_65 = arith.constant 0 : index
    %153 = vector.load %arg12[%c0_64, %c0_65] : memref<1x32xf32, #tpu.memory_space<vmem>>, vector<1x32xf32>
    %154 = vector.broadcast %153 : vector<1x32xf32> to vector<8x32xf32>
    %155 = arith.addf %152, %154 : vector<8x32xf32>
    %c0_66 = arith.constant 0 : index
    %c0_67 = arith.constant 0 : index
    %156 = vector.load %arg13[%c0_66, %c0_67] : memref<32x32xf32, #tpu.memory_space<vmem>>, vector<32x32xf32>
    %cst_68 = arith.constant dense<0.000000e+00> : vector<8x32xf32>
    %157 = tpu.matmul %155, %156, %cst_68 {dimension_numbers = #tpu.dot_dimension_numbers<[1], [0], [0], [1], [0, 0, 1, 1], [], []>} : vector<8x32xf32>, vector<32x32xf32>, vector<8x32xf32> -> vector<8x32xf32>
    %c0_69 = arith.constant 0 : index
    %c0_70 = arith.constant 0 : index
    %158 = vector.load %arg14[%c0_69, %c0_70] : memref<1x32xf32, #tpu.memory_space<vmem>>, vector<1x32xf32>
    %159 = vector.broadcast %158 : vector<1x32xf32> to vector<8x32xf32>
    %160 = arith.addf %157, %159 : vector<8x32xf32>
    %c0_71 = arith.constant 0 : index
    %c0_72 = arith.constant 0 : index
    %161 = vector.load %arg15[%c0_71, %c0_72] : memref<32x64xf32, #tpu.memory_space<vmem>>, vector<32x64xf32>
    %cst_73 = arith.constant dense<0.000000e+00> : vector<8x64xf32>
    %162 = tpu.matmul %3, %161, %cst_73 {dimension_numbers = #tpu.dot_dimension_numbers<[1], [0], [0], [1], [0, 0, 1, 1], [], []>} : vector<8x32xf32>, vector<32x64xf32>, vector<8x64xf32> -> vector<8x64xf32>
    %c0_74 = arith.constant 0 : index
    %c0_75 = arith.constant 0 : index
    %163 = vector.load %arg16[%c0_74, %c0_75] : memref<1x64xf32, #tpu.memory_space<vmem>>, vector<1x64xf32>
    %164 = vector.broadcast %163 : vector<1x64xf32> to vector<8x64xf32>
    %165 = arith.addf %162, %164 : vector<8x64xf32>
    %166 = vector.extract_strided_slice %160 {offsets = [0, 0], sizes = [8, 8], strides = [1, 1]} : vector<8x32xf32> to vector<8x8xf32>
    %167 = vector.extract_strided_slice %165 {offsets = [0, 0], sizes = [8, 8], strides = [1, 1]} : vector<8x64xf32> to vector<8x8xf32>
    %168 = vector.extract_strided_slice %165 {offsets = [0, 32], sizes = [8, 8], strides = [1, 1]} : vector<8x64xf32> to vector<8x8xf32>
    %169 = tpu.transpose %167, [1, 0] : vector<8x8xf32> -> vector<8x8xf32>
    %cst_76 = arith.constant dense<0.000000e+00> : vector<8x8xf32>
    %170 = tpu.matmul %166, %169, %cst_76 {dimension_numbers = #tpu.dot_dimension_numbers<[1], [0], [0], [1], [0, 0, 1, 1], [], []>} : vector<8x8xf32>, vector<8x8xf32>, vector<8x8xf32> -> vector<8x8xf32>
    %cst_77 = arith.constant 0.353553385 : f32
    %171 = vector.broadcast %cst_77 : f32 to vector<8x8xf32>
    %172 = arith.mulf %170, %171 : vector<8x8xf32>
    %cst_78 = arith.constant 0.000000e+00 : f32
    %173 = vector.broadcast %cst_78 : f32 to vector<8x8xf32>
    %174 = arith.cmpf ogt, %5, %173 : vector<8x8xf32>
    %cst_79 = arith.constant -1.000000e+09 : f32
    %175 = vector.broadcast %cst_79 : f32 to vector<8x8xf32>
    %176 = arith.select %174, %172, %175 : vector<8x8xi1>, vector<8x8xf32>
    %cst_80 = arith.constant dense<0xFF800000> : vector<8xf32>
    %177 = vector.multi_reduction <maximumf>, %176, %cst_80 [1] : vector<8x8xf32> to vector<8xf32>
    %178 = vector.shape_cast %177 : vector<8xf32> to vector<8x1xf32>
    %179 = vector.broadcast %178 : vector<8x1xf32> to vector<8x8xf32>
    %180 = arith.subf %176, %179 : vector<8x8xf32>
    %181 = math.exp %180 : vector<8x8xf32>
    %cst_81 = arith.constant dense<0.000000e+00> : vector<8xf32>
    %182 = vector.multi_reduction <add>, %181, %cst_81 [1] : vector<8x8xf32> to vector<8xf32>
    %183 = vector.shape_cast %182 : vector<8xf32> to vector<8x1xf32>
    %184 = tpu.reciprocal %183 {approx = true} : vector<8x1xf32> -> vector<8x1xf32>
    %185 = vector.broadcast %184 : vector<8x1xf32> to vector<8x8xf32>
    %186 = arith.mulf %181, %185 : vector<8x8xf32>
    %cst_82 = arith.constant dense<0.000000e+00> : vector<8x8xf32>
    %187 = tpu.matmul %186, %168, %cst_82 {dimension_numbers = #tpu.dot_dimension_numbers<[1], [0], [0], [1], [0, 0, 1, 1], [], []>} : vector<8x8xf32>, vector<8x8xf32>, vector<8x8xf32> -> vector<8x8xf32>
    %188 = vector.extract_strided_slice %160 {offsets = [0, 8], sizes = [8, 8], strides = [1, 1]} : vector<8x32xf32> to vector<8x8xf32>
    %189 = vector.extract_strided_slice %165 {offsets = [0, 8], sizes = [8, 8], strides = [1, 1]} : vector<8x64xf32> to vector<8x8xf32>
    %190 = vector.extract_strided_slice %165 {offsets = [0, 40], sizes = [8, 8], strides = [1, 1]} : vector<8x64xf32> to vector<8x8xf32>
    %191 = tpu.transpose %189, [1, 0] : vector<8x8xf32> -> vector<8x8xf32>
    %cst_83 = arith.constant dense<0.000000e+00> : vector<8x8xf32>
    %192 = tpu.matmul %188, %191, %cst_83 {dimension_numbers = #tpu.dot_dimension_numbers<[1], [0], [0], [1], [0, 0, 1, 1], [], []>} : vector<8x8xf32>, vector<8x8xf32>, vector<8x8xf32> -> vector<8x8xf32>
    %cst_84 = arith.constant 0.353553385 : f32
    %193 = vector.broadcast %cst_84 : f32 to vector<8x8xf32>
    %194 = arith.mulf %192, %193 : vector<8x8xf32>
    %cst_85 = arith.constant 0.000000e+00 : f32
    %195 = vector.broadcast %cst_85 : f32 to vector<8x8xf32>
    %196 = arith.cmpf ogt, %5, %195 : vector<8x8xf32>
    %cst_86 = arith.constant -1.000000e+09 : f32
    %197 = vector.broadcast %cst_86 : f32 to vector<8x8xf32>
    %198 = arith.select %196, %194, %197 : vector<8x8xi1>, vector<8x8xf32>
    %cst_87 = arith.constant dense<0xFF800000> : vector<8xf32>
    %199 = vector.multi_reduction <maximumf>, %198, %cst_87 [1] : vector<8x8xf32> to vector<8xf32>
    %200 = vector.shape_cast %199 : vector<8xf32> to vector<8x1xf32>
    %201 = vector.broadcast %200 : vector<8x1xf32> to vector<8x8xf32>
    %202 = arith.subf %198, %201 : vector<8x8xf32>
    %203 = math.exp %202 : vector<8x8xf32>
    %cst_88 = arith.constant dense<0.000000e+00> : vector<8xf32>
    %204 = vector.multi_reduction <add>, %203, %cst_88 [1] : vector<8x8xf32> to vector<8xf32>
    %205 = vector.shape_cast %204 : vector<8xf32> to vector<8x1xf32>
    %206 = tpu.reciprocal %205 {approx = true} : vector<8x1xf32> -> vector<8x1xf32>
    %207 = vector.broadcast %206 : vector<8x1xf32> to vector<8x8xf32>
    %208 = arith.mulf %203, %207 : vector<8x8xf32>
    %cst_89 = arith.constant dense<0.000000e+00> : vector<8x8xf32>
    %209 = tpu.matmul %208, %190, %cst_89 {dimension_numbers = #tpu.dot_dimension_numbers<[1], [0], [0], [1], [0, 0, 1, 1], [], []>} : vector<8x8xf32>, vector<8x8xf32>, vector<8x8xf32> -> vector<8x8xf32>
    %210 = vector.extract_strided_slice %160 {offsets = [0, 16], sizes = [8, 8], strides = [1, 1]} : vector<8x32xf32> to vector<8x8xf32>
    %211 = vector.extract_strided_slice %165 {offsets = [0, 16], sizes = [8, 8], strides = [1, 1]} : vector<8x64xf32> to vector<8x8xf32>
    %212 = vector.extract_strided_slice %165 {offsets = [0, 48], sizes = [8, 8], strides = [1, 1]} : vector<8x64xf32> to vector<8x8xf32>
    %213 = tpu.transpose %211, [1, 0] : vector<8x8xf32> -> vector<8x8xf32>
    %cst_90 = arith.constant dense<0.000000e+00> : vector<8x8xf32>
    %214 = tpu.matmul %210, %213, %cst_90 {dimension_numbers = #tpu.dot_dimension_numbers<[1], [0], [0], [1], [0, 0, 1, 1], [], []>} : vector<8x8xf32>, vector<8x8xf32>, vector<8x8xf32> -> vector<8x8xf32>
    %cst_91 = arith.constant 0.353553385 : f32
    %215 = vector.broadcast %cst_91 : f32 to vector<8x8xf32>
    %216 = arith.mulf %214, %215 : vector<8x8xf32>
    %cst_92 = arith.constant 0.000000e+00 : f32
    %217 = vector.broadcast %cst_92 : f32 to vector<8x8xf32>
    %218 = arith.cmpf ogt, %5, %217 : vector<8x8xf32>
    %cst_93 = arith.constant -1.000000e+09 : f32
    %219 = vector.broadcast %cst_93 : f32 to vector<8x8xf32>
    %220 = arith.select %218, %216, %219 : vector<8x8xi1>, vector<8x8xf32>
    %cst_94 = arith.constant dense<0xFF800000> : vector<8xf32>
    %221 = vector.multi_reduction <maximumf>, %220, %cst_94 [1] : vector<8x8xf32> to vector<8xf32>
    %222 = vector.shape_cast %221 : vector<8xf32> to vector<8x1xf32>
    %223 = vector.broadcast %222 : vector<8x1xf32> to vector<8x8xf32>
    %224 = arith.subf %220, %223 : vector<8x8xf32>
    %225 = math.exp %224 : vector<8x8xf32>
    %cst_95 = arith.constant dense<0.000000e+00> : vector<8xf32>
    %226 = vector.multi_reduction <add>, %225, %cst_95 [1] : vector<8x8xf32> to vector<8xf32>
    %227 = vector.shape_cast %226 : vector<8xf32> to vector<8x1xf32>
    %228 = tpu.reciprocal %227 {approx = true} : vector<8x1xf32> -> vector<8x1xf32>
    %229 = vector.broadcast %228 : vector<8x1xf32> to vector<8x8xf32>
    %230 = arith.mulf %225, %229 : vector<8x8xf32>
    %cst_96 = arith.constant dense<0.000000e+00> : vector<8x8xf32>
    %231 = tpu.matmul %230, %212, %cst_96 {dimension_numbers = #tpu.dot_dimension_numbers<[1], [0], [0], [1], [0, 0, 1, 1], [], []>} : vector<8x8xf32>, vector<8x8xf32>, vector<8x8xf32> -> vector<8x8xf32>
    %232 = vector.extract_strided_slice %160 {offsets = [0, 24], sizes = [8, 8], strides = [1, 1]} : vector<8x32xf32> to vector<8x8xf32>
    %233 = vector.extract_strided_slice %165 {offsets = [0, 24], sizes = [8, 8], strides = [1, 1]} : vector<8x64xf32> to vector<8x8xf32>
    %234 = vector.extract_strided_slice %165 {offsets = [0, 56], sizes = [8, 8], strides = [1, 1]} : vector<8x64xf32> to vector<8x8xf32>
    %235 = tpu.transpose %233, [1, 0] : vector<8x8xf32> -> vector<8x8xf32>
    %cst_97 = arith.constant dense<0.000000e+00> : vector<8x8xf32>
    %236 = tpu.matmul %232, %235, %cst_97 {dimension_numbers = #tpu.dot_dimension_numbers<[1], [0], [0], [1], [0, 0, 1, 1], [], []>} : vector<8x8xf32>, vector<8x8xf32>, vector<8x8xf32> -> vector<8x8xf32>
    %cst_98 = arith.constant 0.353553385 : f32
    %237 = vector.broadcast %cst_98 : f32 to vector<8x8xf32>
    %238 = arith.mulf %236, %237 : vector<8x8xf32>
    %cst_99 = arith.constant 0.000000e+00 : f32
    %239 = vector.broadcast %cst_99 : f32 to vector<8x8xf32>
    %240 = arith.cmpf ogt, %5, %239 : vector<8x8xf32>
    %cst_100 = arith.constant -1.000000e+09 : f32
    %241 = vector.broadcast %cst_100 : f32 to vector<8x8xf32>
    %242 = arith.select %240, %238, %241 : vector<8x8xi1>, vector<8x8xf32>
    %cst_101 = arith.constant dense<0xFF800000> : vector<8xf32>
    %243 = vector.multi_reduction <maximumf>, %242, %cst_101 [1] : vector<8x8xf32> to vector<8xf32>
    %244 = vector.shape_cast %243 : vector<8xf32> to vector<8x1xf32>
    %245 = vector.broadcast %244 : vector<8x1xf32> to vector<8x8xf32>
    %246 = arith.subf %242, %245 : vector<8x8xf32>
    %247 = math.exp %246 : vector<8x8xf32>
    %cst_102 = arith.constant dense<0.000000e+00> : vector<8xf32>
    %248 = vector.multi_reduction <add>, %247, %cst_102 [1] : vector<8x8xf32> to vector<8xf32>
    %249 = vector.shape_cast %248 : vector<8xf32> to vector<8x1xf32>
    %250 = tpu.reciprocal %249 {approx = true} : vector<8x1xf32> -> vector<8x1xf32>
    %251 = vector.broadcast %250 : vector<8x1xf32> to vector<8x8xf32>
    %252 = arith.mulf %247, %251 : vector<8x8xf32>
    %cst_103 = arith.constant dense<0.000000e+00> : vector<8x8xf32>
    %253 = tpu.matmul %252, %234, %cst_103 {dimension_numbers = #tpu.dot_dimension_numbers<[1], [0], [0], [1], [0, 0, 1, 1], [], []>} : vector<8x8xf32>, vector<8x8xf32>, vector<8x8xf32> -> vector<8x8xf32>
    %254 = tpu.concatenate %187, %209, %231, %253 in 1 : vector<8x8xf32>, vector<8x8xf32>, vector<8x8xf32>, vector<8x8xf32> -> vector<8x32xf32>
    %c0_104 = arith.constant 0 : index
    %c0_105 = arith.constant 0 : index
    %255 = vector.load %arg17[%c0_104, %c0_105] : memref<32x32xf32, #tpu.memory_space<vmem>>, vector<32x32xf32>
    %cst_106 = arith.constant dense<0.000000e+00> : vector<8x32xf32>
    %256 = tpu.matmul %254, %255, %cst_106 {dimension_numbers = #tpu.dot_dimension_numbers<[1], [0], [0], [1], [0, 0, 1, 1], [], []>} : vector<8x32xf32>, vector<32x32xf32>, vector<8x32xf32> -> vector<8x32xf32>
    %c0_107 = arith.constant 0 : index
    %c0_108 = arith.constant 0 : index
    %257 = vector.load %arg18[%c0_107, %c0_108] : memref<1x32xf32, #tpu.memory_space<vmem>>, vector<1x32xf32>
    %258 = vector.broadcast %257 : vector<1x32xf32> to vector<8x32xf32>
    %259 = arith.addf %256, %258 : vector<8x32xf32>
    %260 = arith.addf %131, %259 : vector<8x32xf32>
    %cst_109 = arith.constant dense<0.000000e+00> : vector<8xf32>
    %261 = vector.multi_reduction <add>, %260, %cst_109 [1] : vector<8x32xf32> to vector<8xf32>
    %262 = vector.shape_cast %261 : vector<8xf32> to vector<8x1xf32>
    %cst_110 = arith.constant 3.200000e+01 : f32
    %263 = vector.broadcast %cst_110 : f32 to vector<8x1xf32>
    %264 = arith.divf %262, %263 : vector<8x1xf32>
    %265 = vector.broadcast %264 : vector<8x1xf32> to vector<8x32xf32>
    %266 = arith.subf %260, %265 : vector<8x32xf32>
    %267 = arith.mulf %266, %266 : vector<8x32xf32>
    %cst_111 = arith.constant dense<0.000000e+00> : vector<8xf32>
    %268 = vector.multi_reduction <add>, %267, %cst_111 [1] : vector<8x32xf32> to vector<8xf32>
    %269 = vector.shape_cast %268 : vector<8xf32> to vector<8x1xf32>
    %cst_112 = arith.constant 3.200000e+01 : f32
    %270 = vector.broadcast %cst_112 : f32 to vector<8x1xf32>
    %271 = arith.divf %269, %270 : vector<8x1xf32>
    %cst_113 = arith.constant 9.99999997E-7 : f32
    %272 = vector.broadcast %cst_113 : f32 to vector<8x1xf32>
    %273 = arith.addf %271, %272 : vector<8x1xf32>
    %274 = math.rsqrt %273 : vector<8x1xf32>
    %275 = vector.broadcast %264 : vector<8x1xf32> to vector<8x32xf32>
    %276 = arith.subf %260, %275 : vector<8x32xf32>
    %277 = vector.broadcast %274 : vector<8x1xf32> to vector<8x32xf32>
    %278 = arith.mulf %276, %277 : vector<8x32xf32>
    %c0_114 = arith.constant 0 : index
    %c0_115 = arith.constant 0 : index
    %279 = vector.load %arg19[%c0_114, %c0_115] : memref<1x32xf32, #tpu.memory_space<vmem>>, vector<1x32xf32>
    %280 = vector.broadcast %279 : vector<1x32xf32> to vector<8x32xf32>
    %281 = arith.mulf %278, %280 : vector<8x32xf32>
    %c0_116 = arith.constant 0 : index
    %c0_117 = arith.constant 0 : index
    %282 = vector.load %arg20[%c0_116, %c0_117] : memref<1x32xf32, #tpu.memory_space<vmem>>, vector<1x32xf32>
    %283 = vector.broadcast %282 : vector<1x32xf32> to vector<8x32xf32>
    %284 = arith.addf %281, %283 : vector<8x32xf32>
    %c0_118 = arith.constant 0 : index
    %c0_119 = arith.constant 0 : index
    %285 = vector.load %arg21[%c0_118, %c0_119] : memref<32x64xf32, #tpu.memory_space<vmem>>, vector<32x64xf32>
    %cst_120 = arith.constant dense<0.000000e+00> : vector<8x64xf32>
    %286 = tpu.matmul %284, %285, %cst_120 {dimension_numbers = #tpu.dot_dimension_numbers<[1], [0], [0], [1], [0, 0, 1, 1], [], []>} : vector<8x32xf32>, vector<32x64xf32>, vector<8x64xf32> -> vector<8x64xf32>
    %c0_121 = arith.constant 0 : index
    %c0_122 = arith.constant 0 : index
    %287 = vector.load %arg22[%c0_121, %c0_122] : memref<1x64xf32, #tpu.memory_space<vmem>>, vector<1x64xf32>
    %288 = vector.broadcast %287 : vector<1x64xf32> to vector<8x64xf32>
    %289 = arith.addf %286, %288 : vector<8x64xf32>
    %cst_123 = arith.constant 0.000000e+00 : f32
    %290 = vector.broadcast %cst_123 : f32 to vector<8x64xf32>
    %291 = arith.maximumf %289, %290 : vector<8x64xf32>
    %c0_124 = arith.constant 0 : index
    %c0_125 = arith.constant 0 : index
    %292 = vector.load %arg23[%c0_124, %c0_125] : memref<64x32xf32, #tpu.memory_space<vmem>>, vector<64x32xf32>
    %cst_126 = arith.constant dense<0.000000e+00> : vector<8x32xf32>
    %293 = tpu.matmul %291, %292, %cst_126 {dimension_numbers = #tpu.dot_dimension_numbers<[1], [0], [0], [1], [0, 0, 1, 1], [], []>} : vector<8x64xf32>, vector<64x32xf32>, vector<8x32xf32> -> vector<8x32xf32>
    %c0_127 = arith.constant 0 : index
    %c0_128 = arith.constant 0 : index
    %294 = vector.load %arg24[%c0_127, %c0_128] : memref<1x32xf32, #tpu.memory_space<vmem>>, vector<1x32xf32>
    %295 = vector.broadcast %294 : vector<1x32xf32> to vector<8x32xf32>
    %296 = arith.addf %293, %295 : vector<8x32xf32>
    %297 = arith.addf %260, %296 : vector<8x32xf32>
    %c0_129 = arith.constant 0 : index
    %c0_130 = arith.constant 0 : index
    %c0_131 = arith.constant 0 : index
    %298 = vector.load %arg25[%c0_129, %c0_130, %c0_131] : memref<1x8x32xf32, #tpu.memory_space<vmem>>, vector<1x8x32xf32>
    %299 = vector.shape_cast %298 : vector<1x8x32xf32> to vector<8x32xf32>
    %300 = vector.shape_cast %297 : vector<8x32xf32> to vector<1x8x32xf32>
    tpu.vector_store %arg25[%c0_129, %c0_130, %c0_131], %300 {strides = array<i32>} : memref<1x8x32xf32, #tpu.memory_space<vmem>>, vector<1x8x32xf32>,
    return
  }
  func.func @transform_0(%arg0: i32) -> (i32, i32, i32) {
    %c0_i32 = arith.constant 0 : i32
    %c0_i32_0 = arith.constant 0 : i32
    %c0_i32_1 = arith.constant 0 : i32
    return %arg0, %c0_i32, %c0_i32_0 : i32, i32, i32
  }
  func.func @transform_1(%arg0: i32) -> (i32, i32, i32) {
    %c0_i32 = arith.constant 0 : i32
    %c0_i32_0 = arith.constant 0 : i32
    %c0_i32_1 = arith.constant 0 : i32
    return %arg0, %c0_i32, %c0_i32_0 : i32, i32, i32
  }
  func.func @transform_2(%arg0: i32) -> (i32, i32, i32) {
    %c0_i32 = arith.constant 0 : i32
    %c0_i32_0 = arith.constant 0 : i32
    %c0_i32_1 = arith.constant 0 : i32
    return %arg0, %c0_i32, %c0_i32_0 : i32, i32, i32
  }
  func.func @transform_3(%arg0: i32) -> (i32, i32, i32) {
    %c0_i32 = arith.constant 0 : i32
    %c0_i32_0 = arith.constant 0 : i32
    %c0_i32_1 = arith.constant 0 : i32
    return %arg0, %c0_i32, %c0_i32_0 : i32, i32, i32
  }
  func.func @transform_4(%arg0: i32) -> (i32, i32) {
    %c0_i32 = arith.constant 0 : i32
    %c0_i32_0 = arith.constant 0 : i32
    %c0_i32_1 = arith.constant 0 : i32
    return %c0_i32, %c0_i32_0 : i32, i32
  }
  func.func @transform_5(%arg0: i32) -> (i32, i32) {
    %c0_i32 = arith.constant 0 : i32
    %c0_i32_0 = arith.constant 0 : i32
    %c0_i32_1 = arith.constant 0 : i32
    return %c0_i32, %c0_i32_0 : i32, i32
  }
  func.func @transform_6(%arg0: i32) -> (i32, i32) {
    %c0_i32 = arith.constant 0 : i32
    %c0_i32_0 = arith.constant 0 : i32
    %c0_i32_1 = arith.constant 0 : i32
    return %c0_i32, %c0_i32_0 : i32, i32
  }
  func.func @transform_7(%arg0: i32) -> (i32, i32) {
    %c0_i32 = arith.constant 0 : i32
    %c0_i32_0 = arith.constant 0 : i32
    %c0_i32_1 = arith.constant 0 : i32
    return %c0_i32, %c0_i32_0 : i32, i32
  }
  func.func @transform_8(%arg0: i32) -> (i32, i32) {
    %c0_i32 = arith.constant 0 : i32
    %c0_i32_0 = arith.constant 0 : i32
    %c0_i32_1 = arith.constant 0 : i32
    return %c0_i32, %c0_i32_0 : i32, i32
  }
  func.func @transform_9(%arg0: i32) -> (i32, i32) {
    %c0_i32 = arith.constant 0 : i32
    %c0_i32_0 = arith.constant 0 : i32
    %c0_i32_1 = arith.constant 0 : i32
    return %c0_i32, %c0_i32_0 : i32, i32
  }
  func.func @transform_10(%arg0: i32) -> (i32, i32) {
    %c0_i32 = arith.constant 0 : i32
    %c0_i32_0 = arith.constant 0 : i32
    %c0_i32_1 = arith.constant 0 : i32
    return %c0_i32, %c0_i32_0 : i32, i32
  }
  func.func @transform_11(%arg0: i32) -> (i32, i32) {
    %c0_i32 = arith.constant 0 : i32
    %c0_i32_0 = arith.constant 0 : i32
    %c0_i32_1 = arith.constant 0 : i32
    return %c0_i32, %c0_i32_0 : i32, i32
  }
  func.func @transform_12(%arg0: i32) -> (i32, i32) {
    %c0_i32 = arith.constant 0 : i32
    %c0_i32_0 = arith.constant 0 : i32
    %c0_i32_1 = arith.constant 0 : i32
    return %c0_i32, %c0_i32_0 : i32, i32
  }
  func.func @transform_13(%arg0: i32) -> (i32, i32) {
    %c0_i32 = arith.constant 0 : i32
    %c0_i32_0 = arith.constant 0 : i32
    %c0_i32_1 = arith.constant 0 : i32
    return %c0_i32, %c0_i32_0 : i32, i32
  }
  func.func @transform_14(%arg0: i32) -> (i32, i32) {
    %c0_i32 = arith.constant 0 : i32
    %c0_i32_0 = arith.constant 0 : i32
    %c0_i32_1 = arith.constant 0 : i32
    return %c0_i32, %c0_i32_0 : i32, i32
  }
  func.func @transform_15(%arg0: i32) -> (i32, i32) {
    %c0_i32 = arith.constant 0 : i32
    %c0_i32_0 = arith.constant 0 : i32
    %c0_i32_1 = arith.constant 0 : i32
    return %c0_i32, %c0_i32_0 : i32, i32
  }
  func.func @transform_16(%arg0: i32) -> (i32, i32) {
    %c0_i32 = arith.constant 0 : i32
    %c0_i32_0 = arith.constant 0 : i32
    %c0_i32_1 = arith.constant 0 : i32
    return %c0_i32, %c0_i32_0 : i32, i32
  }
  func.func @transform_17(%arg0: i32) -> (i32, i32) {
    %c0_i32 = arith.constant 0 : i32
    %c0_i32_0 = arith.constant 0 : i32
    %c0_i32_1 = arith.constant 0 : i32
    return %c0_i32, %c0_i32_0 : i32, i32
  }
  func.func @transform_18(%arg0: i32) -> (i32, i32) {
    %c0_i32 = arith.constant 0 : i32
    %c0_i32_0 = arith.constant 0 : i32
    %c0_i32_1 = arith.constant 0 : i32
    return %c0_i32, %c0_i32_0 : i32, i32
  }
  func.func @transform_19(%arg0: i32) -> (i32, i32) {
    %c0_i32 = arith.constant 0 : i32
    %c0_i32_0 = arith.constant 0 : i32
    %c0_i32_1 = arith.constant 0 : i32
    return %c0_i32, %c0_i32_0 : i32, i32
  }
  func.func @transform_20(%arg0: i32) -> (i32, i32) {
    %c0_i32 = arith.constant 0 : i32
    %c0_i32_0 = arith.constant 0 : i32
    %c0_i32_1 = arith.constant 0 : i32
    return %c0_i32, %c0_i32_0 : i32, i32
  }
  func.func @transform_21(%arg0: i32) -> (i32, i32) {
    %c0_i32 = arith.constant 0 : i32
    %c0_i32_0 = arith.constant 0 : i32
    %c0_i32_1 = arith.constant 0 : i32
    return %c0_i32, %c0_i32_0 : i32, i32
  }
  func.func @transform_22(%arg0: i32) -> (i32, i32) {
    %c0_i32 = arith.constant 0 : i32
    %c0_i32_0 = arith.constant 0 : i32
    %c0_i32_1 = arith.constant 0 : i32
    return %c0_i32, %c0_i32_0 : i32, i32
  }
  func.func @transform_23(%arg0: i32) -> (i32, i32) {
    %c0_i32 = arith.constant 0 : i32
    %c0_i32_0 = arith.constant 0 : i32
    %c0_i32_1 = arith.constant 0 : i32
    return %c0_i32, %c0_i32_0 : i32, i32
  }
  func.func @transform_24(%arg0: i32) -> (i32, i32, i32) {
    %c0_i32 = arith.constant 0 : i32
    %c0_i32_0 = arith.constant 0 : i32
    %c0_i32_1 = arith.constant 0 : i32
    return %arg0, %c0_i32, %c0_i32_0 : i32, i32, i32
  }
}

</mosaic_0001>

<llo_original>
// kernel: decoder_layer.1
$region0: #{decoder_layer.1}
  #allocation0 [shape = 'u32[]', space=smem, size = 0x4, offset = 0x4, fixed_abs, tag = 'smem constant byte address 0x4 - core index']
  #allocation1 [shape = 'u32[144,128]{1,0:T(1,128)}', space=vmem, size = 0x12000, scoped, tag = 'internal scratch']
  %s0 = inlined_call_operand.vmem [shape: f32[2,8,32], index: 0, kind: input, shape index: {}]
  %s1 = inlined_call_operand.vmem [shape: f32[2,8,32], index: 1, kind: input, shape index: {}]
  %s2 = inlined_call_operand.vmem [shape: f32[2,8,8], index: 2, kind: input, shape index: {}]
  %s3 = inlined_call_operand.vmem [shape: f32[2,8,8], index: 3, kind: input, shape index: {}]
  %s4 = inlined_call_operand.vmem [shape: f32[1,32], index: 4, kind: input, shape index: {}]
  %s5 = inlined_call_operand.vmem [shape: f32[1,32], index: 5, kind: input, shape index: {}]
  %s6 = inlined_call_operand.vmem [shape: f32[32,96], index: 6, kind: input, shape index: {}]
  %s7 = inlined_call_operand.vmem [shape: f32[1,96], index: 7, kind: input, shape index: {}]
  %s8 = inlined_call_operand.vmem [shape: f32[32,32], index: 8, kind: input, shape index: {}]
  %s9 = inlined_call_operand.vmem [shape: f32[1,32], index: 9, kind: input, shape index: {}]
  %s10 = inlined_call_operand.vmem [shape: f32[1,32], index: 10, kind: input, shape index: {}]
  %s11 = inlined_call_operand.vmem [shape: f32[1,32], index: 11, kind: input, shape index: {}]
  %s12 = inlined_call_operand.vmem [shape: f32[32,32], index: 12, kind: input, shape index: {}]
  %s13 = inlined_call_operand.vmem [shape: f32[1,32], index: 13, kind: input, shape index: {}]
  %s14 = inlined_call_operand.vmem [shape: f32[32,64], index: 14, kind: input, shape index: {}]
  %s15 = inlined_call_operand.vmem [shape: f32[1,64], index: 15, kind: input, shape index: {}]
  %s16 = inlined_call_operand.vmem [shape: f32[32,32], index: 16, kind: input, shape index: {}]
  %s17 = inlined_call_operand.vmem [shape: f32[1,32], index: 17, kind: input, shape index: {}]
  %s18 = inlined_call_operand.vmem [shape: f32[1,32], index: 18, kind: input, shape index: {}]
  %s19 = inlined_call_operand.vmem [shape: f32[1,32], index: 19, kind: input, shape index: {}]
  %s20 = inlined_call_operand.vmem [shape: f32[32,64], index: 20, kind: input, shape index: {}]
  %s21 = inlined_call_operand.vmem [shape: f32[1,64], index: 21, kind: input, shape index: {}]
  %s22 = inlined_call_operand.vmem [shape: f32[64,32], index: 22, kind: input, shape index: {}]
  %s23 = inlined_call_operand.vmem [shape: f32[1,32], index: 23, kind: input, shape index: {}]
  %s24 = inlined_call_operand.hbm [shape: f32[2,8,32], index: 24, kind: output, shape index: {}]
  %s25 = sld [smem:[#allocation0]]
  $region129: #{decoder_layer.1} parent=0
    _
  %s27 = ssub.s32 1, %s25
  %s28 = scalar_select 0, %s27, %s25
  $region1: #{decoder_layer.1} parent=0
    #allocation2 [shape = 'u8[8192]{0}', space=vmem, size = 0x2000, scoped, tag = 'output window, operand 0']
    #allocation3 [shape = 's32[2]{0}', space=sflag, size = 0x8, scoped, tag = 'scoped memory for decoder_layer.1']
    %29 = vsyncpa [#allocation3], 0
    %s30 = scalar_lea.sflag [#allocation3], 1
    %31 = vsyncpa %s30, 0
    loop: start=0, step=1, limit=4
    $region2: #{decoder_layer.1} parent=1 // loop_pre_header
      _
    $region3: #{decoder_layer.1} parent=1 // loop_header
      %s33 = sphi 0, %s37
      %p34 = scmp.ge.s32.totalorder %s33, 4
      %s43 = sphi 0, %s45
      %s46 = sphi 0, %s43
      %s47 = sphi 0, %s46
      %s63 = sphi 0, %s47
      %s69 = sphi 0, %s71
      %s72 = sphi 0, %s69
      %s73 = sphi 0, %s72
      %s89 = sphi 0, %s73
      %s95 = sphi 0, %s97
      %s98 = sphi 0, %s95
      %s99 = sphi 0, %s98
      %s115 = sphi 0, %s99
      %s121 = sphi 0, %s123
      %s124 = sphi 0, %s121
      %s125 = sphi 0, %s124
      %s141 = sphi 0, %s125
      %s145 = sphi 0, %s145
      %s147 = sphi 0, %s145
      %s148 = sphi 0, %s147
      %s162 = sphi 0, %s148
      %s166 = sphi 0, %s166
      %s168 = sphi 0, %s166
      %s169 = sphi 0, %s168
      %s183 = sphi 0, %s169
      %s187 = sphi 0, %s187
      %s189 = sphi 0, %s187
      %s190 = sphi 0, %s189
      %s204 = sphi 0, %s190
      %s208 = sphi 0, %s208
      %s210 = sphi 0, %s208
      %s211 = sphi 0, %s210
      %s225 = sphi 0, %s211
      %s229 = sphi 0, %s229
      %s231 = sphi 0, %s229
      %s232 = sphi 0, %s231
      %s246 = sphi 0, %s232
      %s250 = sphi 0, %s250
      %s252 = sphi 0, %s250
      %s253 = sphi 0, %s252
      %s267 = sphi 0, %s253
      %s271 = sphi 0, %s271
      %s273 = sphi 0, %s271
      %s274 = sphi 0, %s273
      %s288 = sphi 0, %s274
      %s292 = sphi 0, %s292
      %s294 = sphi 0, %s292
      %s295 = sphi 0, %s294
      %s309 = sphi 0, %s295
      %s313 = sphi 0, %s313
      %s315 = sphi 0, %s313
      %s316 = sphi 0, %s315
      %s330 = sphi 0, %s316
      %s334 = sphi 0, %s334
      %s336 = sphi 0, %s334
      %s337 = sphi 0, %s336
      %s351 = sphi 0, %s337
      %s355 = sphi 0, %s355
      %s357 = sphi 0, %s355
      %s358 = sphi 0, %s357
      %s372 = sphi 0, %s358
      %s376 = sphi 0, %s376
      %s378 = sphi 0, %s376
      %s379 = sphi 0, %s378
      %s393 = sphi 0, %s379
      %s397 = sphi 0, %s397
      %s399 = sphi 0, %s397
      %s400 = sphi 0, %s399
      %s414 = sphi 0, %s400
      %s418 = sphi 0, %s418
      %s420 = sphi 0, %s418
      %s421 = sphi 0, %s420
      %s435 = sphi 0, %s421
      %s439 = sphi 0, %s439
      %s441 = sphi 0, %s439
      %s442 = sphi 0, %s441
      %s456 = sphi 0, %s442
      %s460 = sphi 0, %s460
      %s462 = sphi 0, %s460
      %s463 = sphi 0, %s462
      %s477 = sphi 0, %s463
      %s481 = sphi 0, %s481
      %s483 = sphi 0, %s481
      %s484 = sphi 0, %s483
      %s498 = sphi 0, %s484
      %s502 = sphi 0, %s502
      %s504 = sphi 0, %s502
      %s505 = sphi 0, %s504
      %s519 = sphi 0, %s505
      %s523 = sphi 0, %s523
      %s525 = sphi 0, %s523
      %s526 = sphi 0, %s525
      %s540 = sphi 0, %s526
      %s544 = sphi 0, %s544
      %s546 = sphi 0, %s544
      %s547 = sphi 0, %s546
      %s561 = sphi 0, %s547
      %s567 = sphi 0, %s569
      %s570 = sphi 0, %s567
      %s571 = sphi 0, %s570
      %s587 = sphi 0, %s571
    $region4: #{decoder_layer.1} parent=1 // loop_header_branch
      %36 = sbr.rel (%p34) target = $region8
    $region5: #{decoder_layer.1} parent=1 // loop_body
      %s38 = ssub.s32 %s33, 1
      %s39 = ssub.s32 %s33, 2
      %s40 = sadd.s32 %s33, 1
      %s41 = ssub.s32 %s33, %s40
      %p42 = scmp.eq.s32.totalorder %s41, 0
      %s44 = sadd.s32 %s43, 1
      %s45 = scalar_select %p42, %s43, %s44
      %p48 = pneg %p42
      %p49 = scmp.eq.s32.totalorder %s33, 1
      %p50 = por %p48, %p49
      %p51 = scmp.ne.s32.totalorder %s43, %s46
      %p52 = scmp.eq.s32.totalorder %s33, 0
      %p53 = por %p51, %p52
      %p54 = scmp.ne.s32.totalorder %s43, %s46
      %p55 = scmp.eq.s32.totalorder %s38, 1
      %p56 = por %p54, %p55
      %p57 = scmp.ne.s32.totalorder %s46, %s47
      %p58 = scmp.eq.s32.totalorder %s38, 0
      %p59 = por %p57, %p58
      %p60 = scmp.ne.s32.totalorder %s46, %s47
      %p61 = scmp.eq.s32.totalorder %s39, 1
      %p62 = por %p60, %p61
      %p64 = scmp.ne.s32.totalorder %s47, %s63
      %p65 = scmp.eq.s32.totalorder %s39, 0
      %p66 = por %p64, %p65
      %s67 = ssub.s32 %s33, %s40
      %p68 = scmp.eq.s32.totalorder %s67, 0
      %s70 = sadd.s32 %s69, 1
      %s71 = scalar_select %p68, %s69, %s70
      %p74 = pneg %p68
      %p75 = scmp.eq.s32.totalorder %s33, 1
      %p76 = por %p74, %p75
      %p77 = scmp.ne.s32.totalorder %s69, %s72
      %p78 = scmp.eq.s32.totalorder %s33, 0
      %p79 = por %p77, %p78
      %p80 = scmp.ne.s32.totalorder %s69, %s72
      %p81 = scmp.eq.s32.totalorder %s38, 1
      %p82 = por %p80, %p81
      %p83 = scmp.ne.s32.totalorder %s72, %s73
      %p84 = scmp.eq.s32.totalorder %s38, 0
      %p85 = por %p83, %p84
      %p86 = scmp.ne.s32.totalorder %s72, %s73
      %p87 = scmp.eq.s32.totalorder %s39, 1
      %p88 = por %p86, %p87
      %p90 = scmp.ne.s32.totalorder %s73, %s89
      %p91 = scmp.eq.s32.totalorder %s39, 0
      %p92 = por %p90, %p91
      %s93 = ssub.s32 %s33, %s40
      %p94 = scmp.eq.s32.totalorder %s93, 0
      %s96 = sadd.s32 %s95, 1
      %s97 = scalar_select %p94, %s95, %s96
      %p100 = pneg %p94
      %p101 = scmp.eq.s32.totalorder %s33, 1
      %p102 = por %p100, %p101
      %p103 = scmp.ne.s32.totalorder %s95, %s98
      %p104 = scmp.eq.s32.totalorder %s33, 0
      %p105 = por %p103, %p104
      %p106 = scmp.ne.s32.totalorder %s95, %s98
      %p107 = scmp.eq.s32.totalorder %s38, 1
      %p108 = por %p106, %p107
      %p109 = scmp.ne.s32.totalorder %s98, %s99
      %p110 = scmp.eq.s32.totalorder %s38, 0
      %p111 = por %p109, %p110
      %p112 = scmp.ne.s32.totalorder %s98, %s99
      %p113 = scmp.eq.s32.totalorder %s39, 1
      %p114 = por %p112, %p113
      %p116 = scmp.ne.s32.totalorder %s99, %s115
      %p117 = scmp.eq.s32.totalorder %s39, 0
      %p118 = por %p116, %p117
      %s119 = ssub.s32 %s33, %s40
      %p120 = scmp.eq.s32.totalorder %s119, 0
      %s122 = sadd.s32 %s121, 1
      %s123 = scalar_select %p120, %s121, %s122
      %p126 = pneg %p120
      %p127 = scmp.eq.s32.totalorder %s33, 1
      %p128 = por %p126, %p127
      %p129 = scmp.ne.s32.totalorder %s121, %s124
      %p130 = scmp.eq.s32.totalorder %s33, 0
      %p131 = por %p129, %p130
      %p132 = scmp.ne.s32.totalorder %s121, %s124
      %p133 = scmp.eq.s32.totalorder %s38, 1
      %p134 = por %p132, %p133
      %p135 = scmp.ne.s32.totalorder %s124, %s125
      %p136 = scmp.eq.s32.totalorder %s38, 0
      %p137 = por %p135, %p136
      %p138 = scmp.ne.s32.totalorder %s124, %s125
      %p139 = scmp.eq.s32.totalorder %s39, 1
      %p140 = por %p138, %p139
      %p142 = scmp.ne.s32.totalorder %s125, %s141
      %p143 = scmp.eq.s32.totalorder %s39, 0
      %p144 = por %p142, %p143
      %s146 = sadd.s32 %s145, 1
      %p149 = scmp.eq.s32.totalorder %s33, 1
      %p150 = scmp.ne.s32.totalorder %s145, %s147
      %p151 = scmp.eq.s32.totalorder %s33, 0
      %p152 = por %p150, %p151
      %p153 = scmp.ne.s32.totalorder %s145, %s147
      %p154 = scmp.eq.s32.totalorder %s38, 1
      %p155 = por %p153, %p154
      %p156 = scmp.ne.s32.totalorder %s147, %s148
      %p157 = scmp.eq.s32.totalorder %s38, 0
      %p158 = por %p156, %p157
      %p159 = scmp.ne.s32.totalorder %s147, %s148
      %p160 = scmp.eq.s32.totalorder %s39, 1
      %p161 = por %p159, %p160
      %p163 = scmp.ne.s32.totalorder %s148, %s162
      %p164 = scmp.eq.s32.totalorder %s39, 0
      %p165 = por %p163, %p164
      %s167 = sadd.s32 %s166, 1
      %p170 = scmp.eq.s32.totalorder %s33, 1
      %p171 = scmp.ne.s32.totalorder %s166, %s168
      %p172 = scmp.eq.s32.totalorder %s33, 0
      %p173 = por %p171, %p172
      %p174 = scmp.ne.s32.totalorder %s166, %s168
      %p175 = scmp.eq.s32.totalorder %s38, 1
      %p176 = por %p174, %p175
      %p177 = scmp.ne.s32.totalorder %s168, %s169
      %p178 = scmp.eq.s32.totalorder %s38, 0
      %p179 = por %p177, %p178
      %p180 = scmp.ne.s32.totalorder %s168, %s169
      %p181 = scmp.eq.s32.totalorder %s39, 1
      %p182 = por %p180, %p181
      %p184 = scmp.ne.s32.totalorder %s169, %s183
      %p185 = scmp.eq.s32.totalorder %s39, 0
      %p186 = por %p184, %p185
      %s188 = sadd.s32 %s187, 1
      %p191 = scmp.eq.s32.totalorder %s33, 1
      %p192 = scmp.ne.s32.totalorder %s187, %s189
      %p193 = scmp.eq.s32.totalorder %s33, 0
      %p194 = por %p192, %p193
      %p195 = scmp.ne.s32.totalorder %s187, %s189
      %p196 = scmp.eq.s32.totalorder %s38, 1
      %p197 = por %p195, %p196
      %p198 = scmp.ne.s32.totalorder %s189, %s190
      %p199 = scmp.eq.s32.totalorder %s38, 0
      %p200 = por %p198, %p199
      %p201 = scmp.ne.s32.totalorder %s189, %s190
      %p202 = scmp.eq.s32.totalorder %s39, 1
      %p203 = por %p201, %p202
      %p205 = scmp.ne.s32.totalorder %s190, %s204
      %p206 = scmp.eq.s32.totalorder %s39, 0
      %p207 = por %p205, %p206
      %s209 = sadd.s32 %s208, 1
      %p212 = scmp.eq.s32.totalorder %s33, 1
      %p213 = scmp.ne.s32.totalorder %s208, %s210
      %p214 = scmp.eq.s32.totalorder %s33, 0
      %p215 = por %p213, %p214
      %p216 = scmp.ne.s32.totalorder %s208, %s210
      %p217 = scmp.eq.s32.totalorder %s38, 1
      %p218 = por %p216, %p217
      %p219 = scmp.ne.s32.totalorder %s210, %s211
      %p220 = scmp.eq.s32.totalorder %s38, 0
      %p221 = por %p219, %p220
      %p222 = scmp.ne.s32.totalorder %s210, %s211
      %p223 = scmp.eq.s32.totalorder %s39, 1
      %p224 = por %p222, %p223
      %p226 = scmp.ne.s32.totalorder %s211, %s225
      %p227 = scmp.eq.s32.totalorder %s39, 0
      %p228 = por %p226, %p227
      %s230 = sadd.s32 %s229, 1
      %p233 = scmp.eq.s32.totalorder %s33, 1
      %p234 = scmp.ne.s32.totalorder %s229, %s231
      %p235 = scmp.eq.s32.totalorder %s33, 0
      %p236 = por %p234, %p235
      %p237 = scmp.ne.s32.totalorder %s229, %s231
      %p238 = scmp.eq.s32.totalorder %s38, 1
      %p239 = por %p237, %p238
      %p240 = scmp.ne.s32.totalorder %s231, %s232
      %p241 = scmp.eq.s32.totalorder %s38, 0
      %p242 = por %p240, %p241
      %p243 = scmp.ne.s32.totalorder %s231, %s232
      %p244 = scmp.eq.s32.totalorder %s39, 1
      %p245 = por %p243, %p244
      %p247 = scmp.ne.s32.totalorder %s232, %s246
      %p248 = scmp.eq.s32.totalorder %s39, 0
      %p249 = por %p247, %p248
      %s251 = sadd.s32 %s250, 1
      %p254 = scmp.eq.s32.totalorder %s33, 1
      %p255 = scmp.ne.s32.totalorder %s250, %s252
      %p256 = scmp.eq.s32.totalorder %s33, 0
      %p257 = por %p255, %p256
      %p258 = scmp.ne.s32.totalorder %s250, %s252
      %p259 = scmp.eq.s32.totalorder %s38, 1
      %p260 = por %p258, %p259
      %p261 = scmp.ne.s32.totalorder %s252, %s253
      %p262 = scmp.eq.s32.totalorder %s38, 0
      %p263 = por %p261, %p262
      %p264 = scmp.ne.s32.totalorder %s252, %s253
      %p265 = scmp.eq.s32.totalorder %s39, 1
      %p266 = por %p264, %p265
      %p268 = scmp.ne.s32.totalorder %s253, %s267
      %p269 = scmp.eq.s32.totalorder %s39, 0
      %p270 = por %p268, %p269
      %s272 = sadd.s32 %s271, 1
      %p275 = scmp.eq.s32.totalorder %s33, 1
      %p276 = scmp.ne.s32.totalorder %s271, %s273
      %p277 = scmp.eq.s32.totalorder %s33, 0
      %p278 = por %p276, %p277
      %p279 = scmp.ne.s32.totalorder %s271, %s273
      %p280 = scmp.eq.s32.totalorder %s38, 1
      %p281 = por %p279, %p280
      %p282 = scmp.ne.s32.totalorder %s273, %s274
      %p283 = scmp.eq.s32.totalorder %s38, 0
      %p284 = por %p282, %p283
      %p285 = scmp.ne.s32.totalorder %s273, %s274
      %p286 = scmp.eq.s32.totalorder %s39, 1
      %p287 = por %p285, %p286
      %p289 = scmp.ne.s32.totalorder %s274, %s288
      %p290 = scmp.eq.s32.totalorder %s39, 0
      %p291 = por %p289, %p290
      %s293 = sadd.s32 %s292, 1
      %p296 = scmp.eq.s32.totalorder %s33, 1
      %p297 = scmp.ne.s32.totalorder %s292, %s294
      %p298 = scmp.eq.s32.totalorder %s33, 0
      %p299 = por %p297, %p298
      %p300 = scmp.ne.s32.totalorder %s292, %s294
      %p301 = scmp.eq.s32.totalorder %s38, 1
      %p302 = por %p300, %p301
      %p303 = scmp.ne.s32.totalorder %s294, %s295
      %p304 = scmp.eq.s32.totalorder %s38, 0
      %p305 = por %p303, %p304
      %p306 = scmp.ne.s32.totalorder %s294, %s295
      %p307 = scmp.eq.s32.totalorder %s39, 1
      %p308 = por %p306, %p307
      %p310 = scmp.ne.s32.totalorder %s295, %s309
      %p311 = scmp.eq.s32.totalorder %s39, 0
      %p312 = por %p310, %p311
      %s314 = sadd.s32 %s313, 1
      %p317 = scmp.eq.s32.totalorder %s33, 1
      %p318 = scmp.ne.s32.totalorder %s313, %s315
      %p319 = scmp.eq.s32.totalorder %s33, 0
      %p320 = por %p318, %p319
      %p321 = scmp.ne.s32.totalorder %s313, %s315
      %p322 = scmp.eq.s32.totalorder %s38, 1
      %p323 = por %p321, %p322
      %p324 = scmp.ne.s32.totalorder %s315, %s316
      %p325 = scmp.eq.s32.totalorder %s38, 0
      %p326 = por %p324, %p325
      %p327 = scmp.ne.s32.totalorder %s315, %s316
      %p328 = scmp.eq.s32.totalorder %s39, 1
      %p329 = por %p327, %p328
      %p331 = scmp.ne.s32.totalorder %s316, %s330
      %p332 = scmp.eq.s32.totalorder %s39, 0
      %p333 = por %p331, %p332
      %s335 = sadd.s32 %s334, 1
      %p338 = scmp.eq.s32.totalorder %s33, 1
      %p339 = scmp.ne.s32.totalorder %s334, %s336
      %p340 = scmp.eq.s32.totalorder %s33, 0
      %p341 = por %p339, %p340
      %p342 = scmp.ne.s32.totalorder %s334, %s336
      %p343 = scmp.eq.s32.totalorder %s38, 1
      %p344 = por %p342, %p343
      %p345 = scmp.ne.s32.totalorder %s336, %s337
      %p346 = scmp.eq.s32.totalorder %s38, 0
      %p347 = por %p345, %p346
      %p348 = scmp.ne.s32.totalorder %s336, %s337
      %p349 = scmp.eq.s32.totalorder %s39, 1
      %p350 = por %p348, %p349
      %p352 = scmp.ne.s32.totalorder %s337, %s351
      %p353 = scmp.eq.s32.totalorder %s39, 0
      %p354 = por %p352, %p353
      %s356 = sadd.s32 %s355, 1
      %p359 = scmp.eq.s32.totalorder %s33, 1
      %p360 = scmp.ne.s32.totalorder %s355, %s357
      %p361 = scmp.eq.s32.totalorder %s33, 0
      %p362 = por %p360, %p361
      %p363 = scmp.ne.s32.totalorder %s355, %s357
      %p364 = scmp.eq.s32.totalorder %s38, 1
      %p365 = por %p363, %p364
      %p366 = scmp.ne.s32.totalorder %s357, %s358
      %p367 = scmp.eq.s32.totalorder %s38, 0
      %p368 = por %p366, %p367
      %p369 = scmp.ne.s32.totalorder %s357, %s358
      %p370 = scmp.eq.s32.totalorder %s39, 1
      %p371 = por %p369, %p370
      %p373 = scmp.ne.s32.totalorder %s358, %s372
      %p374 = scmp.eq.s32.totalorder %s39, 0
      %p375 = por %p373, %p374
      %s377 = sadd.s32 %s376, 1
      %p380 = scmp.eq.s32.totalorder %s33, 1
      %p381 = scmp.ne.s32.totalorder %s376, %s378
      %p382 = scmp.eq.s32.totalorder %s33, 0
      %p383 = por %p381, %p382
      %p384 = scmp.ne.s32.totalorder %s376, %s378
      %p385 = scmp.eq.s32.totalorder %s38, 1
      %p386 = por %p384, %p385
      %p387 = scmp.ne.s32.totalorder %s378, %s379
      %p388 = scmp.eq.s32.totalorder %s38, 0
      %p389 = por %p387, %p388
      %p390 = scmp.ne.s32.totalorder %s378, %s379
      %p391 = scmp.eq.s32.totalorder %s39, 1
      %p392 = por %p390, %p391
      %p394 = scmp.ne.s32.totalorder %s379, %s393
      %p395 = scmp.eq.s32.totalorder %s39, 0
      %p396 = por %p394, %p395
      %s398 = sadd.s32 %s397, 1
      %p401 = scmp.eq.s32.totalorder %s33, 1
      %p402 = scmp.ne.s32.totalorder %s397, %s399
      %p403 = scmp.eq.s32.totalorder %s33, 0
      %p404 = por %p402, %p403
      %p405 = scmp.ne.s32.totalorder %s397, %s399
      %p406 = scmp.eq.s32.totalorder %s38, 1
      %p407 = por %p405, %p406
      %p408 = scmp.ne.s32.totalorder %s399, %s400
      %p409 = scmp.eq.s32.totalorder %s38, 0
      %p410 = por %p408, %p409
      %p411 = scmp.ne.s32.totalorder %s399, %s400
      %p412 = scmp.eq.s32.totalorder %s39, 1
      %p413 = por %p411, %p412
      %p415 = scmp.ne.s32.totalorder %s400, %s414
      %p416 = scmp.eq.s32.totalorder %s39, 0
      %p417 = por %p415, %p416
      %s419 = sadd.s32 %s418, 1
      %p422 = scmp.eq.s32.totalorder %s33, 1
      %p423 = scmp.ne.s32.totalorder %s418, %s420
      %p424 = scmp.eq.s32.totalorder %s33, 0
      %p425 = por %p423, %p424
      %p426 = scmp.ne.s32.totalorder %s418, %s420
      %p427 = scmp.eq.s32.totalorder %s38, 1
      %p428 = por %p426, %p427
      %p429 = scmp.ne.s32.totalorder %s420, %s421
      %p430 = scmp.eq.s32.totalorder %s38, 0
      %p431 = por %p429, %p430
      %p432 = scmp.ne.s32.totalorder %s420, %s421
      %p433 = scmp.eq.s32.totalorder %s39, 1
      %p434 = por %p432, %p433
      %p436 = scmp.ne.s32.totalorder %s421, %s435
      %p437 = scmp.eq.s32.totalorder %s39, 0
      %p438 = por %p436, %p437
      %s440 = sadd.s32 %s439, 1
      %p443 = scmp.eq.s32.totalorder %s33, 1
      %p444 = scmp.ne.s32.totalorder %s439, %s441
      %p445 = scmp.eq.s32.totalorder %s33, 0
      %p446 = por %p444, %p445
      %p447 = scmp.ne.s32.totalorder %s439, %s441
      %p448 = scmp.eq.s32.totalorder %s38, 1
      %p449 = por %p447, %p448
      %p450 = scmp.ne.s32.totalorder %s441, %s442
      %p451 = scmp.eq.s32.totalorder %s38, 0
      %p452 = por %p450, %p451
      %p453 = scmp.ne.s32.totalorder %s441, %s442
      %p454 = scmp.eq.s32.totalorder %s39, 1
      %p455 = por %p453, %p454
      %p457 = scmp.ne.s32.totalorder %s442, %s456
      %p458 = scmp.eq.s32.totalorder %s39, 0
      %p459 = por %p457, %p458
      %s461 = sadd.s32 %s460, 1
      %p464 = scmp.eq.s32.totalorder %s33, 1
      %p465 = scmp.ne.s32.totalorder %s460, %s462
      %p466 = scmp.eq.s32.totalorder %s33, 0
      %p467 = por %p465, %p466
      %p468 = scmp.ne.s32.totalorder %s460, %s462
      %p469 = scmp.eq.s32.totalorder %s38, 1
      %p470 = por %p468, %p469
      %p471 = scmp.ne.s32.totalorder %s462, %s463
      %p472 = scmp.eq.s32.totalorder %s38, 0
      %p473 = por %p471, %p472
      %p474 = scmp.ne.s32.totalorder %s462, %s463
      %p475 = scmp.eq.s32.totalorder %s39, 1
      %p476 = por %p474, %p475
      %p478 = scmp.ne.s32.totalorder %s463, %s477
      %p479 = scmp.eq.s32.totalorder %s39, 0
      %p480 = por %p478, %p479
      %s482 = sadd.s32 %s481, 1
      %p485 = scmp.eq.s32.totalorder %s33, 1
      %p486 = scmp.ne.s32.totalorder %s481, %s483
      %p487 = scmp.eq.s32.totalorder %s33, 0
      %p488 = por %p486, %p487
      %p489 = scmp.ne.s32.totalorder %s481, %s483
      %p490 = scmp.eq.s32.totalorder %s38, 1
      %p491 = por %p489, %p490
      %p492 = scmp.ne.s32.totalorder %s483, %s484
      %p493 = scmp.eq.s32.totalorder %s38, 0
      %p494 = por %p492, %p493
      %p495 = scmp.ne.s32.totalorder %s483, %s484
      %p496 = scmp.eq.s32.totalorder %s39, 1
      %p497 = por %p495, %p496
      %p499 = scmp.ne.s32.totalorder %s484, %s498
      %p500 = scmp.eq.s32.totalorder %s39, 0
      %p501 = por %p499, %p500
      %s503 = sadd.s32 %s502, 1
      %p506 = scmp.eq.s32.totalorder %s33, 1
      %p507 = scmp.ne.s32.totalorder %s502, %s504
      %p508 = scmp.eq.s32.totalorder %s33, 0
      %p509 = por %p507, %p508
      %p510 = scmp.ne.s32.totalorder %s502, %s504
      %p511 = scmp.eq.s32.totalorder %s38, 1
      %p512 = por %p510, %p511
      %p513 = scmp.ne.s32.totalorder %s504, %s505
      %p514 = scmp.eq.s32.totalorder %s38, 0
      %p515 = por %p513, %p514
      %p516 = scmp.ne.s32.totalorder %s504, %s505
      %p517 = scmp.eq.s32.totalorder %s39, 1
      %p518 = por %p516, %p517
      %p520 = scmp.ne.s32.totalorder %s505, %s519
      %p521 = scmp.eq.s32.totalorder %s39, 0
      %p522 = por %p520, %p521
      %s524 = sadd.s32 %s523, 1
      %p527 = scmp.eq.s32.totalorder %s33, 1
      %p528 = scmp.ne.s32.totalorder %s523, %s525
      %p529 = scmp.eq.s32.totalorder %s33, 0
      %p530 = por %p528, %p529
      %p531 = scmp.ne.s32.totalorder %s523, %s525
      %p532 = scmp.eq.s32.totalorder %s38, 1
      %p533 = por %p531, %p532
      %p534 = scmp.ne.s32.totalorder %s525, %s526
      %p535 = scmp.eq.s32.totalorder %s38, 0
      %p536 = por %p534, %p535
      %p537 = scmp.ne.s32.totalorder %s525, %s526
      %p538 = scmp.eq.s32.totalorder %s39, 1
      %p539 = por %p537, %p538
      %p541 = scmp.ne.s32.totalorder %s526, %s540
      %p542 = scmp.eq.s32.totalorder %s39, 0
      %p543 = por %p541, %p542
      %s545 = sadd.s32 %s544, 1
      %p548 = scmp.eq.s32.totalorder %s33, 1
      %p549 = scmp.ne.s32.totalorder %s544, %s546
      %p550 = scmp.eq.s32.totalorder %s33, 0
      %p551 = por %p549, %p550
      %p552 = scmp.ne.s32.totalorder %s544, %s546
      %p553 = scmp.eq.s32.totalorder %s38, 1
      %p554 = por %p552, %p553
      %p555 = scmp.ne.s32.totalorder %s546, %s547
      %p556 = scmp.eq.s32.totalorder %s38, 0
      %p557 = por %p555, %p556
      %p558 = scmp.ne.s32.totalorder %s546, %s547
      %p559 = scmp.eq.s32.totalorder %s39, 1
      %p560 = por %p558, %p559
      %p562 = scmp.ne.s32.totalorder %s547, %s561
      %p563 = scmp.eq.s32.totalorder %s39, 0
      %p564 = por %p562, %p563
      %s565 = ssub.s32 %s33, %s40
      %p566 = scmp.eq.s32.totalorder %s565, 0
      %s568 = sadd.s32 %s567, 1
      %s569 = scalar_select %p566, %s567, %s568
      %p572 = pneg %p566
      %p573 = scmp.eq.s32.totalorder %s33, 1
      %p574 = por %p572, %p573
      %p575 = scmp.ne.s32.totalorder %s567, %s570
      %p576 = scmp.eq.s32.totalorder %s33, 0
      %p577 = por %p575, %p576
      %p578 = scmp.ne.s32.totalorder %s567, %s570
      %p579 = scmp.eq.s32.totalorder %s38, 1
      %p580 = por %p578, %p579
      %p581 = scmp.ne.s32.totalorder %s570, %s571
      %p582 = scmp.eq.s32.totalorder %s38, 0
      %p583 = por %p581, %p582
      %p584 = scmp.ne.s32.totalorder %s570, %s571
      %p585 = scmp.eq.s32.totalorder %s39, 1
      %p586 = por %p584, %p585
      %p588 = scmp.ne.s32.totalorder %s571, %s587
      %p589 = scmp.eq.s32.totalorder %s39, 0
      %p590 = por %p588, %p589
      %p591 = scmp.le.s32.totalorder 1, %s33
      %p592 = scmp.lt.s32.totalorder %s33, 3
      %p593 = pnand %p591, %p592
      %p594 = pneg %p593
      // Predicated region
      $region9: #{decoder_layer.1} parent=5 // pred_check
        _
      $region10: #{decoder_layer.1} parent=5 // pred_check_branch
        %596 = sbr.rel (%p593) target = $region12
      $region11: #{decoder_layer.1} parent=5 // pred_region
        %s597 = ssub.s32 %s33, 1
        // Predicated region
        $region13: #{decoder_layer.1} parent=11 // pred_check
          %p598 = pneg %p158
        $region14: #{decoder_layer.1} parent=11 // pred_check_branch
          %600 = sbr.rel (%p598) target = $region16
        $region15: #{decoder_layer.1} parent=11 // pred_region
          _
        $region16: #{decoder_layer.1} parent=11 // pred_fallthru
          _
        // Predicated region
        $region17: #{decoder_layer.1} parent=11 // pred_check
          %p601 = pneg %p179
        $region18: #{decoder_layer.1} parent=11 // pred_check_branch
          %603 = sbr.rel (%p601) target = $region20
        $region19: #{decoder_layer.1} parent=11 // pred_region
          _
        $region20: #{decoder_layer.1} parent=11 // pred_fallthru
          _
        // Predicated region
        $region21: #{decoder_layer.1} parent=11 // pred_check
          %p604 = pneg %p200
        $region22: #{decoder_layer.1} parent=11 // pred_check_branch
          %606 = sbr.rel (%p604) target = $region24
        $region23: #{decoder_layer.1} parent=11 // pred_region
          _
        $region24: #{decoder_layer.1} parent=11 // pred_fallthru
          _
        // Predicated region
        $region25: #{decoder_layer.1} parent=11 // pred_check
          %p607 = pneg %p221
        $region26: #{decoder_layer.1} parent=11 // pred_check_branch
          %609 = sbr.rel (%p607) target = $region28
        $region27: #{decoder_layer.1} parent=11 // pred_region
          _
        $region28: #{decoder_layer.1} parent=11 // pred_fallthru
          _
        // Predicated region
        $region29: #{decoder_layer.1} parent=11 // pred_check
          %p610 = pneg %p242
        $region30: #{decoder_layer.1} parent=11 // pred_check_branch
          %612 = sbr.rel (%p610) target = $region32
        $region31: #{decoder_layer.1} parent=11 // pred_region
          _
        $region32: #{decoder_layer.1} parent=11 // pred_fallthru
          _
        // Predicated region
        $region33: #{decoder_layer.1} parent=11 // pred_check
          %p613 = pneg %p263
        $region34: #{decoder_layer.1} parent=11 // pred_check_branch
          %615 = sbr.rel (%p613) target = $region36
        $region35: #{decoder_layer.1} parent=11 // pred_region
          _
        $region36: #{decoder_layer.1} parent=11 // pred_fallthru
          _
        // Predicated region
        $region37: #{decoder_layer.1} parent=11 // pred_check
          %p616 = pneg %p284
        $region38: #{decoder_layer.1} parent=11 // pred_check_branch
          %618 = sbr.rel (%p616) target = $region40
        $region39: #{decoder_layer.1} parent=11 // pred_region
          _
        $region40: #{decoder_layer.1} parent=11 // pred_fallthru
          _
        // Predicated region
        $region41: #{decoder_layer.1} parent=11 // pred_check
          %p619 = pneg %p305
        $region42: #{decoder_layer.1} parent=11 // pred_check_branch
          %621 = sbr.rel (%p619) target = $region44
        $region43: #{decoder_layer.1} parent=11 // pred_region
          _
        $region44: #{decoder_layer.1} parent=11 // pred_fallthru
          _
        // Predicated region
        $region45: #{decoder_layer.1} parent=11 // pred_check
          %p622 = pneg %p326
        $region46: #{decoder_layer.1} parent=11 // pred_check_branch
          %624 = sbr.rel (%p622) target = $region48
        $region47: #{decoder_layer.1} parent=11 // pred_region
          _
        $region48: #{decoder_layer.1} parent=11 // pred_fallthru
          _
        // Predicated region
        $region49: #{decoder_layer.1} parent=11 // pred_check
          %p625 = pneg %p347
        $region50: #{decoder_layer.1} parent=11 // pred_check_branch
          %627 = sbr.rel (%p625) target = $region52
        $region51: #{decoder_layer.1} parent=11 // pred_region
          _
        $region52: #{decoder_layer.1} parent=11 // pred_fallthru
          _
        // Predicated region
        $region53: #{decoder_layer.1} parent=11 // pred_check
          %p628 = pneg %p368
        $region54: #{decoder_layer.1} parent=11 // pred_check_branch
          %630 = sbr.rel (%p628) target = $region56
        $region55: #{decoder_layer.1} parent=11 // pred_region
          _
        $region56: #{decoder_layer.1} parent=11 // pred_fallthru
          _
        // Predicated region
        $region57: #{decoder_layer.1} parent=11 // pred_check
          %p631 = pneg %p389
        $region58: #{decoder_layer.1} parent=11 // pred_check_branch
          %633 = sbr.rel (%p631) target = $region60
        $region59: #{decoder_layer.1} parent=11 // pred_region
          _
        $region60: #{decoder_layer.1} parent=11 // pred_fallthru
          _
        // Predicated region
        $region61: #{decoder_layer.1} parent=11 // pred_check
          %p634 = pneg %p410
        $region62: #{decoder_layer.1} parent=11 // pred_check_branch
          %636 = sbr.rel (%p634) target = $region64
        $region63: #{decoder_layer.1} parent=11 // pred_region
          _
        $region64: #{decoder_layer.1} parent=11 // pred_fallthru
          _
        // Predicated region
        $region65: #{decoder_layer.1} parent=11 // pred_check
          %p637 = pneg %p431
        $region66: #{decoder_layer.1} parent=11 // pred_check_branch
          %639 = sbr.rel (%p637) target = $region68
        $region67: #{decoder_layer.1} parent=11 // pred_region
          _
        $region68: #{decoder_layer.1} parent=11 // pred_fallthru
          _
        // Predicated region
        $region69: #{decoder_layer.1} parent=11 // pred_check
          %p640 = pneg %p452
        $region70: #{decoder_layer.1} parent=11 // pred_check_branch
          %642 = sbr.rel (%p640) target = $region72
        $region71: #{decoder_layer.1} parent=11 // pred_region
          _
        $region72: #{decoder_layer.1} parent=11 // pred_fallthru
          _
        // Predicated region
        $region73: #{decoder_layer.1} parent=11 // pred_check
          %p643 = pneg %p473
        $region74: #{decoder_layer.1} parent=11 // pred_check_branch
          %645 = sbr.rel (%p643) target = $region76
        $region75: #{decoder_layer.1} parent=11 // pred_region
          _
        $region76: #{decoder_layer.1} parent=11 // pred_fallthru
          _
        // Predicated region
        $region77: #{decoder_layer.1} parent=11 // pred_check
          %p646 = pneg %p494
        $region78: #{decoder_layer.1} parent=11 // pred_check_branch
          %648 = sbr.rel (%p646) target = $region80
        $region79: #{decoder_layer.1} parent=11 // pred_region
          _
        $region80: #{decoder_layer.1} parent=11 // pred_fallthru
          _
        // Predicated region
        $region81: #{decoder_layer.1} parent=11 // pred_check
          %p649 = pneg %p515
        $region82: #{decoder_layer.1} parent=11 // pred_check_branch
          %651 = sbr.rel (%p649) target = $region84
        $region83: #{decoder_layer.1} parent=11 // pred_region
          _
        $region84: #{decoder_layer.1} parent=11 // pred_fallthru
          _
        // Predicated region
        $region85: #{decoder_layer.1} parent=11 // pred_check
          %p652 = pneg %p536
        $region86: #{decoder_layer.1} parent=11 // pred_check_branch
          %654 = sbr.rel (%p652) target = $region88
        $region87: #{decoder_layer.1} parent=11 // pred_region
          _
        $region88: #{decoder_layer.1} parent=11 // pred_fallthru
          _
        // Predicated region
        $region89: #{decoder_layer.1} parent=11 // pred_check
          %p655 = pneg %p557
        $region90: #{decoder_layer.1} parent=11 // pred_check_branch
          %657 = sbr.rel (%p655) target = $region92
        $region91: #{decoder_layer.1} parent=11 // pred_region
          _
        $region92: #{decoder_layer.1} parent=11 // pred_fallthru
          _
      $region12: #{decoder_layer.1} parent=5 // pred_fallthru
        _
      %p658 = scmp.lt.s32.totalorder %s33, 2
      // Predicated region
      $region93: #{decoder_layer.1} parent=5 // pred_check
        %p659 = pneg %p658
      $region94: #{decoder_layer.1} parent=5 // pred_check_branch
        %661 = sbr.rel (%p659) target = $region96
      $region95: #{decoder_layer.1} parent=5 // pred_region
        // Predicated region
        $region97: #{decoder_layer.1} parent=95 // pred_check
          %p662 = pneg %p53
        $region98: #{decoder_layer.1} parent=95 // pred_check_branch
          %664 = sbr.rel (%p662) target = $region100
        $region99: #{decoder_layer.1} parent=95 // pred_region
          %p665 = scmp.lt.s32.totalorder %s33, 1
          %s666 = scalar_select %p665, %s33, 1
          %s667 = smul.addr %s666, 8
          %s668 = scalar_lea.vmem %s0, %s667
        $region100: #{decoder_layer.1} parent=95 // pred_fallthru
          _
        // Predicated region
        $region101: #{decoder_layer.1} parent=95 // pred_check
          %p669 = pneg %p79
        $region102: #{decoder_layer.1} parent=95 // pred_check_branch
          %671 = sbr.rel (%p669) target = $region104
        $region103: #{decoder_layer.1} parent=95 // pred_region
          %p672 = scmp.lt.s32.totalorder %s33, 1
          %s673 = scalar_select %p672, %s33, 1
          %s674 = smul.addr %s673, 8
          %s675 = scalar_lea.vmem %s1, %s674
        $region104: #{decoder_layer.1} parent=95 // pred_fallthru
          _
        // Predicated region
        $region105: #{decoder_layer.1} parent=95 // pred_check
          %p676 = pneg %p105
        $region106: #{decoder_layer.1} parent=95 // pred_check_branch
          %678 = sbr.rel (%p676) target = $region108
        $region107: #{decoder_layer.1} parent=95 // pred_region
          %p679 = scmp.lt.s32.totalorder %s33, 1
          %s680 = scalar_select %p679, %s33, 1
          %s681 = smul.addr %s680, 8
          %s682 = scalar_lea.vmem %s2, %s681
        $region108: #{decoder_layer.1} parent=95 // pred_fallthru
          _
        // Predicated region
        $region109: #{decoder_layer.1} parent=95 // pred_check
          %p683 = pneg %p131
        $region110: #{decoder_layer.1} parent=95 // pred_check_branch
          %685 = sbr.rel (%p683) target = $region112
        $region111: #{decoder_layer.1} parent=95 // pred_region
          %p686 = scmp.lt.s32.totalorder %s33, 1
          %s687 = scalar_select %p686, %s33, 1
          %s688 = smul.addr %s687, 8
          %s689 = scalar_lea.vmem %s3, %s688
        $region112: #{decoder_layer.1} parent=95 // pred_fallthru
          _
      $region96: #{decoder_layer.1} parent=5 // pred_fallthru
        _
      %p690 = scmp.le.s32.totalorder 1, %s33
      %p691 = scmp.lt.s32.totalorder %s33, 3
      %p692 = pnand %p690, %p691
      %p693 = pneg %p692
      // Predicated region
      $region113: #{decoder_layer.1} parent=5 // pred_check
        _
      $region114: #{decoder_layer.1} parent=5 // pred_check_branch
        %695 = sbr.rel (%p692) target = $region116
      $region115: #{decoder_layer.1} parent=5 // pred_region
        %s696 = ssub.s32 %s33, 1
        %p697 = scmp.lt.s32.totalorder %s38, 1
        %s698 = scalar_select %p697, %s38, 1
        %s699 = smul.addr %s698, 8
        %s700 = scalar_lea.vmem %s0, %s699
        %p701 = pneg %p59
        %p702 = pneg %p56
        %p703 = scmp.lt.s32.totalorder %s38, 1
        %s704 = scalar_select %p703, %s38, 1
        %s705 = smul.addr %s704, 8
        %s706 = scalar_lea.vmem %s1, %s705
        %p707 = pneg %p85
        %p708 = pneg %p82
        %p709 = scmp.lt.s32.totalorder %s38, 1
        %s710 = scalar_select %p709, %s38, 1
        %s711 = smul.addr %s710, 8
        %s712 = scalar_lea.vmem %s2, %s711
        %p713 = pneg %p111
        %p714 = pneg %p108
        %p715 = scmp.lt.s32.totalorder %s38, 1
        %s716 = scalar_select %p715, %s38, 1
        %s717 = smul.addr %s716, 8
        %s718 = scalar_lea.vmem %s3, %s717
        %p719 = pneg %p137
        %p720 = pneg %p134
        %p721 = pneg %p158
        %p722 = pneg %p155
        %p723 = pneg %p179
        %p724 = pneg %p176
        %p725 = pneg %p200
        %p726 = pneg %p197
        %p727 = pneg %p221
        %p728 = pneg %p218
        %p729 = pneg %p242
        %p730 = pneg %p239
        %p731 = pneg %p263
        %p732 = pneg %p260
        %p733 = pneg %p284
        %p734 = pneg %p281
        %p735 = pneg %p305
        %p736 = pneg %p302
        %p737 = pneg %p326
        %p738 = pneg %p323
        %p739 = pneg %p347
        %p740 = pneg %p344
        %p741 = pneg %p368
        %p742 = pneg %p365
        %p743 = pneg %p389
        %p744 = pneg %p386
        %p745 = pneg %p410
        %p746 = pneg %p407
        %p747 = pneg %p431
        %p748 = pneg %p428
        %p749 = pneg %p452
        %p750 = pneg %p449
        %p751 = pneg %p473
        %p752 = pneg %p470
        %p753 = pneg %p494
        %p754 = pneg %p491
        %p755 = pneg %p515
        %p756 = pneg %p512
        %p757 = pneg %p536
        %p758 = pneg %p533
        %p759 = pneg %p557
        %p760 = pneg %p554
        %p761 = pneg %p583
        %p762 = pneg %p580
        %s763 = sand.u32 %s570, 1
        %s764 = scalar_lea.sflag [#allocation3], %s763
        %s765 = sand.u32 %s570, 1
        %s766 = smul.addr %s765, 8
        %s767 = scalar_lea.vmem [#allocation2], %s766
        %p768 = scmp.lt.s32.totalorder %s38, 1
        %s769 = scalar_select %p768, %s38, 1
        %s770 = smul.addr %s769, 8
        %s771 = scalar_lea.vmem %s0, %s770
        %p772 = scmp.lt.s32.totalorder %s38, 1
        %s773 = scalar_select %p772, %s38, 1
        %s774 = smul.addr %s773, 8
        %s775 = scalar_lea.vmem %s1, %s774
        %p776 = scmp.lt.s32.totalorder %s38, 1
        %s777 = scalar_select %p776, %s38, 1
        %s778 = smul.addr %s777, 8
        %s779 = scalar_lea.vmem %s2, %s778
        %p780 = scmp.lt.s32.totalorder %s38, 1
        %s781 = scalar_select %p780, %s38, 1
        %s782 = smul.addr %s781, 8
        %s783 = scalar_lea.vmem %s3, %s782
        %v784 = vld [vmem:[%s771] sm:$0xff]
        %v785 = vld [vmem:[%s775] sm:$0xff]
        %v786 = vld [vmem:[%s779] sm:$0xff]
        %v787 = vld [vmem:[%s783] sm:$0xff]
        %vm788 = vcmask 261120
        %v789 = vsel %vm788, %v784, 0.0
        %790 = vadd.xlane.f32.xlu0 %v789
        %v791 = vpop.xlane.xlu0 %790
        %v792 = vrcp.pop 32.0
        %v793 = vmul.f32 %v791, %v792
        %v794 = vsub.f32 %v784, %v793
        %v795 = vmul.f32 %v794, %v794
        %v796 = vsel %vm788, %v795, 0.0
        %797 = vadd.xlane.f32.xlu0 %v796
        %v798 = vpop.xlane.xlu0 %797
        %v799 = vmul.f32 %v798, %v792
        %v800 = vadd.f32 %v799, 1e-06
        %v801 = vrsqrt.pop %v800
        %v802 = vmul.f32 %v794, %v801
        %v803 = vld [vmem:[%s4] sm:$0x1]
        %v805 = vlaneseq
        %v806 = vshrl.u32 %v805, 7
        %v807 = vsub.s32 0, %v806
        %v808 = vrot.slane %v803, %v807
        %v810 = vmul.f32 %v802, %v808
        %v811 = vld [vmem:[%s5] sm:$0x1]
        %v813 = vlaneseq
        %v814 = vshrl.u32 %v813, 7
        %v815 = vsub.s32 0, %v814
        %v816 = vrot.slane %v811, %v815
        %v818 = vadd.f32 %v810, %v816
        %v819 = vld [vmem:[%s6] sm:$0xff]
        %v820 = vld [vmem:[%s6 + $0x8] sm:$0xff]
        %v821 = vld [vmem:[%s6 + $0x10] sm:$0xff]
        %v822 = vld [vmem:[%s6 + $0x18] sm:$0xff]
        %v823 = vld [vmem:[%s7] sm:$0x1]
        %v825 = vlaneseq
        %v826 = vshrl.u32 %v825, 7
        %v827 = vsub.s32 0, %v826
        %v828 = vrot.slane %v823, %v827
        %v831 = vsel %vm788, %v818, 0
        %833 = vmatprep.subr.mxu0 0.0
        %834 = vmatpush1.msra.mxu0 %v819
        %835 = vmatprep.subr.mxu0 0.0
        %836 = vmatpush1.msra.mxu0 %v820
        %837 = vmatprep.subr.mxu0 0.0
        %838 = vmatpush1.msra.mxu0 %v821
        %839 = vmatprep.subr.mxu0 0.0
        %840 = vmatpush1.msra.mxu0 %v822
        %841 = vmatprep.subr.mxu0 0.0
        %842 = vmatpush1.msra.mxu0 0.0
        %843 = vmatprep.subr.mxu0 0.0
        %844 = vmatpush1.msra.mxu0 0.0
        %845 = vmatprep.subr.mxu0 0.0
        %846 = vmatpush1.msra.mxu0 0.0
        %847 = vmatprep.subr.mxu0 0.0
        %848 = vmatpush1.msra.mxu0 0.0
        %849 = vmatprep.subr.mxu0 0.0
        %850 = vmatpush1.msra.mxu0 0.0
        %851 = vmatprep.subr.mxu0 0.0
        %852 = vmatpush1.msra.mxu0 0.0
        %853 = vmatprep.subr.mxu0 0.0
        %854 = vmatpush1.msra.mxu0 0.0
        %855 = vmatprep.subr.mxu0 0.0
        %856 = vmatpush1.msra.mxu0 0.0
        %857 = vmatprep.subr.mxu0 0.0
        %858 = vmatpush1.msra.mxu0 0.0
        %859 = vmatprep.subr.mxu0 0.0
        %860 = vmatpush1.msra.mxu0 0.0
        %861 = vmatprep.subr.mxu0 0.0
        %862 = vmatpush1.msra.mxu0 0.0
        %863 = vmatprep.subr.mxu0 0.0
        %864 = vmatpush1.msra.mxu0 0.0
        %865 = vmatprep.subr.mxu0 0.0
        %866 = vmatpush1.msra.mxu0 0.0
        %867 = vmatprep.subr.mxu0 0.0
        %868 = vmatpush1.msra.mxu0 0.0
        %869 = vmatprep.subr.mxu0 0.0
        %870 = vmatpush1.msra.mxu0 0.0
        %871 = vmatprep.subr.mxu0 0.0
        %872 = vmatpush1.msra.mxu0 0.0
        %873 = vmatprep.subr.mxu0 0.0
        %874 = vmatpush1.msra.mxu0 0.0
        %875 = vmatprep.subr.mxu0 0.0
        %876 = vmatpush1.msra.mxu0 0.0
        %877 = vmatprep.subr.mxu0 0.0
        %878 = vmatpush1.msra.mxu0 0.0
        %879 = vmatprep.subr.mxu0 0.0
        %880 = vmatpush1.msra.mxu0 0.0
        %881 = vmatprep.subr.mxu0 0.0
        %882 = vmatpush1.msra.mxu0 0.0
        %883 = vmatprep.subr.mxu0 0.0
        %884 = vmatpush1.msra.mxu0 0.0
        %885 = vmatprep.subr.mxu0 0.0
        %886 = vmatpush1.msra.mxu0 0.0
        %887 = vmatprep.subr.mxu0 0.0
        %888 = vmatpush1.msra.mxu0 0.0
        %889 = vmatprep.subr.mxu0 0.0
        %890 = vmatpush1.msra.mxu0 0.0
        %891 = vmatprep.subr.mxu0 0.0
        %892 = vmatpush1.msra.mxu0 0.0
        %893 = vmatprep.subr.mxu0 0.0
        %894 = vmatpush1.msra.mxu0 0.0
        %895 = vmatprep.subr.mxu0 0.0
        %896 = vmatpush1.msra.mxu0 0.0
        %897 = vmatprep.mubr.f32.mxu0 0.0
        %898 = vmatmul.mubr.f32.gmra.mrb[0].mxu0 %v831
        %v899 = vpop.f32.mrb[0].mxu0
        %v900 = vadd.f32 %v828, %v899
        %v901 = vpop.f32.mrb[0].mxu0
        %902 = vdwg.mxu0
        %904 = vrot.lane.b32.xlu0 %v900, 96
        %v905 = vpop.permute.xlu0 %904
        %vm906 = vcmask 64512
        %v907 = vsel %vm906, %v900, 0
        %v909 = vsel %vm906, %v905, 0
        %911 = vmatprep.subr.mxu0 0.0
        %912 = vmatpush1.xpose.msra.mxu0 %v909
        %913 = vmatprep.subr.mxu0 0.0
        %914 = vmatpush1.xpose.msra.mxu0 0.0
        %915 = vmatprep.subr.mxu0 0.0
        %916 = vmatpush1.xpose.msra.mxu0 0.0
        %917 = vmatprep.subr.mxu0 0.0
        %918 = vmatpush1.xpose.msra.mxu0 0.0
        %919 = vmatprep.subr.mxu0 0.0
        %920 = vmatpush1.xpose.msra.mxu0 0.0
        %921 = vmatprep.subr.mxu0 0.0
        %922 = vmatpush1.xpose.msra.mxu0 0.0
        %923 = vmatprep.subr.mxu0 0.0
        %924 = vmatpush1.xpose.msra.mxu0 0.0
        %925 = vmatprep.subr.mxu0 0.0
        %926 = vmatpush1.xpose.msra.mxu0 0.0
        %927 = vmatprep.subr.mxu0 0.0
        %928 = vmatpush1.xpose.msra.mxu0 0.0
        %929 = vmatprep.subr.mxu0 0.0
        %930 = vmatpush1.xpose.msra.mxu0 0.0
        %931 = vmatprep.subr.mxu0 0.0
        %932 = vmatpush1.xpose.msra.mxu0 0.0
        %933 = vmatprep.subr.mxu0 0.0
        %934 = vmatpush1.xpose.msra.mxu0 0.0
        %935 = vmatprep.subr.mxu0 0.0
        %936 = vmatpush1.xpose.msra.mxu0 0.0
        %937 = vmatprep.subr.mxu0 0.0
        %938 = vmatpush1.xpose.msra.mxu0 0.0
        %939 = vmatprep.subr.mxu0 0.0
        %940 = vmatpush1.xpose.msra.mxu0 0.0
        %941 = vmatprep.subr.mxu0 0.0
        %942 = vmatpush1.xpose.msra.mxu0 0.0
        %943 = vmatprep.subr.mxu0 0.0
        %944 = vmatpush1.xpose.msra.mxu0 0.0
        %945 = vmatprep.subr.mxu0 0.0
        %946 = vmatpush1.xpose.msra.mxu0 0.0
        %947 = vmatprep.subr.mxu0 0.0
        %948 = vmatpush1.xpose.msra.mxu0 0.0
        %949 = vmatprep.subr.mxu0 0.0
        %950 = vmatpush1.xpose.msra.mxu0 0.0
        %951 = vmatprep.subr.mxu0 0.0
        %952 = vmatpush1.xpose.msra.mxu0 0.0
        %953 = vmatprep.subr.mxu0 0.0
        %954 = vmatpush1.xpose.msra.mxu0 0.0
        %955 = vmatprep.subr.mxu0 0.0
        %956 = vmatpush1.xpose.msra.mxu0 0.0
        %957 = vmatprep.subr.mxu0 0.0
        %958 = vmatpush1.xpose.msra.mxu0 0.0
        %959 = vmatprep.subr.mxu0 0.0
        %960 = vmatpush1.xpose.msra.mxu0 0.0
        %961 = vmatprep.subr.mxu0 0.0
        %962 = vmatpush1.xpose.msra.mxu0 0.0
        %963 = vmatprep.subr.mxu0 0.0
        %964 = vmatpush1.xpose.msra.mxu0 0.0
        %965 = vmatprep.subr.mxu0 0.0
        %966 = vmatpush1.xpose.msra.mxu0 0.0
        %967 = vmatprep.subr.mxu0 0.0
        %968 = vmatpush1.xpose.msra.mxu0 0.0
        %969 = vmatprep.subr.mxu0 0.0
        %970 = vmatpush1.xpose.msra.mxu0 0.0
        %971 = vmatprep.subr.mxu0 0.0
        %972 = vmatpush1.xpose.msra.mxu0 0.0
        %973 = vmatprep.subr.mxu0 0.0
        %974 = vmatpush1.xpose.msra.mxu0 0.0
        %975 = vmatprep.mubr.f32.mxu0 0.0
        %976 = vmatmul.mubr.f32.gmra.mrb[0].mxu0 %v907
        %v977 = vpop.f32.mrb[0].mxu0
        %v978 = vadd.f32 0.0, %v977
        %v979 = vpop.f32.mrb[0].mxu0
        %980 = vdwg.mxu0
        %v981 = vmul.f32 %v978, 0.35355338
        %vm982 = vcmp.gt.f32.partialorder %v787, 0.0
        %v983 = vsel %vm982, %v981, -1e+09
        %v984 = vsel %vm906, %v983, -inf
        %985 = vmax.xlane.f32.xlu0 %v984
        %v986 = vpop.xlane.xlu0 %985
        %v987 = vsub.f32 %v983, %v986
        %v988 = vmul.f32 %v987, 1.442695
        %v989 = vpow.pop %v988
        %v990 = vsel %vm906, %v989, 0.0
        %991 = vadd.xlane.f32.xlu0 %v990
        %v992 = vpop.xlane.xlu0 %991
        %v993 = vrcp.pop %v992
        %v994 = vmul.f32 %v989, %v993
        %995 = vrot.lane.b32.xlu0 %v900, 64
        %v996 = vpop.permute.xlu0 %995
        %v999 = vsel %vm906, %v994, 0
        %1001 = vmatprep.subr.mxu0 0.0
        %1002 = vmatpush1.msra.mxu0 %v996
        %1003 = vmatprep.subr.mxu0 0.0
        %1004 = vmatpush1.msra.mxu0 0.0
        %1005 = vmatprep.subr.mxu0 0.0
        %1006 = vmatpush1.msra.mxu0 0.0
        %1007 = vmatprep.subr.mxu0 0.0
        %1008 = vmatpush1.msra.mxu0 0.0
        %1009 = vmatprep.subr.mxu0 0.0
        %1010 = vmatpush1.msra.mxu0 0.0
        %1011 = vmatprep.subr.mxu0 0.0
        %1012 = vmatpush1.msra.mxu0 0.0
        %1013 = vmatprep.subr.mxu0 0.0
        %1014 = vmatpush1.msra.mxu0 0.0
        %1015 = vmatprep.subr.mxu0 0.0
        %1016 = vmatpush1.msra.mxu0 0.0
        %1017 = vmatprep.subr.mxu0 0.0
        %1018 = vmatpush1.msra.mxu0 0.0
        %1019 = vmatprep.subr.mxu0 0.0
        %1020 = vmatpush1.msra.mxu0 0.0
        %1021 = vmatprep.subr.mxu0 0.0
        %1022 = vmatpush1.msra.mxu0 0.0
        %1023 = vmatprep.subr.mxu0 0.0
        %1024 = vmatpush1.msra.mxu0 0.0
        %1025 = vmatprep.subr.mxu0 0.0
        %1026 = vmatpush1.msra.mxu0 0.0
        %1027 = vmatprep.subr.mxu0 0.0
        %1028 = vmatpush1.msra.mxu0 0.0
        %1029 = vmatprep.subr.mxu0 0.0
        %1030 = vmatpush1.msra.mxu0 0.0
        %1031 = vmatprep.subr.mxu0 0.0
        %1032 = vmatpush1.msra.mxu0 0.0
        %1033 = vmatprep.subr.mxu0 0.0
        %1034 = vmatpush1.msra.mxu0 0.0
        %1035 = vmatprep.subr.mxu0 0.0
        %1036 = vmatpush1.msra.mxu0 0.0
        %1037 = vmatprep.subr.mxu0 0.0
        %1038 = vmatpush1.msra.mxu0 0.0
        %1039 = vmatprep.subr.mxu0 0.0
        %1040 = vmatpush1.msra.mxu0 0.0
        %1041 = vmatprep.subr.mxu0 0.0
        %1042 = vmatpush1.msra.mxu0 0.0
        %1043 = vmatprep.subr.mxu0 0.0
        %1044 = vmatpush1.msra.mxu0 0.0
        %1045 = vmatprep.subr.mxu0 0.0
        %1046 = vmatpush1.msra.mxu0 0.0
        %1047 = vmatprep.subr.mxu0 0.0
        %1048 = vmatpush1.msra.mxu0 0.0
        %1049 = vmatprep.subr.mxu0 0.0
        %1050 = vmatpush1.msra.mxu0 0.0
        %1051 = vmatprep.subr.mxu0 0.0
        %1052 = vmatpush1.msra.mxu0 0.0
        %1053 = vmatprep.subr.mxu0 0.0
        %1054 = vmatpush1.msra.mxu0 0.0
        %1055 = vmatprep.subr.mxu0 0.0
        %1056 = vmatpush1.msra.mxu0 0.0
        %1057 = vmatprep.subr.mxu0 0.0
        %1058 = vmatpush1.msra.mxu0 0.0
        %1059 = vmatprep.subr.mxu0 0.0
        %1060 = vmatpush1.msra.mxu0 0.0
        %1061 = vmatprep.subr.mxu0 0.0
        %1062 = vmatpush1.msra.mxu0 0.0
        %1063 = vmatprep.subr.mxu0 0.0
        %1064 = vmatpush1.msra.mxu0 0.0
        %1065 = vmatprep.mubr.f32.mxu0 0.0
        %1066 = vmatmul.mubr.f32.gmra.mrb[0].mxu0 %v999
        %v1067 = vpop.f32.mrb[0].mxu0
        %v1068 = vadd.f32 0.0, %v1067
        %v1069 = vpop.f32.mrb[0].mxu0
        %1070 = vdwg.mxu0
        %1071 = vrot.lane.b32.xlu0 %v900, 120
        %v1072 = vpop.permute.xlu0 %1071
        %1073 = vrot.lane.b32.xlu0 %v900, 88
        %v1074 = vpop.permute.xlu0 %1073
        %v1075 = vsel %vm906, %v1072, 0
        %v1077 = vsel %vm906, %v1074, 0
        %1079 = vmatprep.subr.mxu0 0.0
        %1080 = vmatpush1.xpose.msra.mxu0 %v1077
        %1081 = vmatprep.subr.mxu0 0.0
        %1082 = vmatpush1.xpose.msra.mxu0 0.0
        %1083 = vmatprep.subr.mxu0 0.0
        %1084 = vmatpush1.xpose.msra.mxu0 0.0
        %1085 = vmatprep.subr.mxu0 0.0
        %1086 = vmatpush1.xpose.msra.mxu0 0.0
        %1087 = vmatprep.subr.mxu0 0.0
        %1088 = vmatpush1.xpose.msra.mxu0 0.0
        %1089 = vmatprep.subr.mxu0 0.0
        %1090 = vmatpush1.xpose.msra.mxu0 0.0
        %1091 = vmatprep.subr.mxu0 0.0
        %1092 = vmatpush1.xpose.msra.mxu0 0.0
        %1093 = vmatprep.subr.mxu0 0.0
        %1094 = vmatpush1.xpose.msra.mxu0 0.0
        %1095 = vmatprep.subr.mxu0 0.0
        %1096 = vmatpush1.xpose.msra.mxu0 0.0
        %1097 = vmatprep.subr.mxu0 0.0
        %1098 = vmatpush1.xpose.msra.mxu0 0.0
        %1099 = vmatprep.subr.mxu0 0.0
        %1100 = vmatpush1.xpose.msra.mxu0 0.0
        %1101 = vmatprep.subr.mxu0 0.0
        %1102 = vmatpush1.xpose.msra.mxu0 0.0
        %1103 = vmatprep.subr.mxu0 0.0
        %1104 = vmatpush1.xpose.msra.mxu0 0.0
        %1105 = vmatprep.subr.mxu0 0.0
        %1106 = vmatpush1.xpose.msra.mxu0 0.0
        %1107 = vmatprep.subr.mxu0 0.0
        %1108 = vmatpush1.xpose.msra.mxu0 0.0
        %1109 = vmatprep.subr.mxu0 0.0
        %1110 = vmatpush1.xpose.msra.mxu0 0.0
        %1111 = vmatprep.subr.mxu0 0.0
        %1112 = vmatpush1.xpose.msra.mxu0 0.0
        %1113 = vmatprep.subr.mxu0 0.0
        %1114 = vmatpush1.xpose.msra.mxu0 0.0
        %1115 = vmatprep.subr.mxu0 0.0
        %1116 = vmatpush1.xpose.msra.mxu0 0.0
        %1117 = vmatprep.subr.mxu0 0.0
        %1118 = vmatpush1.xpose.msra.mxu0 0.0
        %1119 = vmatprep.subr.mxu0 0.0
        %1120 = vmatpush1.xpose.msra.mxu0 0.0
        %1121 = vmatprep.subr.mxu0 0.0
        %1122 = vmatpush1.xpose.msra.mxu0 0.0
        %1123 = vmatprep.subr.mxu0 0.0
        %1124 = vmatpush1.xpose.msra.mxu0 0.0
        %1125 = vmatprep.subr.mxu0 0.0
        %1126 = vmatpush1.xpose.msra.mxu0 0.0
        %1127 = vmatprep.subr.mxu0 0.0
        %1128 = vmatpush1.xpose.msra.mxu0 0.0
        %1129 = vmatprep.subr.mxu0 0.0
        %1130 = vmatpush1.xpose.msra.mxu0 0.0
        %1131 = vmatprep.subr.mxu0 0.0
        %1132 = vmatpush1.xpose.msra.mxu0 0.0
        %1133 = vmatprep.subr.mxu0 0.0
        %1134 = vmatpush1.xpose.msra.mxu0 0.0
        %1135 = vmatprep.subr.mxu0 0.0
        %1136 = vmatpush1.xpose.msra.mxu0 0.0
        %1137 = vmatprep.subr.mxu0 0.0
        %1138 = vmatpush1.xpose.msra.mxu0 0.0
        %1139 = vmatprep.subr.mxu0 0.0
        %1140 = vmatpush1.xpose.msra.mxu0 0.0
        %1141 = vmatprep.subr.mxu0 0.0
        %1142 = vmatpush1.xpose.msra.mxu0 0.0
        %1143 = vmatprep.mubr.f32.mxu0 0.0
        %1144 = vmatmul.mubr.f32.gmra.mrb[0].mxu0 %v1075
        %v1145 = vpop.f32.mrb[0].mxu0
        %v1146 = vadd.f32 0.0, %v1145
        %v1147 = vpop.f32.mrb[0].mxu0
        %1148 = vdwg.mxu0
        %v1149 = vmul.f32 %v1146, 0.35355338
        %v1150 = vsel %vm982, %v1149, -1e+09
        %v1151 = vsel %vm906, %v1150, -inf
        %1152 = vmax.xlane.f32.xlu0 %v1151
        %v1153 = vpop.xlane.xlu0 %1152
        %v1154 = vsub.f32 %v1150, %v1153
        %v1155 = vmul.f32 %v1154, 1.442695
        %v1156 = vpow.pop %v1155
        %v1157 = vsel %vm906, %v1156, 0.0
        %1158 = vadd.xlane.f32.xlu0 %v1157
        %v1159 = vpop.xlane.xlu0 %1158
        %v1160 = vrcp.pop %v1159
        %v1161 = vmul.f32 %v1156, %v1160
        %1162 = vrot.lane.b32.xlu0 %v900, 56
        %v1163 = vpop.permute.xlu0 %1162
        %v1166 = vsel %vm906, %v1161, 0
        %1168 = vmatprep.subr.mxu0 0.0
        %1169 = vmatpush1.msra.mxu0 %v1163
        %1170 = vmatprep.subr.mxu0 0.0
        %1171 = vmatpush1.msra.mxu0 0.0
        %1172 = vmatprep.subr.mxu0 0.0
        %1173 = vmatpush1.msra.mxu0 0.0
        %1174 = vmatprep.subr.mxu0 0.0
        %1175 = vmatpush1.msra.mxu0 0.0
        %1176 = vmatprep.subr.mxu0 0.0
        %1177 = vmatpush1.msra.mxu0 0.0
        %1178 = vmatprep.subr.mxu0 0.0
        %1179 = vmatpush1.msra.mxu0 0.0
        %1180 = vmatprep.subr.mxu0 0.0
        %1181 = vmatpush1.msra.mxu0 0.0
        %1182 = vmatprep.subr.mxu0 0.0
        %1183 = vmatpush1.msra.mxu0 0.0
        %1184 = vmatprep.subr.mxu0 0.0
        %1185 = vmatpush1.msra.mxu0 0.0
        %1186 = vmatprep.subr.mxu0 0.0
        %1187 = vmatpush1.msra.mxu0 0.0
        %1188 = vmatprep.subr.mxu0 0.0
        %1189 = vmatpush1.msra.mxu0 0.0
        %1190 = vmatprep.subr.mxu0 0.0
        %1191 = vmatpush1.msra.mxu0 0.0
        %1192 = vmatprep.subr.mxu0 0.0
        %1193 = vmatpush1.msra.mxu0 0.0
        %1194 = vmatprep.subr.mxu0 0.0
        %1195 = vmatpush1.msra.mxu0 0.0
        %1196 = vmatprep.subr.mxu0 0.0
        %1197 = vmatpush1.msra.mxu0 0.0
        %1198 = vmatprep.subr.mxu0 0.0
        %1199 = vmatpush1.msra.mxu0 0.0
        %1200 = vmatprep.subr.mxu0 0.0
        %1201 = vmatpush1.msra.mxu0 0.0
        %1202 = vmatprep.subr.mxu0 0.0
        %1203 = vmatpush1.msra.mxu0 0.0
        %1204 = vmatprep.subr.mxu0 0.0
        %1205 = vmatpush1.msra.mxu0 0.0
        %1206 = vmatprep.subr.mxu0 0.0
        %1207 = vmatpush1.msra.mxu0 0.0
        %1208 = vmatprep.subr.mxu0 0.0
        %1209 = vmatpush1.msra.mxu0 0.0
        %1210 = vmatprep.subr.mxu0 0.0
        %1211 = vmatpush1.msra.mxu0 0.0
        %1212 = vmatprep.subr.mxu0 0.0
        %1213 = vmatpush1.msra.mxu0 0.0
        %1214 = vmatprep.subr.mxu0 0.0
        %1215 = vmatpush1.msra.mxu0 0.0
        %1216 = vmatprep.subr.mxu0 0.0
        %1217 = vmatpush1.msra.mxu0 0.0
        %1218 = vmatprep.subr.mxu0 0.0
        %1219 = vmatpush1.msra.mxu0 0.0
        %1220 = vmatprep.subr.mxu0 0.0
        %1221 = vmatpush1.msra.mxu0 0.0
        %1222 = vmatprep.subr.mxu0 0.0
        %1223 = vmatpush1.msra.mxu0 0.0
        %1224 = vmatprep.subr.mxu0 0.0
        %1225 = vmatpush1.msra.mxu0 0.0
        %1226 = vmatprep.subr.mxu0 0.0
        %1227 = vmatpush1.msra.mxu0 0.0
        %1228 = vmatprep.subr.mxu0 0.0
        %1229 = vmatpush1.msra.mxu0 0.0
        %1230 = vmatprep.subr.mxu0 0.0
        %1231 = vmatpush1.msra.mxu0 0.0
        %1232 = vmatprep.mubr.f32.mxu0 0.0
        %1233 = vmatmul.mubr.f32.gmra.mrb[0].mxu0 %v1166
        %v1234 = vpop.f32.mrb[0].mxu0
        %v1235 = vadd.f32 0.0, %v1234
        %v1236 = vpop.f32.mrb[0].mxu0
        %1237 = vdwg.mxu0
        %1238 = vrot.lane.b32.xlu0 %v900, 112
        %v1239 = vpop.permute.xlu0 %1238
        %1240 = vrot.lane.b32.xlu0 %v900, 80
        %v1241 = vpop.permute.xlu0 %1240
        %v1242 = vsel %vm906, %v1239, 0
        %v1244 = vsel %vm906, %v1241, 0
        %1246 = vmatprep.subr.mxu0 0.0
        %1247 = vmatpush1.xpose.msra.mxu0 %v1244
        %1248 = vmatprep.subr.mxu0 0.0
        %1249 = vmatpush1.xpose.msra.mxu0 0.0
        %1250 = vmatprep.subr.mxu0 0.0
        %1251 = vmatpush1.xpose.msra.mxu0 0.0
        %1252 = vmatprep.subr.mxu0 0.0
        %1253 = vmatpush1.xpose.msra.mxu0 0.0
        %1254 = vmatprep.subr.mxu0 0.0
        %1255 = vmatpush1.xpose.msra.mxu0 0.0
        %1256 = vmatprep.subr.mxu0 0.0
        %1257 = vmatpush1.xpose.msra.mxu0 0.0
        %1258 = vmatprep.subr.mxu0 0.0
        %1259 = vmatpush1.xpose.msra.mxu0 0.0
        %1260 = vmatprep.subr.mxu0 0.0
        %1261 = vmatpush1.xpose.msra.mxu0 0.0
        %1262 = vmatprep.subr.mxu0 0.0
        %1263 = vmatpush1.xpose.msra.mxu0 0.0
        %1264 = vmatprep.subr.mxu0 0.0
        %1265 = vmatpush1.xpose.msra.mxu0 0.0
        %1266 = vmatprep.subr.mxu0 0.0
        %1267 = vmatpush1.xpose.msra.mxu0 0.0
        %1268 = vmatprep.subr.mxu0 0.0
        %1269 = vmatpush1.xpose.msra.mxu0 0.0
        %1270 = vmatprep.subr.mxu0 0.0
        %1271 = vmatpush1.xpose.msra.mxu0 0.0
        %1272 = vmatprep.subr.mxu0 0.0
        %1273 = vmatpush1.xpose.msra.mxu0 0.0
        %1274 = vmatprep.subr.mxu0 0.0
        %1275 = vmatpush1.xpose.msra.mxu0 0.0
        %1276 = vmatprep.subr.mxu0 0.0
        %1277 = vmatpush1.xpose.msra.mxu0 0.0
        %1278 = vmatprep.subr.mxu0 0.0
        %1279 = vmatpush1.xpose.msra.mxu0 0.0
        %1280 = vmatprep.subr.mxu0 0.0
        %1281 = vmatpush1.xpose.msra.mxu0 0.0
        %1282 = vmatprep.subr.mxu0 0.0
        %1283 = vmatpush1.xpose.msra.mxu0 0.0
        %1284 = vmatprep.subr.mxu0 0.0
        %1285 = vmatpush1.xpose.msra.mxu0 0.0
        %1286 = vmatprep.subr.mxu0 0.0
        %1287 = vmatpush1.xpose.msra.mxu0 0.0
        %1288 = vmatprep.subr.mxu0 0.0
        %1289 = vmatpush1.xpose.msra.mxu0 0.0
        %1290 = vmatprep.subr.mxu0 0.0
        %1291 = vmatpush1.xpose.msra.mxu0 0.0
        %1292 = vmatprep.subr.mxu0 0.0
        %1293 = vmatpush1.xpose.msra.mxu0 0.0
        %1294 = vmatprep.subr.mxu0 0.0
        %1295 = vmatpush1.xpose.msra.mxu0 0.0
        %1296 = vmatprep.subr.mxu0 0.0
        %1297 = vmatpush1.xpose.msra.mxu0 0.0
        %1298 = vmatprep.subr.mxu0 0.0
        %1299 = vmatpush1.xpose.msra.mxu0 0.0
        %1300 = vmatprep.subr.mxu0 0.0
        %1301 = vmatpush1.xpose.msra.mxu0 0.0
        %1302 = vmatprep.subr.mxu0 0.0
        %1303 = vmatpush1.xpose.msra.mxu0 0.0
        %1304 = vmatprep.subr.mxu0 0.0
        %1305 = vmatpush1.xpose.msra.mxu0 0.0
        %1306 = vmatprep.subr.mxu0 0.0
        %1307 = vmatpush1.xpose.msra.mxu0 0.0
        %1308 = vmatprep.subr.mxu0 0.0
        %1309 = vmatpush1.xpose.msra.mxu0 0.0
        %1310 = vmatprep.mubr.f32.mxu0 0.0
        %1311 = vmatmul.mubr.f32.gmra.mrb[0].mxu0 %v1242
        %v1312 = vpop.f32.mrb[0].mxu0
        %v1313 = vadd.f32 0.0, %v1312
        %v1314 = vpop.f32.mrb[0].mxu0
        %1315 = vdwg.mxu0
        %v1316 = vmul.f32 %v1313, 0.35355338
        %v1317 = vsel %vm982, %v1316, -1e+09
        %v1318 = vsel %vm906, %v1317, -inf
        %1319 = vmax.xlane.f32.xlu0 %v1318
        %v1320 = vpop.xlane.xlu0 %1319
        %v1321 = vsub.f32 %v1317, %v1320
        %v1322 = vmul.f32 %v1321, 1.442695
        %v1323 = vpow.pop %v1322
        %v1324 = vsel %vm906, %v1323, 0.0
        %1325 = vadd.xlane.f32.xlu0 %v1324
        %v1326 = vpop.xlane.xlu0 %1325
        %v1327 = vrcp.pop %v1326
        %v1328 = vmul.f32 %v1323, %v1327
        %1329 = vrot.lane.b32.xlu0 %v900, 48
        %v1330 = vpop.permute.xlu0 %1329
        %v1333 = vsel %vm906, %v1328, 0
        %1335 = vmatprep.subr.mxu0 0.0
        %1336 = vmatpush1.msra.mxu0 %v1330
        %1337 = vmatprep.subr.mxu0 0.0
        %1338 = vmatpush1.msra.mxu0 0.0
        %1339 = vmatprep.subr.mxu0 0.0
        %1340 = vmatpush1.msra.mxu0 0.0
        %1341 = vmatprep.subr.mxu0 0.0
        %1342 = vmatpush1.msra.mxu0 0.0
        %1343 = vmatprep.subr.mxu0 0.0
        %1344 = vmatpush1.msra.mxu0 0.0
        %1345 = vmatprep.subr.mxu0 0.0
        %1346 = vmatpush1.msra.mxu0 0.0
        %1347 = vmatprep.subr.mxu0 0.0
        %1348 = vmatpush1.msra.mxu0 0.0
        %1349 = vmatprep.subr.mxu0 0.0
        %1350 = vmatpush1.msra.mxu0 0.0
        %1351 = vmatprep.subr.mxu0 0.0
        %1352 = vmatpush1.msra.mxu0 0.0
        %1353 = vmatprep.subr.mxu0 0.0
        %1354 = vmatpush1.msra.mxu0 0.0
        %1355 = vmatprep.subr.mxu0 0.0
        %1356 = vmatpush1.msra.mxu0 0.0
        %1357 = vmatprep.subr.mxu0 0.0
        %1358 = vmatpush1.msra.mxu0 0.0
        %1359 = vmatprep.subr.mxu0 0.0
        %1360 = vmatpush1.msra.mxu0 0.0
        %1361 = vmatprep.subr.mxu0 0.0
        %1362 = vmatpush1.msra.mxu0 0.0
        %1363 = vmatprep.subr.mxu0 0.0
        %1364 = vmatpush1.msra.mxu0 0.0
        %1365 = vmatprep.subr.mxu0 0.0
        %1366 = vmatpush1.msra.mxu0 0.0
        %1367 = vmatprep.subr.mxu0 0.0
        %1368 = vmatpush1.msra.mxu0 0.0
        %1369 = vmatprep.subr.mxu0 0.0
        %1370 = vmatpush1.msra.mxu0 0.0
        %1371 = vmatprep.subr.mxu0 0.0
        %1372 = vmatpush1.msra.mxu0 0.0
        %1373 = vmatprep.subr.mxu0 0.0
        %1374 = vmatpush1.msra.mxu0 0.0
        %1375 = vmatprep.subr.mxu0 0.0
        %1376 = vmatpush1.msra.mxu0 0.0
        %1377 = vmatprep.subr.mxu0 0.0
        %1378 = vmatpush1.msra.mxu0 0.0
        %1379 = vmatprep.subr.mxu0 0.0
        %1380 = vmatpush1.msra.mxu0 0.0
        %1381 = vmatprep.subr.mxu0 0.0
        %1382 = vmatpush1.msra.mxu0 0.0
        %1383 = vmatprep.subr.mxu0 0.0
        %1384 = vmatpush1.msra.mxu0 0.0
        %1385 = vmatprep.subr.mxu0 0.0
        %1386 = vmatpush1.msra.mxu0 0.0
        %1387 = vmatprep.subr.mxu0 0.0
        %1388 = vmatpush1.msra.mxu0 0.0
        %1389 = vmatprep.subr.mxu0 0.0
        %1390 = vmatpush1.msra.mxu0 0.0
        %1391 = vmatprep.subr.mxu0 0.0
        %1392 = vmatpush1.msra.mxu0 0.0
        %1393 = vmatprep.subr.mxu0 0.0
        %1394 = vmatpush1.msra.mxu0 0.0
        %1395 = vmatprep.subr.mxu0 0.0
        %1396 = vmatpush1.msra.mxu0 0.0
        %1397 = vmatprep.subr.mxu0 0.0
        %1398 = vmatpush1.msra.mxu0 0.0
        %1399 = vmatprep.mubr.f32.mxu0 0.0
        %1400 = vmatmul.mubr.f32.gmra.mrb[0].mxu0 %v1333
        %v1401 = vpop.f32.mrb[0].mxu0
        %v1402 = vadd.f32 0.0, %v1401
        %v1403 = vpop.f32.mrb[0].mxu0
        %1404 = vdwg.mxu0
        %1405 = vrot.lane.b32.xlu0 %v900, 104
        %v1406 = vpop.permute.xlu0 %1405
        %1407 = vrot.lane.b32.xlu0 %v900, 72
        %v1408 = vpop.permute.xlu0 %1407
        %v1409 = vsel %vm906, %v1406, 0
        %v1411 = vsel %vm906, %v1408, 0
        %1413 = vmatprep.subr.mxu0 0.0
        %1414 = vmatpush1.xpose.msra.mxu0 %v1411
        %1415 = vmatprep.subr.mxu0 0.0
        %1416 = vmatpush1.xpose.msra.mxu0 0.0
        %1417 = vmatprep.subr.mxu0 0.0
        %1418 = vmatpush1.xpose.msra.mxu0 0.0
        %1419 = vmatprep.subr.mxu0 0.0
        %1420 = vmatpush1.xpose.msra.mxu0 0.0
        %1421 = vmatprep.subr.mxu0 0.0
        %1422 = vmatpush1.xpose.msra.mxu0 0.0
        %1423 = vmatprep.subr.mxu0 0.0
        %1424 = vmatpush1.xpose.msra.mxu0 0.0
        %1425 = vmatprep.subr.mxu0 0.0
        %1426 = vmatpush1.xpose.msra.mxu0 0.0
        %1427 = vmatprep.subr.mxu0 0.0
        %1428 = vmatpush1.xpose.msra.mxu0 0.0
        %1429 = vmatprep.subr.mxu0 0.0
        %1430 = vmatpush1.xpose.msra.mxu0 0.0
        %1431 = vmatprep.subr.mxu0 0.0
        %1432 = vmatpush1.xpose.msra.mxu0 0.0
        %1433 = vmatprep.subr.mxu0 0.0
        %1434 = vmatpush1.xpose.msra.mxu0 0.0
        %1435 = vmatprep.subr.mxu0 0.0
        %1436 = vmatpush1.xpose.msra.mxu0 0.0
        %1437 = vmatprep.subr.mxu0 0.0
        %1438 = vmatpush1.xpose.msra.mxu0 0.0
        %1439 = vmatprep.subr.mxu0 0.0
        %1440 = vmatpush1.xpose.msra.mxu0 0.0
        %1441 = vmatprep.subr.mxu0 0.0
        %1442 = vmatpush1.xpose.msra.mxu0 0.0
        %1443 = vmatprep.subr.mxu0 0.0
        %1444 = vmatpush1.xpose.msra.mxu0 0.0
        %1445 = vmatprep.subr.mxu0 0.0
        %1446 = vmatpush1.xpose.msra.mxu0 0.0
        %1447 = vmatprep.subr.mxu0 0.0
        %1448 = vmatpush1.xpose.msra.mxu0 0.0
        %1449 = vmatprep.subr.mxu0 0.0
        %1450 = vmatpush1.xpose.msra.mxu0 0.0
        %1451 = vmatprep.subr.mxu0 0.0
        %1452 = vmatpush1.xpose.msra.mxu0 0.0
        %1453 = vmatprep.subr.mxu0 0.0
        %1454 = vmatpush1.xpose.msra.mxu0 0.0
        %1455 = vmatprep.subr.mxu0 0.0
        %1456 = vmatpush1.xpose.msra.mxu0 0.0
        %1457 = vmatprep.subr.mxu0 0.0
        %1458 = vmatpush1.xpose.msra.mxu0 0.0
        %1459 = vmatprep.subr.mxu0 0.0
        %1460 = vmatpush1.xpose.msra.mxu0 0.0
        %1461 = vmatprep.subr.mxu0 0.0
        %1462 = vmatpush1.xpose.msra.mxu0 0.0
        %1463 = vmatprep.subr.mxu0 0.0
        %1464 = vmatpush1.xpose.msra.mxu0 0.0
        %1465 = vmatprep.subr.mxu0 0.0
        %1466 = vmatpush1.xpose.msra.mxu0 0.0
        %1467 = vmatprep.subr.mxu0 0.0
        %1468 = vmatpush1.xpose.msra.mxu0 0.0
        %1469 = vmatprep.subr.mxu0 0.0
        %1470 = vmatpush1.xpose.msra.mxu0 0.0
        %1471 = vmatprep.subr.mxu0 0.0
        %1472 = vmatpush1.xpose.msra.mxu0 0.0
        %1473 = vmatprep.subr.mxu0 0.0
        %1474 = vmatpush1.xpose.msra.mxu0 0.0
        %1475 = vmatprep.subr.mxu0 0.0
        %1476 = vmatpush1.xpose.msra.mxu0 0.0
        %1477 = vmatprep.mubr.f32.mxu0 0.0
        %1478 = vmatmul.mubr.f32.gmra.mrb[0].mxu0 %v1409
        %v1479 = vpop.f32.mrb[0].mxu0
        %v1480 = vadd.f32 0.0, %v1479
        %v1481 = vpop.f32.mrb[0].mxu0
        %1482 = vdwg.mxu0
        %v1483 = vmul.f32 %v1480, 0.35355338
        %v1484 = vsel %vm982, %v1483, -1e+09
        %v1485 = vsel %vm906, %v1484, -inf
        %1486 = vmax.xlane.f32.xlu0 %v1485
        %v1487 = vpop.xlane.xlu0 %1486
        %v1488 = vsub.f32 %v1484, %v1487
        %v1489 = vmul.f32 %v1488, 1.442695
        %v1490 = vpow.pop %v1489
        %v1491 = vsel %vm906, %v1490, 0.0
        %1492 = vadd.xlane.f32.xlu0 %v1491
        %v1493 = vpop.xlane.xlu0 %1492
        %v1494 = vrcp.pop %v1493
        %v1495 = vmul.f32 %v1490, %v1494
        %1496 = vrot.lane.b32.xlu0 %v900, 40
        %v1497 = vpop.permute.xlu0 %1496
        %v1500 = vsel %vm906, %v1495, 0
        %1502 = vmatprep.subr.mxu0 0.0
        %1503 = vmatpush1.msra.mxu0 %v1497
        %1504 = vmatprep.subr.mxu0 0.0
        %1505 = vmatpush1.msra.mxu0 0.0
        %1506 = vmatprep.subr.mxu0 0.0
        %1507 = vmatpush1.msra.mxu0 0.0
        %1508 = vmatprep.subr.mxu0 0.0
        %1509 = vmatpush1.msra.mxu0 0.0
        %1510 = vmatprep.subr.mxu0 0.0
        %1511 = vmatpush1.msra.mxu0 0.0
        %1512 = vmatprep.subr.mxu0 0.0
        %1513 = vmatpush1.msra.mxu0 0.0
        %1514 = vmatprep.subr.mxu0 0.0
        %1515 = vmatpush1.msra.mxu0 0.0
        %1516 = vmatprep.subr.mxu0 0.0
        %1517 = vmatpush1.msra.mxu0 0.0
        %1518 = vmatprep.subr.mxu0 0.0
        %1519 = vmatpush1.msra.mxu0 0.0
        %1520 = vmatprep.subr.mxu0 0.0
        %1521 = vmatpush1.msra.mxu0 0.0
        %1522 = vmatprep.subr.mxu0 0.0
        %1523 = vmatpush1.msra.mxu0 0.0
        %1524 = vmatprep.subr.mxu0 0.0
        %1525 = vmatpush1.msra.mxu0 0.0
        %1526 = vmatprep.subr.mxu0 0.0
        %1527 = vmatpush1.msra.mxu0 0.0
        %1528 = vmatprep.subr.mxu0 0.0
        %1529 = vmatpush1.msra.mxu0 0.0
        %1530 = vmatprep.subr.mxu0 0.0
        %1531 = vmatpush1.msra.mxu0 0.0
        %1532 = vmatprep.subr.mxu0 0.0
        %1533 = vmatpush1.msra.mxu0 0.0
        %1534 = vmatprep.subr.mxu0 0.0
        %1535 = vmatpush1.msra.mxu0 0.0
        %1536 = vmatprep.subr.mxu0 0.0
        %1537 = vmatpush1.msra.mxu0 0.0
        %1538 = vmatprep.subr.mxu0 0.0
        %1539 = vmatpush1.msra.mxu0 0.0
        %1540 = vmatprep.subr.mxu0 0.0
        %1541 = vmatpush1.msra.mxu0 0.0
        %1542 = vmatprep.subr.mxu0 0.0
        %1543 = vmatpush1.msra.mxu0 0.0
        %1544 = vmatprep.subr.mxu0 0.0
        %1545 = vmatpush1.msra.mxu0 0.0
        %1546 = vmatprep.subr.mxu0 0.0
        %1547 = vmatpush1.msra.mxu0 0.0
        %1548 = vmatprep.subr.mxu0 0.0
        %1549 = vmatpush1.msra.mxu0 0.0
        %1550 = vmatprep.subr.mxu0 0.0
        %1551 = vmatpush1.msra.mxu0 0.0
        %1552 = vmatprep.subr.mxu0 0.0
        %1553 = vmatpush1.msra.mxu0 0.0
        %1554 = vmatprep.subr.mxu0 0.0
        %1555 = vmatpush1.msra.mxu0 0.0
        %1556 = vmatprep.subr.mxu0 0.0
        %1557 = vmatpush1.msra.mxu0 0.0
        %1558 = vmatprep.subr.mxu0 0.0
        %1559 = vmatpush1.msra.mxu0 0.0
        %1560 = vmatprep.subr.mxu0 0.0
        %1561 = vmatpush1.msra.mxu0 0.0
        %1562 = vmatprep.subr.mxu0 0.0
        %1563 = vmatpush1.msra.mxu0 0.0
        %1564 = vmatprep.subr.mxu0 0.0
        %1565 = vmatpush1.msra.mxu0 0.0
        %1566 = vmatprep.mubr.f32.mxu0 0.0
        %1567 = vmatmul.mubr.f32.gmra.mrb[0].mxu0 %v1500
        %v1568 = vpop.f32.mrb[0].mxu0
        %v1569 = vadd.f32 0.0, %v1568
        %v1570 = vpop.f32.mrb[0].mxu0
        %1571 = vdwg.mxu0
        %1573 = vrot.lane.b32.xlu0 %v1235, 8
        %v1574 = vpop.permute.xlu0 %1573
        %1577 = vrot.lane.b32.xlu0 %v1402, 16
        %v1578 = vpop.permute.xlu0 %1577
        %1581 = vrot.lane.b32.xlu0 %v1569, 24
        %v1582 = vpop.permute.xlu0 %1581
        %v1584 = vsel %vm906, %v1068, %v1574
        %vm1585 = vcmask 130048
        %v1586 = vsel %vm1585, %v1584, %v1578
        %vm1587 = vcmask 195584
        %v1588 = vsel %vm1587, %v1586, %v1582
        %v1589 = vld [vmem:[%s8] sm:$0xff]
        %v1590 = vld [vmem:[%s8 + $0x8] sm:$0xff]
        %v1591 = vld [vmem:[%s8 + $0x10] sm:$0xff]
        %v1592 = vld [vmem:[%s8 + $0x18] sm:$0xff]
        %v1593 = vld [vmem:[%s9] sm:$0x1]
        %v1595 = vlaneseq
        %v1596 = vshrl.u32 %v1595, 7
        %v1597 = vsub.s32 0, %v1596
        %v1598 = vrot.slane %v1593, %v1597
        %v1601 = vsel %vm788, %v1588, 0
        %1603 = vmatprep.subr.mxu0 0.0
        %1604 = vmatpush1.msra.mxu0 %v1589
        %1605 = vmatprep.subr.mxu0 0.0
        %1606 = vmatpush1.msra.mxu0 %v1590
        %1607 = vmatprep.subr.mxu0 0.0
        %1608 = vmatpush1.msra.mxu0 %v1591
        %1609 = vmatprep.subr.mxu0 0.0
        %1610 = vmatpush1.msra.mxu0 %v1592
        %1611 = vmatprep.subr.mxu0 0.0
        %1612 = vmatpush1.msra.mxu0 0.0
        %1613 = vmatprep.subr.mxu0 0.0
        %1614 = vmatpush1.msra.mxu0 0.0
        %1615 = vmatprep.subr.mxu0 0.0
        %1616 = vmatpush1.msra.mxu0 0.0
        %1617 = vmatprep.subr.mxu0 0.0
        %1618 = vmatpush1.msra.mxu0 0.0
        %1619 = vmatprep.subr.mxu0 0.0
        %1620 = vmatpush1.msra.mxu0 0.0
        %1621 = vmatprep.subr.mxu0 0.0
        %1622 = vmatpush1.msra.mxu0 0.0
        %1623 = vmatprep.subr.mxu0 0.0
        %1624 = vmatpush1.msra.mxu0 0.0
        %1625 = vmatprep.subr.mxu0 0.0
        %1626 = vmatpush1.msra.mxu0 0.0
        %1627 = vmatprep.subr.mxu0 0.0
        %1628 = vmatpush1.msra.mxu0 0.0
        %1629 = vmatprep.subr.mxu0 0.0
        %1630 = vmatpush1.msra.mxu0 0.0
        %1631 = vmatprep.subr.mxu0 0.0
        %1632 = vmatpush1.msra.mxu0 0.0
        %1633 = vmatprep.subr.mxu0 0.0
        %1634 = vmatpush1.msra.mxu0 0.0
        %1635 = vmatprep.subr.mxu0 0.0
        %1636 = vmatpush1.msra.mxu0 0.0
        %1637 = vmatprep.subr.mxu0 0.0
        %1638 = vmatpush1.msra.mxu0 0.0
        %1639 = vmatprep.subr.mxu0 0.0
        %1640 = vmatpush1.msra.mxu0 0.0
        %1641 = vmatprep.subr.mxu0 0.0
        %1642 = vmatpush1.msra.mxu0 0.0
        %1643 = vmatprep.subr.mxu0 0.0
        %1644 = vmatpush1.msra.mxu0 0.0
        %1645 = vmatprep.subr.mxu0 0.0
        %1646 = vmatpush1.msra.mxu0 0.0
        %1647 = vmatprep.subr.mxu0 0.0
        %1648 = vmatpush1.msra.mxu0 0.0
        %1649 = vmatprep.subr.mxu0 0.0
        %1650 = vmatpush1.msra.mxu0 0.0
        %1651 = vmatprep.subr.mxu0 0.0
        %1652 = vmatpush1.msra.mxu0 0.0
        %1653 = vmatprep.subr.mxu0 0.0
        %1654 = vmatpush1.msra.mxu0 0.0
        %1655 = vmatprep.subr.mxu0 0.0
        %1656 = vmatpush1.msra.mxu0 0.0
        %1657 = vmatprep.subr.mxu0 0.0
        %1658 = vmatpush1.msra.mxu0 0.0
        %1659 = vmatprep.subr.mxu0 0.0
        %1660 = vmatpush1.msra.mxu0 0.0
        %1661 = vmatprep.subr.mxu0 0.0
        %1662 = vmatpush1.msra.mxu0 0.0
        %1663 = vmatprep.subr.mxu0 0.0
        %1664 = vmatpush1.msra.mxu0 0.0
        %1665 = vmatprep.subr.mxu0 0.0
        %1666 = vmatpush1.msra.mxu0 0.0
        %1667 = vmatprep.mubr.f32.mxu0 0.0
        %1668 = vmatmul.mubr.f32.gmra.mrb[0].mxu0 %v1601
        %v1669 = vpop.f32.mrb[0].mxu0
        %v1670 = vadd.f32 %v1598, %v1669
        %v1671 = vpop.f32.mrb[0].mxu0
        %1672 = vdwg.mxu0
        %v1673 = vadd.f32 %v784, %v1670
        %v1674 = vsel %vm788, %v1673, 0.0
        %1675 = vadd.xlane.f32.xlu0 %v1674
        %v1676 = vpop.xlane.xlu0 %1675
        %v1677 = vmul.f32 %v1676, %v792
        %v1678 = vsub.f32 %v1673, %v1677
        %v1679 = vmul.f32 %v1678, %v1678
        %v1680 = vsel %vm788, %v1679, 0.0
        %1681 = vadd.xlane.f32.xlu0 %v1680
        %v1682 = vpop.xlane.xlu0 %1681
        %v1683 = vmul.f32 %v1682, %v792
        %v1684 = vadd.f32 %v1683, 1e-06
        %v1685 = vrsqrt.pop %v1684
        %v1686 = vmul.f32 %v1678, %v1685
        %v1687 = vld [vmem:[%s10] sm:$0x1]
        %v1689 = vlaneseq
        %v1690 = vshrl.u32 %v1689, 7
        %v1691 = vsub.s32 0, %v1690
        %v1692 = vrot.slane %v1687, %v1691
        %v1694 = vmul.f32 %v1686, %v1692
        %v1695 = vld [vmem:[%s11] sm:$0x1]
        %v1697 = vlaneseq
        %v1698 = vshrl.u32 %v1697, 7
        %v1699 = vsub.s32 0, %v1698
        %v1700 = vrot.slane %v1695, %v1699
        %v1702 = vadd.f32 %v1694, %v1700
        %v1703 = vld [vmem:[%s12] sm:$0xff]
        %v1704 = vld [vmem:[%s12 + $0x8] sm:$0xff]
        %v1705 = vld [vmem:[%s12 + $0x10] sm:$0xff]
        %v1706 = vld [vmem:[%s12 + $0x18] sm:$0xff]
        %v1707 = vld [vmem:[%s13] sm:$0x1]
        %v1709 = vlaneseq
        %v1710 = vshrl.u32 %v1709, 7
        %v1711 = vsub.s32 0, %v1710
        %v1712 = vrot.slane %v1707, %v1711
        %v1715 = vsel %vm788, %v1702, 0
        %1717 = vmatprep.subr.mxu0 0.0
        %1718 = vmatpush1.msra.mxu0 %v1703
        %1719 = vmatprep.subr.mxu0 0.0
        %1720 = vmatpush1.msra.mxu0 %v1704
        %1721 = vmatprep.subr.mxu0 0.0
        %1722 = vmatpush1.msra.mxu0 %v1705
        %1723 = vmatprep.subr.mxu0 0.0
        %1724 = vmatpush1.msra.mxu0 %v1706
        %1725 = vmatprep.subr.mxu0 0.0
        %1726 = vmatpush1.msra.mxu0 0.0
        %1727 = vmatprep.subr.mxu0 0.0
        %1728 = vmatpush1.msra.mxu0 0.0
        %1729 = vmatprep.subr.mxu0 0.0
        %1730 = vmatpush1.msra.mxu0 0.0
        %1731 = vmatprep.subr.mxu0 0.0
        %1732 = vmatpush1.msra.mxu0 0.0
        %1733 = vmatprep.subr.mxu0 0.0
        %1734 = vmatpush1.msra.mxu0 0.0
        %1735 = vmatprep.subr.mxu0 0.0
        %1736 = vmatpush1.msra.mxu0 0.0
        %1737 = vmatprep.subr.mxu0 0.0
        %1738 = vmatpush1.msra.mxu0 0.0
        %1739 = vmatprep.subr.mxu0 0.0
        %1740 = vmatpush1.msra.mxu0 0.0
        %1741 = vmatprep.subr.mxu0 0.0
        %1742 = vmatpush1.msra.mxu0 0.0
        %1743 = vmatprep.subr.mxu0 0.0
        %1744 = vmatpush1.msra.mxu0 0.0
        %1745 = vmatprep.subr.mxu0 0.0
        %1746 = vmatpush1.msra.mxu0 0.0
        %1747 = vmatprep.subr.mxu0 0.0
        %1748 = vmatpush1.msra.mxu0 0.0
        %1749 = vmatprep.subr.mxu0 0.0
        %1750 = vmatpush1.msra.mxu0 0.0
        %1751 = vmatprep.subr.mxu0 0.0
        %1752 = vmatpush1.msra.mxu0 0.0
        %1753 = vmatprep.subr.mxu0 0.0
        %1754 = vmatpush1.msra.mxu0 0.0
        %1755 = vmatprep.subr.mxu0 0.0
        %1756 = vmatpush1.msra.mxu0 0.0
        %1757 = vmatprep.subr.mxu0 0.0
        %1758 = vmatpush1.msra.mxu0 0.0
        %1759 = vmatprep.subr.mxu0 0.0
        %1760 = vmatpush1.msra.mxu0 0.0
        %1761 = vmatprep.subr.mxu0 0.0
        %1762 = vmatpush1.msra.mxu0 0.0
        %1763 = vmatprep.subr.mxu0 0.0
        %1764 = vmatpush1.msra.mxu0 0.0
        %1765 = vmatprep.subr.mxu0 0.0
        %1766 = vmatpush1.msra.mxu0 0.0
        %1767 = vmatprep.subr.mxu0 0.0
        %1768 = vmatpush1.msra.mxu0 0.0
        %1769 = vmatprep.subr.mxu0 0.0
        %1770 = vmatpush1.msra.mxu0 0.0
        %1771 = vmatprep.subr.mxu0 0.0
        %1772 = vmatpush1.msra.mxu0 0.0
        %1773 = vmatprep.subr.mxu0 0.0
        %1774 = vmatpush1.msra.mxu0 0.0
        %1775 = vmatprep.subr.mxu0 0.0
        %1776 = vmatpush1.msra.mxu0 0.0
        %1777 = vmatprep.subr.mxu0 0.0
        %1778 = vmatpush1.msra.mxu0 0.0
        %1779 = vmatprep.subr.mxu0 0.0
        %1780 = vmatpush1.msra.mxu0 0.0
        %1781 = vmatprep.mubr.f32.mxu0 0.0
        %1782 = vmatmul.mubr.f32.gmra.mrb[0].mxu0 %v1715
        %v1783 = vpop.f32.mrb[0].mxu0
        %v1784 = vadd.f32 %v1712, %v1783
        %v1785 = vpop.f32.mrb[0].mxu0
        %1786 = vdwg.mxu0
        %v1787 = vld [vmem:[%s14] sm:$0xff]
        %v1788 = vld [vmem:[%s14 + $0x8] sm:$0xff]
        %v1789 = vld [vmem:[%s14 + $0x10] sm:$0xff]
        %v1790 = vld [vmem:[%s14 + $0x18] sm:$0xff]
        %v1791 = vld [vmem:[%s15] sm:$0x1]
        %v1793 = vlaneseq
        %v1794 = vshrl.u32 %v1793, 7
        %v1795 = vsub.s32 0, %v1794
        %v1796 = vrot.slane %v1791, %v1795
        %v1799 = vsel %vm788, %v785, 0
        %1801 = vmatprep.subr.mxu0 0.0
        %1802 = vmatpush1.msra.mxu0 %v1787
        %1803 = vmatprep.subr.mxu0 0.0
        %1804 = vmatpush1.msra.mxu0 %v1788
        %1805 = vmatprep.subr.mxu0 0.0
        %1806 = vmatpush1.msra.mxu0 %v1789
        %1807 = vmatprep.subr.mxu0 0.0
        %1808 = vmatpush1.msra.mxu0 %v1790
        %1809 = vmatprep.subr.mxu0 0.0
        %1810 = vmatpush1.msra.mxu0 0.0
        %1811 = vmatprep.subr.mxu0 0.0
        %1812 = vmatpush1.msra.mxu0 0.0
        %1813 = vmatprep.subr.mxu0 0.0
        %1814 = vmatpush1.msra.mxu0 0.0
        %1815 = vmatprep.subr.mxu0 0.0
        %1816 = vmatpush1.msra.mxu0 0.0
        %1817 = vmatprep.subr.mxu0 0.0
        %1818 = vmatpush1.msra.mxu0 0.0
        %1819 = vmatprep.subr.mxu0 0.0
        %1820 = vmatpush1.msra.mxu0 0.0
        %1821 = vmatprep.subr.mxu0 0.0
        %1822 = vmatpush1.msra.mxu0 0.0
        %1823 = vmatprep.subr.mxu0 0.0
        %1824 = vmatpush1.msra.mxu0 0.0
        %1825 = vmatprep.subr.mxu0 0.0
        %1826 = vmatpush1.msra.mxu0 0.0
        %1827 = vmatprep.subr.mxu0 0.0
        %1828 = vmatpush1.msra.mxu0 0.0
        %1829 = vmatprep.subr.mxu0 0.0
        %1830 = vmatpush1.msra.mxu0 0.0
        %1831 = vmatprep.subr.mxu0 0.0
        %1832 = vmatpush1.msra.mxu0 0.0
        %1833 = vmatprep.subr.mxu0 0.0
        %1834 = vmatpush1.msra.mxu0 0.0
        %1835 = vmatprep.subr.mxu0 0.0
        %1836 = vmatpush1.msra.mxu0 0.0
        %1837 = vmatprep.subr.mxu0 0.0
        %1838 = vmatpush1.msra.mxu0 0.0
        %1839 = vmatprep.subr.mxu0 0.0
        %1840 = vmatpush1.msra.mxu0 0.0
        %1841 = vmatprep.subr.mxu0 0.0
        %1842 = vmatpush1.msra.mxu0 0.0
        %1843 = vmatprep.subr.mxu0 0.0
        %1844 = vmatpush1.msra.mxu0 0.0
        %1845 = vmatprep.subr.mxu0 0.0
        %1846 = vmatpush1.msra.mxu0 0.0
        %1847 = vmatprep.subr.mxu0 0.0
        %1848 = vmatpush1.msra.mxu0 0.0
        %1849 = vmatprep.subr.mxu0 0.0
        %1850 = vmatpush1.msra.mxu0 0.0
        %1851 = vmatprep.subr.mxu0 0.0
        %1852 = vmatpush1.msra.mxu0 0.0
        %1853 = vmatprep.subr.mxu0 0.0
        %1854 = vmatpush1.msra.mxu0 0.0
        %1855 = vmatprep.subr.mxu0 0.0
        %1856 = vmatpush1.msra.mxu0 0.0
        %1857 = vmatprep.subr.mxu0 0.0
        %1858 = vmatpush1.msra.mxu0 0.0
        %1859 = vmatprep.subr.mxu0 0.0
        %1860 = vmatpush1.msra.mxu0 0.0
        %1861 = vmatprep.subr.mxu0 0.0
        %1862 = vmatpush1.msra.mxu0 0.0
        %1863 = vmatprep.subr.mxu0 0.0
        %1864 = vmatpush1.msra.mxu0 0.0
        %1865 = vmatprep.mubr.f32.mxu0 0.0
        %1866 = vmatmul.mubr.f32.gmra.mrb[0].mxu0 %v1799
        %v1867 = vpop.f32.mrb[0].mxu0
        %v1868 = vadd.f32 %v1796, %v1867
        %v1869 = vpop.f32.mrb[0].mxu0
        %1870 = vdwg.mxu0
        %v1872 = vsel %vm906, %v1784, 0
        %v1875 = vsel %vm906, %v1868, 0
        %1877 = vmatprep.subr.mxu0 0.0
        %1878 = vmatpush1.xpose.msra.mxu0 %v1875
        %1879 = vmatprep.subr.mxu0 0.0
        %1880 = vmatpush1.xpose.msra.mxu0 0.0
        %1881 = vmatprep.subr.mxu0 0.0
        %1882 = vmatpush1.xpose.msra.mxu0 0.0
        %1883 = vmatprep.subr.mxu0 0.0
        %1884 = vmatpush1.xpose.msra.mxu0 0.0
        %1885 = vmatprep.subr.mxu0 0.0
        %1886 = vmatpush1.xpose.msra.mxu0 0.0
        %1887 = vmatprep.subr.mxu0 0.0
        %1888 = vmatpush1.xpose.msra.mxu0 0.0
        %1889 = vmatprep.subr.mxu0 0.0
        %1890 = vmatpush1.xpose.msra.mxu0 0.0
        %1891 = vmatprep.subr.mxu0 0.0
        %1892 = vmatpush1.xpose.msra.mxu0 0.0
        %1893 = vmatprep.subr.mxu0 0.0
        %1894 = vmatpush1.xpose.msra.mxu0 0.0
        %1895 = vmatprep.subr.mxu0 0.0
        %1896 = vmatpush1.xpose.msra.mxu0 0.0
        %1897 = vmatprep.subr.mxu0 0.0
        %1898 = vmatpush1.xpose.msra.mxu0 0.0
        %1899 = vmatprep.subr.mxu0 0.0
        %1900 = vmatpush1.xpose.msra.mxu0 0.0
        %1901 = vmatprep.subr.mxu0 0.0
        %1902 = vmatpush1.xpose.msra.mxu0 0.0
        %1903 = vmatprep.subr.mxu0 0.0
        %1904 = vmatpush1.xpose.msra.mxu0 0.0
        %1905 = vmatprep.subr.mxu0 0.0
        %1906 = vmatpush1.xpose.msra.mxu0 0.0
        %1907 = vmatprep.subr.mxu0 0.0
        %1908 = vmatpush1.xpose.msra.mxu0 0.0
        %1909 = vmatprep.subr.mxu0 0.0
        %1910 = vmatpush1.xpose.msra.mxu0 0.0
        %1911 = vmatprep.subr.mxu0 0.0
        %1912 = vmatpush1.xpose.msra.mxu0 0.0
        %1913 = vmatprep.subr.mxu0 0.0
        %1914 = vmatpush1.xpose.msra.mxu0 0.0
        %1915 = vmatprep.subr.mxu0 0.0
        %1916 = vmatpush1.xpose.msra.mxu0 0.0
        %1917 = vmatprep.subr.mxu0 0.0
        %1918 = vmatpush1.xpose.msra.mxu0 0.0
        %1919 = vmatprep.subr.mxu0 0.0
        %1920 = vmatpush1.xpose.msra.mxu0 0.0
        %1921 = vmatprep.subr.mxu0 0.0
        %1922 = vmatpush1.xpose.msra.mxu0 0.0
        %1923 = vmatprep.subr.mxu0 0.0
        %1924 = vmatpush1.xpose.msra.mxu0 0.0
        %1925 = vmatprep.subr.mxu0 0.0
        %1926 = vmatpush1.xpose.msra.mxu0 0.0
        %1927 = vmatprep.subr.mxu0 0.0
        %1928 = vmatpush1.xpose.msra.mxu0 0.0
        %1929 = vmatprep.subr.mxu0 0.0
        %1930 = vmatpush1.xpose.msra.mxu0 0.0
        %1931 = vmatprep.subr.mxu0 0.0
        %1932 = vmatpush1.xpose.msra.mxu0 0.0
        %1933 = vmatprep.subr.mxu0 0.0
        %1934 = vmatpush1.xpose.msra.mxu0 0.0
        %1935 = vmatprep.subr.mxu0 0.0
        %1936 = vmatpush1.xpose.msra.mxu0 0.0
        %1937 = vmatprep.subr.mxu0 0.0
        %1938 = vmatpush1.xpose.msra.mxu0 0.0
        %1939 = vmatprep.subr.mxu0 0.0
        %1940 = vmatpush1.xpose.msra.mxu0 0.0
        %1941 = vmatprep.mubr.f32.mxu0 0.0
        %1942 = vmatmul.mubr.f32.gmra.mrb[0].mxu0 %v1872
        %v1943 = vpop.f32.mrb[0].mxu0
        %v1944 = vadd.f32 0.0, %v1943
        %v1945 = vpop.f32.mrb[0].mxu0
        %1946 = vdwg.mxu0
        %v1947 = vmul.f32 %v1944, 0.35355338
        %vm1948 = vcmp.gt.f32.partialorder %v786, 0.0
        %v1949 = vsel %vm1948, %v1947, -1e+09
        %v1950 = vsel %vm906, %v1949, -inf
        %1951 = vmax.xlane.f32.xlu0 %v1950
        %v1952 = vpop.xlane.xlu0 %1951
        %v1953 = vsub.f32 %v1949, %v1952
        %v1954 = vmul.f32 %v1953, 1.442695
        %v1955 = vpow.pop %v1954
        %v1956 = vsel %vm906, %v1955, 0.0
        %1957 = vadd.xlane.f32.xlu0 %v1956
        %v1958 = vpop.xlane.xlu0 %1957
        %v1959 = vrcp.pop %v1958
        %v1960 = vmul.f32 %v1955, %v1959
        %1961 = vrot.lane.b32.xlu0 %v1868, 96
        %v1962 = vpop.permute.xlu0 %1961
        %v1965 = vsel %vm906, %v1960, 0
        %1967 = vmatprep.subr.mxu0 0.0
        %1968 = vmatpush1.msra.mxu0 %v1962
        %1969 = vmatprep.subr.mxu0 0.0
        %1970 = vmatpush1.msra.mxu0 0.0
        %1971 = vmatprep.subr.mxu0 0.0
        %1972 = vmatpush1.msra.mxu0 0.0
        %1973 = vmatprep.subr.mxu0 0.0
        %1974 = vmatpush1.msra.mxu0 0.0
        %1975 = vmatprep.subr.mxu0 0.0
        %1976 = vmatpush1.msra.mxu0 0.0
        %1977 = vmatprep.subr.mxu0 0.0
        %1978 = vmatpush1.msra.mxu0 0.0
        %1979 = vmatprep.subr.mxu0 0.0
        %1980 = vmatpush1.msra.mxu0 0.0
        %1981 = vmatprep.subr.mxu0 0.0
        %1982 = vmatpush1.msra.mxu0 0.0
        %1983 = vmatprep.subr.mxu0 0.0
        %1984 = vmatpush1.msra.mxu0 0.0
        %1985 = vmatprep.subr.mxu0 0.0
        %1986 = vmatpush1.msra.mxu0 0.0
        %1987 = vmatprep.subr.mxu0 0.0
        %1988 = vmatpush1.msra.mxu0 0.0
        %1989 = vmatprep.subr.mxu0 0.0
        %1990 = vmatpush1.msra.mxu0 0.0
        %1991 = vmatprep.subr.mxu0 0.0
        %1992 = vmatpush1.msra.mxu0 0.0
        %1993 = vmatprep.subr.mxu0 0.0
        %1994 = vmatpush1.msra.mxu0 0.0
        %1995 = vmatprep.subr.mxu0 0.0
        %1996 = vmatpush1.msra.mxu0 0.0
        %1997 = vmatprep.subr.mxu0 0.0
        %1998 = vmatpush1.msra.mxu0 0.0
        %1999 = vmatprep.subr.mxu0 0.0
        %2000 = vmatpush1.msra.mxu0 0.0
        %2001 = vmatprep.subr.mxu0 0.0
        %2002 = vmatpush1.msra.mxu0 0.0
        %2003 = vmatprep.subr.mxu0 0.0
        %2004 = vmatpush1.msra.mxu0 0.0
        %2005 = vmatprep.subr.mxu0 0.0
        %2006 = vmatpush1.msra.mxu0 0.0
        %2007 = vmatprep.subr.mxu0 0.0
        %2008 = vmatpush1.msra.mxu0 0.0
        %2009 = vmatprep.subr.mxu0 0.0
        %2010 = vmatpush1.msra.mxu0 0.0
        %2011 = vmatprep.subr.mxu0 0.0
        %2012 = vmatpush1.msra.mxu0 0.0
        %2013 = vmatprep.subr.mxu0 0.0
        %2014 = vmatpush1.msra.mxu0 0.0
        %2015 = vmatprep.subr.mxu0 0.0
        %2016 = vmatpush1.msra.mxu0 0.0
        %2017 = vmatprep.subr.mxu0 0.0
        %2018 = vmatpush1.msra.mxu0 0.0
        %2019 = vmatprep.subr.mxu0 0.0
        %2020 = vmatpush1.msra.mxu0 0.0
        %2021 = vmatprep.subr.mxu0 0.0
        %2022 = vmatpush1.msra.mxu0 0.0
        %2023 = vmatprep.subr.mxu0 0.0
        %2024 = vmatpush1.msra.mxu0 0.0
        %2025 = vmatprep.subr.mxu0 0.0
        %2026 = vmatpush1.msra.mxu0 0.0
        %2027 = vmatprep.subr.mxu0 0.0
        %2028 = vmatpush1.msra.mxu0 0.0
        %2029 = vmatprep.subr.mxu0 0.0
        %2030 = vmatpush1.msra.mxu0 0.0
        %2031 = vmatprep.mubr.f32.mxu0 0.0
        %2032 = vmatmul.mubr.f32.gmra.mrb[0].mxu0 %v1965
        %v2033 = vpop.f32.mrb[0].mxu0
        %v2034 = vadd.f32 0.0, %v2033
        %v2035 = vpop.f32.mrb[0].mxu0
        %2036 = vdwg.mxu0
        %2037 = vrot.lane.b32.xlu0 %v1784, 120
        %v2038 = vpop.permute.xlu0 %2037
        %2039 = vrot.lane.b32.xlu0 %v1868, 120
        %v2040 = vpop.permute.xlu0 %2039
        %v2041 = vsel %vm906, %v2038, 0
        %v2043 = vsel %vm906, %v2040, 0
        %2045 = vmatprep.subr.mxu0 0.0
        %2046 = vmatpush1.xpose.msra.mxu0 %v2043
        %2047 = vmatprep.subr.mxu0 0.0
        %2048 = vmatpush1.xpose.msra.mxu0 0.0
        %2049 = vmatprep.subr.mxu0 0.0
        %2050 = vmatpush1.xpose.msra.mxu0 0.0
        %2051 = vmatprep.subr.mxu0 0.0
        %2052 = vmatpush1.xpose.msra.mxu0 0.0
        %2053 = vmatprep.subr.mxu0 0.0
        %2054 = vmatpush1.xpose.msra.mxu0 0.0
        %2055 = vmatprep.subr.mxu0 0.0
        %2056 = vmatpush1.xpose.msra.mxu0 0.0
        %2057 = vmatprep.subr.mxu0 0.0
        %2058 = vmatpush1.xpose.msra.mxu0 0.0
        %2059 = vmatprep.subr.mxu0 0.0
        %2060 = vmatpush1.xpose.msra.mxu0 0.0
        %2061 = vmatprep.subr.mxu0 0.0
        %2062 = vmatpush1.xpose.msra.mxu0 0.0
        %2063 = vmatprep.subr.mxu0 0.0
        %2064 = vmatpush1.xpose.msra.mxu0 0.0
        %2065 = vmatprep.subr.mxu0 0.0
        %2066 = vmatpush1.xpose.msra.mxu0 0.0
        %2067 = vmatprep.subr.mxu0 0.0
        %2068 = vmatpush1.xpose.msra.mxu0 0.0
        %2069 = vmatprep.subr.mxu0 0.0
        %2070 = vmatpush1.xpose.msra.mxu0 0.0
        %2071 = vmatprep.subr.mxu0 0.0
        %2072 = vmatpush1.xpose.msra.mxu0 0.0
        %2073 = vmatprep.subr.mxu0 0.0
        %2074 = vmatpush1.xpose.msra.mxu0 0.0
        %2075 = vmatprep.subr.mxu0 0.0
        %2076 = vmatpush1.xpose.msra.mxu0 0.0
        %2077 = vmatprep.subr.mxu0 0.0
        %2078 = vmatpush1.xpose.msra.mxu0 0.0
        %2079 = vmatprep.subr.mxu0 0.0
        %2080 = vmatpush1.xpose.msra.mxu0 0.0
        %2081 = vmatprep.subr.mxu0 0.0
        %2082 = vmatpush1.xpose.msra.mxu0 0.0
        %2083 = vmatprep.subr.mxu0 0.0
        %2084 = vmatpush1.xpose.msra.mxu0 0.0
        %2085 = vmatprep.subr.mxu0 0.0
        %2086 = vmatpush1.xpose.msra.mxu0 0.0
        %2087 = vmatprep.subr.mxu0 0.0
        %2088 = vmatpush1.xpose.msra.mxu0 0.0
        %2089 = vmatprep.subr.mxu0 0.0
        %2090 = vmatpush1.xpose.msra.mxu0 0.0
        %2091 = vmatprep.subr.mxu0 0.0
        %2092 = vmatpush1.xpose.msra.mxu0 0.0
        %2093 = vmatprep.subr.mxu0 0.0
        %2094 = vmatpush1.xpose.msra.mxu0 0.0
        %2095 = vmatprep.subr.mxu0 0.0
        %2096 = vmatpush1.xpose.msra.mxu0 0.0
        %2097 = vmatprep.subr.mxu0 0.0
        %2098 = vmatpush1.xpose.msra.mxu0 0.0
        %2099 = vmatprep.subr.mxu0 0.0
        %2100 = vmatpush1.xpose.msra.mxu0 0.0
        %2101 = vmatprep.subr.mxu0 0.0
        %2102 = vmatpush1.xpose.msra.mxu0 0.0
        %2103 = vmatprep.subr.mxu0 0.0
        %2104 = vmatpush1.xpose.msra.mxu0 0.0
        %2105 = vmatprep.subr.mxu0 0.0
        %2106 = vmatpush1.xpose.msra.mxu0 0.0
        %2107 = vmatprep.subr.mxu0 0.0
        %2108 = vmatpush1.xpose.msra.mxu0 0.0
        %2109 = vmatprep.mubr.f32.mxu0 0.0
        %2110 = vmatmul.mubr.f32.gmra.mrb[0].mxu0 %v2041
        %v2111 = vpop.f32.mrb[0].mxu0
        %v2112 = vadd.f32 0.0, %v2111
        %v2113 = vpop.f32.mrb[0].mxu0
        %2114 = vdwg.mxu0
        %v2115 = vmul.f32 %v2112, 0.35355338
        %v2116 = vsel %vm1948, %v2115, -1e+09
        %v2117 = vsel %vm906, %v2116, -inf
        %2118 = vmax.xlane.f32.xlu0 %v2117
        %v2119 = vpop.xlane.xlu0 %2118
        %v2120 = vsub.f32 %v2116, %v2119
        %v2121 = vmul.f32 %v2120, 1.442695
        %v2122 = vpow.pop %v2121
        %v2123 = vsel %vm906, %v2122, 0.0
        %2124 = vadd.xlane.f32.xlu0 %v2123
        %v2125 = vpop.xlane.xlu0 %2124
        %v2126 = vrcp.pop %v2125
        %v2127 = vmul.f32 %v2122, %v2126
        %2128 = vrot.lane.b32.xlu0 %v1868, 88
        %v2129 = vpop.permute.xlu0 %2128
        %v2132 = vsel %vm906, %v2127, 0
        %2134 = vmatprep.subr.mxu0 0.0
        %2135 = vmatpush1.msra.mxu0 %v2129
        %2136 = vmatprep.subr.mxu0 0.0
        %2137 = vmatpush1.msra.mxu0 0.0
        %2138 = vmatprep.subr.mxu0 0.0
        %2139 = vmatpush1.msra.mxu0 0.0
        %2140 = vmatprep.subr.mxu0 0.0
        %2141 = vmatpush1.msra.mxu0 0.0
        %2142 = vmatprep.subr.mxu0 0.0
        %2143 = vmatpush1.msra.mxu0 0.0
        %2144 = vmatprep.subr.mxu0 0.0
        %2145 = vmatpush1.msra.mxu0 0.0
        %2146 = vmatprep.subr.mxu0 0.0
        %2147 = vmatpush1.msra.mxu0 0.0
        %2148 = vmatprep.subr.mxu0 0.0
        %2149 = vmatpush1.msra.mxu0 0.0
        %2150 = vmatprep.subr.mxu0 0.0
        %2151 = vmatpush1.msra.mxu0 0.0
        %2152 = vmatprep.subr.mxu0 0.0
        %2153 = vmatpush1.msra.mxu0 0.0
        %2154 = vmatprep.subr.mxu0 0.0
        %2155 = vmatpush1.msra.mxu0 0.0
        %2156 = vmatprep.subr.mxu0 0.0
        %2157 = vmatpush1.msra.mxu0 0.0
        %2158 = vmatprep.subr.mxu0 0.0
        %2159 = vmatpush1.msra.mxu0 0.0
        %2160 = vmatprep.subr.mxu0 0.0
        %2161 = vmatpush1.msra.mxu0 0.0
        %2162 = vmatprep.subr.mxu0 0.0
        %2163 = vmatpush1.msra.mxu0 0.0
        %2164 = vmatprep.subr.mxu0 0.0
        %2165 = vmatpush1.msra.mxu0 0.0
        %2166 = vmatprep.subr.mxu0 0.0
        %2167 = vmatpush1.msra.mxu0 0.0
        %2168 = vmatprep.subr.mxu0 0.0
        %2169 = vmatpush1.msra.mxu0 0.0
        %2170 = vmatprep.subr.mxu0 0.0
        %2171 = vmatpush1.msra.mxu0 0.0
        %2172 = vmatprep.subr.mxu0 0.0
        %2173 = vmatpush1.msra.mxu0 0.0
        %2174 = vmatprep.subr.mxu0 0.0
        %2175 = vmatpush1.msra.mxu0 0.0
        %2176 = vmatprep.subr.mxu0 0.0
        %2177 = vmatpush1.msra.mxu0 0.0
        %2178 = vmatprep.subr.mxu0 0.0
        %2179 = vmatpush1.msra.mxu0 0.0
        %2180 = vmatprep.subr.mxu0 0.0
        %2181 = vmatpush1.msra.mxu0 0.0
        %2182 = vmatprep.subr.mxu0 0.0
        %2183 = vmatpush1.msra.mxu0 0.0
        %2184 = vmatprep.subr.mxu0 0.0
        %2185 = vmatpush1.msra.mxu0 0.0
        %2186 = vmatprep.subr.mxu0 0.0
        %2187 = vmatpush1.msra.mxu0 0.0
        %2188 = vmatprep.subr.mxu0 0.0
        %2189 = vmatpush1.msra.mxu0 0.0
        %2190 = vmatprep.subr.mxu0 0.0
        %2191 = vmatpush1.msra.mxu0 0.0
        %2192 = vmatprep.subr.mxu0 0.0
        %2193 = vmatpush1.msra.mxu0 0.0
        %2194 = vmatprep.subr.mxu0 0.0
        %2195 = vmatpush1.msra.mxu0 0.0
        %2196 = vmatprep.subr.mxu0 0.0
        %2197 = vmatpush1.msra.mxu0 0.0
        %2198 = vmatprep.mubr.f32.mxu0 0.0
        %2199 = vmatmul.mubr.f32.gmra.mrb[0].mxu0 %v2132
        %v2200 = vpop.f32.mrb[0].mxu0
        %v2201 = vadd.f32 0.0, %v2200
        %v2202 = vpop.f32.mrb[0].mxu0
        %2203 = vdwg.mxu0
        %2204 = vrot.lane.b32.xlu0 %v1784, 112
        %v2205 = vpop.permute.xlu0 %2204
        %2206 = vrot.lane.b32.xlu0 %v1868, 112
        %v2207 = vpop.permute.xlu0 %2206
        %v2208 = vsel %vm906, %v2205, 0
        %v2210 = vsel %vm906, %v2207, 0
        %2212 = vmatprep.subr.mxu0 0.0
        %2213 = vmatpush1.xpose.msra.mxu0 %v2210
        %2214 = vmatprep.subr.mxu0 0.0
        %2215 = vmatpush1.xpose.msra.mxu0 0.0
        %2216 = vmatprep.subr.mxu0 0.0
        %2217 = vmatpush1.xpose.msra.mxu0 0.0
        %2218 = vmatprep.subr.mxu0 0.0
        %2219 = vmatpush1.xpose.msra.mxu0 0.0
        %2220 = vmatprep.subr.mxu0 0.0
        %2221 = vmatpush1.xpose.msra.mxu0 0.0
        %2222 = vmatprep.subr.mxu0 0.0
        %2223 = vmatpush1.xpose.msra.mxu0 0.0
        %2224 = vmatprep.subr.mxu0 0.0
        %2225 = vmatpush1.xpose.msra.mxu0 0.0
        %2226 = vmatprep.subr.mxu0 0.0
        %2227 = vmatpush1.xpose.msra.mxu0 0.0
        %2228 = vmatprep.subr.mxu0 0.0
        %2229 = vmatpush1.xpose.msra.mxu0 0.0
        %2230 = vmatprep.subr.mxu0 0.0
        %2231 = vmatpush1.xpose.msra.mxu0 0.0
        %2232 = vmatprep.subr.mxu0 0.0
        %2233 = vmatpush1.xpose.msra.mxu0 0.0
        %2234 = vmatprep.subr.mxu0 0.0
        %2235 = vmatpush1.xpose.msra.mxu0 0.0
        %2236 = vmatprep.subr.mxu0 0.0
        %2237 = vmatpush1.xpose.msra.mxu0 0.0
        %2238 = vmatprep.subr.mxu0 0.0
        %2239 = vmatpush1.xpose.msra.mxu0 0.0
        %2240 = vmatprep.subr.mxu0 0.0
        %2241 = vmatpush1.xpose.msra.mxu0 0.0
        %2242 = vmatprep.subr.mxu0 0.0
        %2243 = vmatpush1.xpose.msra.mxu0 0.0
        %2244 = vmatprep.subr.mxu0 0.0
        %2245 = vmatpush1.xpose.msra.mxu0 0.0
        %2246 = vmatprep.subr.mxu0 0.0
        %2247 = vmatpush1.xpose.msra.mxu0 0.0
        %2248 = vmatprep.subr.mxu0 0.0
        %2249 = vmatpush1.xpose.msra.mxu0 0.0
        %2250 = vmatprep.subr.mxu0 0.0
        %2251 = vmatpush1.xpose.msra.mxu0 0.0
        %2252 = vmatprep.subr.mxu0 0.0
        %2253 = vmatpush1.xpose.msra.mxu0 0.0
        %2254 = vmatprep.subr.mxu0 0.0
        %2255 = vmatpush1.xpose.msra.mxu0 0.0
        %2256 = vmatprep.subr.mxu0 0.0
        %2257 = vmatpush1.xpose.msra.mxu0 0.0
        %2258 = vmatprep.subr.mxu0 0.0
        %2259 = vmatpush1.xpose.msra.mxu0 0.0
        %2260 = vmatprep.subr.mxu0 0.0
        %2261 = vmatpush1.xpose.msra.mxu0 0.0
        %2262 = vmatprep.subr.mxu0 0.0
        %2263 = vmatpush1.xpose.msra.mxu0 0.0
        %2264 = vmatprep.subr.mxu0 0.0
        %2265 = vmatpush1.xpose.msra.mxu0 0.0
        %2266 = vmatprep.subr.mxu0 0.0
        %2267 = vmatpush1.xpose.msra.mxu0 0.0
        %2268 = vmatprep.subr.mxu0 0.0
        %2269 = vmatpush1.xpose.msra.mxu0 0.0
        %2270 = vmatprep.subr.mxu0 0.0
        %2271 = vmatpush1.xpose.msra.mxu0 0.0
        %2272 = vmatprep.subr.mxu0 0.0
        %2273 = vmatpush1.xpose.msra.mxu0 0.0
        %2274 = vmatprep.subr.mxu0 0.0
        %2275 = vmatpush1.xpose.msra.mxu0 0.0
        %2276 = vmatprep.mubr.f32.mxu0 0.0
        %2277 = vmatmul.mubr.f32.gmra.mrb[0].mxu0 %v2208
        %v2278 = vpop.f32.mrb[0].mxu0
        %v2279 = vadd.f32 0.0, %v2278
        %v2280 = vpop.f32.mrb[0].mxu0
        %2281 = vdwg.mxu0
        %v2282 = vmul.f32 %v2279, 0.35355338
        %v2283 = vsel %vm1948, %v2282, -1e+09
        %v2284 = vsel %vm906, %v2283, -inf
        %2285 = vmax.xlane.f32.xlu0 %v2284
        %v2286 = vpop.xlane.xlu0 %2285
        %v2287 = vsub.f32 %v2283, %v2286
        %v2288 = vmul.f32 %v2287, 1.442695
        %v2289 = vpow.pop %v2288
        %v2290 = vsel %vm906, %v2289, 0.0
        %2291 = vadd.xlane.f32.xlu0 %v2290
        %v2292 = vpop.xlane.xlu0 %2291
        %v2293 = vrcp.pop %v2292
        %v2294 = vmul.f32 %v2289, %v2293
        %2295 = vrot.lane.b32.xlu0 %v1868, 80
        %v2296 = vpop.permute.xlu0 %2295
        %v2299 = vsel %vm906, %v2294, 0
        %2301 = vmatprep.subr.mxu0 0.0
        %2302 = vmatpush1.msra.mxu0 %v2296
        %2303 = vmatprep.subr.mxu0 0.0
        %2304 = vmatpush1.msra.mxu0 0.0
        %2305 = vmatprep.subr.mxu0 0.0
        %2306 = vmatpush1.msra.mxu0 0.0
        %2307 = vmatprep.subr.mxu0 0.0
        %2308 = vmatpush1.msra.mxu0 0.0
        %2309 = vmatprep.subr.mxu0 0.0
        %2310 = vmatpush1.msra.mxu0 0.0
        %2311 = vmatprep.subr.mxu0 0.0
        %2312 = vmatpush1.msra.mxu0 0.0
        %2313 = vmatprep.subr.mxu0 0.0
        %2314 = vmatpush1.msra.mxu0 0.0
        %2315 = vmatprep.subr.mxu0 0.0
        %2316 = vmatpush1.msra.mxu0 0.0
        %2317 = vmatprep.subr.mxu0 0.0
        %2318 = vmatpush1.msra.mxu0 0.0
        %2319 = vmatprep.subr.mxu0 0.0
        %2320 = vmatpush1.msra.mxu0 0.0
        %2321 = vmatprep.subr.mxu0 0.0
        %2322 = vmatpush1.msra.mxu0 0.0
        %2323 = vmatprep.subr.mxu0 0.0
        %2324 = vmatpush1.msra.mxu0 0.0
        %2325 = vmatprep.subr.mxu0 0.0
        %2326 = vmatpush1.msra.mxu0 0.0
        %2327 = vmatprep.subr.mxu0 0.0
        %2328 = vmatpush1.msra.mxu0 0.0
        %2329 = vmatprep.subr.mxu0 0.0
        %2330 = vmatpush1.msra.mxu0 0.0
        %2331 = vmatprep.subr.mxu0 0.0
        %2332 = vmatpush1.msra.mxu0 0.0
        %2333 = vmatprep.subr.mxu0 0.0
        %2334 = vmatpush1.msra.mxu0 0.0
        %2335 = vmatprep.subr.mxu0 0.0
        %2336 = vmatpush1.msra.mxu0 0.0
        %2337 = vmatprep.subr.mxu0 0.0
        %2338 = vmatpush1.msra.mxu0 0.0
        %2339 = vmatprep.subr.mxu0 0.0
        %2340 = vmatpush1.msra.mxu0 0.0
        %2341 = vmatprep.subr.mxu0 0.0
        %2342 = vmatpush1.msra.mxu0 0.0
        %2343 = vmatprep.subr.mxu0 0.0
        %2344 = vmatpush1.msra.mxu0 0.0
        %2345 = vmatprep.subr.mxu0 0.0
        %2346 = vmatpush1.msra.mxu0 0.0
        %2347 = vmatprep.subr.mxu0 0.0
        %2348 = vmatpush1.msra.mxu0 0.0
        %2349 = vmatprep.subr.mxu0 0.0
        %2350 = vmatpush1.msra.mxu0 0.0
        %2351 = vmatprep.subr.mxu0 0.0
        %2352 = vmatpush1.msra.mxu0 0.0
        %2353 = vmatprep.subr.mxu0 0.0
        %2354 = vmatpush1.msra.mxu0 0.0
        %2355 = vmatprep.subr.mxu0 0.0
        %2356 = vmatpush1.msra.mxu0 0.0
        %2357 = vmatprep.subr.mxu0 0.0
        %2358 = vmatpush1.msra.mxu0 0.0
        %2359 = vmatprep.subr.mxu0 0.0
        %2360 = vmatpush1.msra.mxu0 0.0
        %2361 = vmatprep.subr.mxu0 0.0
        %2362 = vmatpush1.msra.mxu0 0.0
        %2363 = vmatprep.subr.mxu0 0.0
        %2364 = vmatpush1.msra.mxu0 0.0
        %2365 = vmatprep.mubr.f32.mxu0 0.0
        %2366 = vmatmul.mubr.f32.gmra.mrb[0].mxu0 %v2299
        %v2367 = vpop.f32.mrb[0].mxu0
        %v2368 = vadd.f32 0.0, %v2367
        %v2369 = vpop.f32.mrb[0].mxu0
        %2370 = vdwg.mxu0
        %2371 = vrot.lane.b32.xlu0 %v1784, 104
        %v2372 = vpop.permute.xlu0 %2371
        %2373 = vrot.lane.b32.xlu0 %v1868, 104
        %v2374 = vpop.permute.xlu0 %2373
        %v2375 = vsel %vm906, %v2372, 0
        %v2377 = vsel %vm906, %v2374, 0
        %2379 = vmatprep.subr.mxu0 0.0
        %2380 = vmatpush1.xpose.msra.mxu0 %v2377
        %2381 = vmatprep.subr.mxu0 0.0
        %2382 = vmatpush1.xpose.msra.mxu0 0.0
        %2383 = vmatprep.subr.mxu0 0.0
        %2384 = vmatpush1.xpose.msra.mxu0 0.0
        %2385 = vmatprep.subr.mxu0 0.0
        %2386 = vmatpush1.xpose.msra.mxu0 0.0
        %2387 = vmatprep.subr.mxu0 0.0
        %2388 = vmatpush1.xpose.msra.mxu0 0.0
        %2389 = vmatprep.subr.mxu0 0.0
        %2390 = vmatpush1.xpose.msra.mxu0 0.0
        %2391 = vmatprep.subr.mxu0 0.0
        %2392 = vmatpush1.xpose.msra.mxu0 0.0
        %2393 = vmatprep.subr.mxu0 0.0
        %2394 = vmatpush1.xpose.msra.mxu0 0.0
        %2395 = vmatprep.subr.mxu0 0.0
        %2396 = vmatpush1.xpose.msra.mxu0 0.0
        %2397 = vmatprep.subr.mxu0 0.0
        %2398 = vmatpush1.xpose.msra.mxu0 0.0
        %2399 = vmatprep.subr.mxu0 0.0
        %2400 = vmatpush1.xpose.msra.mxu0 0.0
        %2401 = vmatprep.subr.mxu0 0.0
        %2402 = vmatpush1.xpose.msra.mxu0 0.0
        %2403 = vmatprep.subr.mxu0 0.0
        %2404 = vmatpush1.xpose.msra.mxu0 0.0
        %2405 = vmatprep.subr.mxu0 0.0
        %2406 = vmatpush1.xpose.msra.mxu0 0.0
        %2407 = vmatprep.subr.mxu0 0.0
        %2408 = vmatpush1.xpose.msra.mxu0 0.0
        %2409 = vmatprep.subr.mxu0 0.0
        %2410 = vmatpush1.xpose.msra.mxu0 0.0
        %2411 = vmatprep.subr.mxu0 0.0
        %2412 = vmatpush1.xpose.msra.mxu0 0.0
        %2413 = vmatprep.subr.mxu0 0.0
        %2414 = vmatpush1.xpose.msra.mxu0 0.0
        %2415 = vmatprep.subr.mxu0 0.0
        %2416 = vmatpush1.xpose.msra.mxu0 0.0
        %2417 = vmatprep.subr.mxu0 0.0
        %2418 = vmatpush1.xpose.msra.mxu0 0.0
        %2419 = vmatprep.subr.mxu0 0.0
        %2420 = vmatpush1.xpose.msra.mxu0 0.0
        %2421 = vmatprep.subr.mxu0 0.0
        %2422 = vmatpush1.xpose.msra.mxu0 0.0
        %2423 = vmatprep.subr.mxu0 0.0
        %2424 = vmatpush1.xpose.msra.mxu0 0.0
        %2425 = vmatprep.subr.mxu0 0.0
        %2426 = vmatpush1.xpose.msra.mxu0 0.0
        %2427 = vmatprep.subr.mxu0 0.0
        %2428 = vmatpush1.xpose.msra.mxu0 0.0
        %2429 = vmatprep.subr.mxu0 0.0
        %2430 = vmatpush1.xpose.msra.mxu0 0.0
        %2431 = vmatprep.subr.mxu0 0.0
        %2432 = vmatpush1.xpose.msra.mxu0 0.0
        %2433 = vmatprep.subr.mxu0 0.0
        %2434 = vmatpush1.xpose.msra.mxu0 0.0
        %2435 = vmatprep.subr.mxu0 0.0
        %2436 = vmatpush1.xpose.msra.mxu0 0.0
        %2437 = vmatprep.subr.mxu0 0.0
        %2438 = vmatpush1.xpose.msra.mxu0 0.0
        %2439 = vmatprep.subr.mxu0 0.0
        %2440 = vmatpush1.xpose.msra.mxu0 0.0
        %2441 = vmatprep.subr.mxu0 0.0
        %2442 = vmatpush1.xpose.msra.mxu0 0.0
        %2443 = vmatprep.mubr.f32.mxu0 0.0
        %2444 = vmatmul.mubr.f32.gmra.mrb[0].mxu0 %v2375
        %v2445 = vpop.f32.mrb[0].mxu0
        %v2446 = vadd.f32 0.0, %v2445
        %v2447 = vpop.f32.mrb[0].mxu0
        %2448 = vdwg.mxu0
        %v2449 = vmul.f32 %v2446, 0.35355338
        %v2450 = vsel %vm1948, %v2449, -1e+09
        %v2451 = vsel %vm906, %v2450, -inf
        %2452 = vmax.xlane.f32.xlu0 %v2451
        %v2453 = vpop.xlane.xlu0 %2452
        %v2454 = vsub.f32 %v2450, %v2453
        %v2455 = vmul.f32 %v2454, 1.442695
        %v2456 = vpow.pop %v2455
        %v2457 = vsel %vm906, %v2456, 0.0
        %2458 = vadd.xlane.f32.xlu0 %v2457
        %v2459 = vpop.xlane.xlu0 %2458
        %v2460 = vrcp.pop %v2459
        %v2461 = vmul.f32 %v2456, %v2460
        %2462 = vrot.lane.b32.xlu0 %v1868, 72
        %v2463 = vpop.permute.xlu0 %2462
        %v2466 = vsel %vm906, %v2461, 0
        %2468 = vmatprep.subr.mxu0 0.0
        %2469 = vmatpush1.msra.mxu0 %v2463
        %2470 = vmatprep.subr.mxu0 0.0
        %2471 = vmatpush1.msra.mxu0 0.0
        %2472 = vmatprep.subr.mxu0 0.0
        %2473 = vmatpush1.msra.mxu0 0.0
        %2474 = vmatprep.subr.mxu0 0.0
        %2475 = vmatpush1.msra.mxu0 0.0
        %2476 = vmatprep.subr.mxu0 0.0
        %2477 = vmatpush1.msra.mxu0 0.0
        %2478 = vmatprep.subr.mxu0 0.0
        %2479 = vmatpush1.msra.mxu0 0.0
        %2480 = vmatprep.subr.mxu0 0.0
        %2481 = vmatpush1.msra.mxu0 0.0
        %2482 = vmatprep.subr.mxu0 0.0
        %2483 = vmatpush1.msra.mxu0 0.0
        %2484 = vmatprep.subr.mxu0 0.0
        %2485 = vmatpush1.msra.mxu0 0.0
        %2486 = vmatprep.subr.mxu0 0.0
        %2487 = vmatpush1.msra.mxu0 0.0
        %2488 = vmatprep.subr.mxu0 0.0
        %2489 = vmatpush1.msra.mxu0 0.0
        %2490 = vmatprep.subr.mxu0 0.0
        %2491 = vmatpush1.msra.mxu0 0.0
        %2492 = vmatprep.subr.mxu0 0.0
        %2493 = vmatpush1.msra.mxu0 0.0
        %2494 = vmatprep.subr.mxu0 0.0
        %2495 = vmatpush1.msra.mxu0 0.0
        %2496 = vmatprep.subr.mxu0 0.0
        %2497 = vmatpush1.msra.mxu0 0.0
        %2498 = vmatprep.subr.mxu0 0.0
        %2499 = vmatpush1.msra.mxu0 0.0
        %2500 = vmatprep.subr.mxu0 0.0
        %2501 = vmatpush1.msra.mxu0 0.0
        %2502 = vmatprep.subr.mxu0 0.0
        %2503 = vmatpush1.msra.mxu0 0.0
        %2504 = vmatprep.subr.mxu0 0.0
        %2505 = vmatpush1.msra.mxu0 0.0
        %2506 = vmatprep.subr.mxu0 0.0
        %2507 = vmatpush1.msra.mxu0 0.0
        %2508 = vmatprep.subr.mxu0 0.0
        %2509 = vmatpush1.msra.mxu0 0.0
        %2510 = vmatprep.subr.mxu0 0.0
        %2511 = vmatpush1.msra.mxu0 0.0
        %2512 = vmatprep.subr.mxu0 0.0
        %2513 = vmatpush1.msra.mxu0 0.0
        %2514 = vmatprep.subr.mxu0 0.0
        %2515 = vmatpush1.msra.mxu0 0.0
        %2516 = vmatprep.subr.mxu0 0.0
        %2517 = vmatpush1.msra.mxu0 0.0
        %2518 = vmatprep.subr.mxu0 0.0
        %2519 = vmatpush1.msra.mxu0 0.0
        %2520 = vmatprep.subr.mxu0 0.0
        %2521 = vmatpush1.msra.mxu0 0.0
        %2522 = vmatprep.subr.mxu0 0.0
        %2523 = vmatpush1.msra.mxu0 0.0
        %2524 = vmatprep.subr.mxu0 0.0
        %2525 = vmatpush1.msra.mxu0 0.0
        %2526 = vmatprep.subr.mxu0 0.0
        %2527 = vmatpush1.msra.mxu0 0.0
        %2528 = vmatprep.subr.mxu0 0.0
        %2529 = vmatpush1.msra.mxu0 0.0
        %2530 = vmatprep.subr.mxu0 0.0
        %2531 = vmatpush1.msra.mxu0 0.0
        %2532 = vmatprep.mubr.f32.mxu0 0.0
        %2533 = vmatmul.mubr.f32.gmra.mrb[0].mxu0 %v2466
        %v2534 = vpop.f32.mrb[0].mxu0
        %v2535 = vadd.f32 0.0, %v2534
        %v2536 = vpop.f32.mrb[0].mxu0
        %2537 = vdwg.mxu0
        %2539 = vrot.lane.b32.xlu0 %v2201, 8
        %v2540 = vpop.permute.xlu0 %2539
        %2543 = vrot.lane.b32.xlu0 %v2368, 16
        %v2544 = vpop.permute.xlu0 %2543
        %2547 = vrot.lane.b32.xlu0 %v2535, 24
        %v2548 = vpop.permute.xlu0 %2547
        %v2550 = vsel %vm906, %v2034, %v2540
        %v2551 = vsel %vm1585, %v2550, %v2544
        %v2552 = vsel %vm1587, %v2551, %v2548
        %v2553 = vld [vmem:[%s16] sm:$0xff]
        %v2554 = vld [vmem:[%s16 + $0x8] sm:$0xff]
        %v2555 = vld [vmem:[%s16 + $0x10] sm:$0xff]
        %v2556 = vld [vmem:[%s16 + $0x18] sm:$0xff]
        %v2557 = vld [vmem:[%s17] sm:$0x1]
        %v2559 = vlaneseq
        %v2560 = vshrl.u32 %v2559, 7
        %v2561 = vsub.s32 0, %v2560
        %v2562 = vrot.slane %v2557, %v2561
        %v2565 = vsel %vm788, %v2552, 0
        %2567 = vmatprep.subr.mxu0 0.0
        %2568 = vmatpush1.msra.mxu0 %v2553
        %2569 = vmatprep.subr.mxu0 0.0
        %2570 = vmatpush1.msra.mxu0 %v2554
        %2571 = vmatprep.subr.mxu0 0.0
        %2572 = vmatpush1.msra.mxu0 %v2555
        %2573 = vmatprep.subr.mxu0 0.0
        %2574 = vmatpush1.msra.mxu0 %v2556
        %2575 = vmatprep.subr.mxu0 0.0
        %2576 = vmatpush1.msra.mxu0 0.0
        %2577 = vmatprep.subr.mxu0 0.0
        %2578 = vmatpush1.msra.mxu0 0.0
        %2579 = vmatprep.subr.mxu0 0.0
        %2580 = vmatpush1.msra.mxu0 0.0
        %2581 = vmatprep.subr.mxu0 0.0
        %2582 = vmatpush1.msra.mxu0 0.0
        %2583 = vmatprep.subr.mxu0 0.0
        %2584 = vmatpush1.msra.mxu0 0.0
        %2585 = vmatprep.subr.mxu0 0.0
        %2586 = vmatpush1.msra.mxu0 0.0
        %2587 = vmatprep.subr.mxu0 0.0
        %2588 = vmatpush1.msra.mxu0 0.0
        %2589 = vmatprep.subr.mxu0 0.0
        %2590 = vmatpush1.msra.mxu0 0.0
        %2591 = vmatprep.subr.mxu0 0.0
        %2592 = vmatpush1.msra.mxu0 0.0
        %2593 = vmatprep.subr.mxu0 0.0
        %2594 = vmatpush1.msra.mxu0 0.0
        %2595 = vmatprep.subr.mxu0 0.0
        %2596 = vmatpush1.msra.mxu0 0.0
        %2597 = vmatprep.subr.mxu0 0.0
        %2598 = vmatpush1.msra.mxu0 0.0
        %2599 = vmatprep.subr.mxu0 0.0
        %2600 = vmatpush1.msra.mxu0 0.0
        %2601 = vmatprep.subr.mxu0 0.0
        %2602 = vmatpush1.msra.mxu0 0.0
        %2603 = vmatprep.subr.mxu0 0.0
        %2604 = vmatpush1.msra.mxu0 0.0
        %2605 = vmatprep.subr.mxu0 0.0
        %2606 = vmatpush1.msra.mxu0 0.0
        %2607 = vmatprep.subr.mxu0 0.0
        %2608 = vmatpush1.msra.mxu0 0.0
        %2609 = vmatprep.subr.mxu0 0.0
        %2610 = vmatpush1.msra.mxu0 0.0
        %2611 = vmatprep.subr.mxu0 0.0
        %2612 = vmatpush1.msra.mxu0 0.0
        %2613 = vmatprep.subr.mxu0 0.0
        %2614 = vmatpush1.msra.mxu0 0.0
        %2615 = vmatprep.subr.mxu0 0.0
        %2616 = vmatpush1.msra.mxu0 0.0
        %2617 = vmatprep.subr.mxu0 0.0
        %2618 = vmatpush1.msra.mxu0 0.0
        %2619 = vmatprep.subr.mxu0 0.0
        %2620 = vmatpush1.msra.mxu0 0.0
        %2621 = vmatprep.subr.mxu0 0.0
        %2622 = vmatpush1.msra.mxu0 0.0
        %2623 = vmatprep.subr.mxu0 0.0
        %2624 = vmatpush1.msra.mxu0 0.0
        %2625 = vmatprep.subr.mxu0 0.0
        %2626 = vmatpush1.msra.mxu0 0.0
        %2627 = vmatprep.subr.mxu0 0.0
        %2628 = vmatpush1.msra.mxu0 0.0
        %2629 = vmatprep.subr.mxu0 0.0
        %2630 = vmatpush1.msra.mxu0 0.0
        %2631 = vmatprep.mubr.f32.mxu0 0.0
        %2632 = vmatmul.mubr.f32.gmra.mrb[0].mxu0 %v2565
        %v2633 = vpop.f32.mrb[0].mxu0
        %v2634 = vadd.f32 %v2562, %v2633
        %v2635 = vpop.f32.mrb[0].mxu0
        %2636 = vdwg.mxu0
        %v2637 = vadd.f32 %v1673, %v2634
        %v2638 = vsel %vm788, %v2637, 0.0
        %2639 = vadd.xlane.f32.xlu0 %v2638
        %v2640 = vpop.xlane.xlu0 %2639
        %v2641 = vmul.f32 %v2640, %v792
        %v2642 = vsub.f32 %v2637, %v2641
        %v2643 = vmul.f32 %v2642, %v2642
        %v2644 = vsel %vm788, %v2643, 0.0
        %2645 = vadd.xlane.f32.xlu0 %v2644
        %v2646 = vpop.xlane.xlu0 %2645
        %v2647 = vmul.f32 %v2646, %v792
        %v2648 = vadd.f32 %v2647, 1e-06
        %v2649 = vrsqrt.pop %v2648
        %v2650 = vmul.f32 %v2642, %v2649
        %v2651 = vld [vmem:[%s18] sm:$0x1]
        %v2653 = vlaneseq
        %v2654 = vshrl.u32 %v2653, 7
        %v2655 = vsub.s32 0, %v2654
        %v2656 = vrot.slane %v2651, %v2655
        %v2658 = vmul.f32 %v2650, %v2656
        %v2659 = vld [vmem:[%s19] sm:$0x1]
        %v2661 = vlaneseq
        %v2662 = vshrl.u32 %v2661, 7
        %v2663 = vsub.s32 0, %v2662
        %v2664 = vrot.slane %v2659, %v2663
        %v2666 = vadd.f32 %v2658, %v2664
        %v2667 = vld [vmem:[%s20] sm:$0xff]
        %v2668 = vld [vmem:[%s20 + $0x8] sm:$0xff]
        %v2669 = vld [vmem:[%s20 + $0x10] sm:$0xff]
        %v2670 = vld [vmem:[%s20 + $0x18] sm:$0xff]
        %v2671 = vld [vmem:[%s21] sm:$0x1]
        %v2673 = vlaneseq
        %v2674 = vshrl.u32 %v2673, 7
        %v2675 = vsub.s32 0, %v2674
        %v2676 = vrot.slane %v2671, %v2675
        %v2679 = vsel %vm788, %v2666, 0
        %2681 = vmatprep.subr.mxu0 0.0
        %2682 = vmatpush1.msra.mxu0 %v2667
        %2683 = vmatprep.subr.mxu0 0.0
        %2684 = vmatpush1.msra.mxu0 %v2668
        %2685 = vmatprep.subr.mxu0 0.0
        %2686 = vmatpush1.msra.mxu0 %v2669
        %2687 = vmatprep.subr.mxu0 0.0
        %2688 = vmatpush1.msra.mxu0 %v2670
        %2689 = vmatprep.subr.mxu0 0.0
        %2690 = vmatpush1.msra.mxu0 0.0
        %2691 = vmatprep.subr.mxu0 0.0
        %2692 = vmatpush1.msra.mxu0 0.0
        %2693 = vmatprep.subr.mxu0 0.0
        %2694 = vmatpush1.msra.mxu0 0.0
        %2695 = vmatprep.subr.mxu0 0.0
        %2696 = vmatpush1.msra.mxu0 0.0
        %2697 = vmatprep.subr.mxu0 0.0
        %2698 = vmatpush1.msra.mxu0 0.0
        %2699 = vmatprep.subr.mxu0 0.0
        %2700 = vmatpush1.msra.mxu0 0.0
        %2701 = vmatprep.subr.mxu0 0.0
        %2702 = vmatpush1.msra.mxu0 0.0
        %2703 = vmatprep.subr.mxu0 0.0
        %2704 = vmatpush1.msra.mxu0 0.0
        %2705 = vmatprep.subr.mxu0 0.0
        %2706 = vmatpush1.msra.mxu0 0.0
        %2707 = vmatprep.subr.mxu0 0.0
        %2708 = vmatpush1.msra.mxu0 0.0
        %2709 = vmatprep.subr.mxu0 0.0
        %2710 = vmatpush1.msra.mxu0 0.0
        %2711 = vmatprep.subr.mxu0 0.0
        %2712 = vmatpush1.msra.mxu0 0.0
        %2713 = vmatprep.subr.mxu0 0.0
        %2714 = vmatpush1.msra.mxu0 0.0
        %2715 = vmatprep.subr.mxu0 0.0
        %2716 = vmatpush1.msra.mxu0 0.0
        %2717 = vmatprep.subr.mxu0 0.0
        %2718 = vmatpush1.msra.mxu0 0.0
        %2719 = vmatprep.subr.mxu0 0.0
        %2720 = vmatpush1.msra.mxu0 0.0
        %2721 = vmatprep.subr.mxu0 0.0
        %2722 = vmatpush1.msra.mxu0 0.0
        %2723 = vmatprep.subr.mxu0 0.0
        %2724 = vmatpush1.msra.mxu0 0.0
        %2725 = vmatprep.subr.mxu0 0.0
        %2726 = vmatpush1.msra.mxu0 0.0
        %2727 = vmatprep.subr.mxu0 0.0
        %2728 = vmatpush1.msra.mxu0 0.0
        %2729 = vmatprep.subr.mxu0 0.0
        %2730 = vmatpush1.msra.mxu0 0.0
        %2731 = vmatprep.subr.mxu0 0.0
        %2732 = vmatpush1.msra.mxu0 0.0
        %2733 = vmatprep.subr.mxu0 0.0
        %2734 = vmatpush1.msra.mxu0 0.0
        %2735 = vmatprep.subr.mxu0 0.0
        %2736 = vmatpush1.msra.mxu0 0.0
        %2737 = vmatprep.subr.mxu0 0.0
        %2738 = vmatpush1.msra.mxu0 0.0
        %2739 = vmatprep.subr.mxu0 0.0
        %2740 = vmatpush1.msra.mxu0 0.0
        %2741 = vmatprep.subr.mxu0 0.0
        %2742 = vmatpush1.msra.mxu0 0.0
        %2743 = vmatprep.subr.mxu0 0.0
        %2744 = vmatpush1.msra.mxu0 0.0
        %2745 = vmatprep.mubr.f32.mxu0 0.0
        %2746 = vmatmul.mubr.f32.gmra.mrb[0].mxu0 %v2679
        %v2747 = vpop.f32.mrb[0].mxu0
        %v2748 = vadd.f32 %v2676, %v2747
        %v2749 = vpop.f32.mrb[0].mxu0
        %2750 = vdwg.mxu0
        %v2751 = vmax.f32 %v2748, 0.0
        %v2752 = vld [vmem:[%s22] sm:$0xff]
        %v2753 = vld [vmem:[%s22 + $0x8] sm:$0xff]
        %v2754 = vld [vmem:[%s22 + $0x10] sm:$0xff]
        %v2755 = vld [vmem:[%s22 + $0x18] sm:$0xff]
        %v2756 = vld [vmem:[%s22 + $0x20] sm:$0xff]
        %v2757 = vld [vmem:[%s22 + $0x28] sm:$0xff]
        %v2758 = vld [vmem:[%s22 + $0x30] sm:$0xff]
        %v2759 = vld [vmem:[%s22 + $0x38] sm:$0xff]
        %v2760 = vld [vmem:[%s23] sm:$0x1]
        %v2762 = vlaneseq
        %v2763 = vshrl.u32 %v2762, 7
        %v2764 = vsub.s32 0, %v2763
        %v2765 = vrot.slane %v2760, %v2764
        %vm2767 = vcmask 523264
        %v2769 = vsel %vm2767, %v2751, 0
        %2771 = vmatprep.subr.mxu0 0.0
        %2772 = vmatpush1.msra.mxu0 %v2752
        %2773 = vmatprep.subr.mxu0 0.0
        %2774 = vmatpush1.msra.mxu0 %v2753
        %2775 = vmatprep.subr.mxu0 0.0
        %2776 = vmatpush1.msra.mxu0 %v2754
        %2777 = vmatprep.subr.mxu0 0.0
        %2778 = vmatpush1.msra.mxu0 %v2755
        %2779 = vmatprep.subr.mxu0 0.0
        %2780 = vmatpush1.msra.mxu0 %v2756
        %2781 = vmatprep.subr.mxu0 0.0
        %2782 = vmatpush1.msra.mxu0 %v2757
        %2783 = vmatprep.subr.mxu0 0.0
        %2784 = vmatpush1.msra.mxu0 %v2758
        %2785 = vmatprep.subr.mxu0 0.0
        %2786 = vmatpush1.msra.mxu0 %v2759
        %2787 = vmatprep.subr.mxu0 0.0
        %2788 = vmatpush1.msra.mxu0 0.0
        %2789 = vmatprep.subr.mxu0 0.0
        %2790 = vmatpush1.msra.mxu0 0.0
        %2791 = vmatprep.subr.mxu0 0.0
        %2792 = vmatpush1.msra.mxu0 0.0
        %2793 = vmatprep.subr.mxu0 0.0
        %2794 = vmatpush1.msra.mxu0 0.0
        %2795 = vmatprep.subr.mxu0 0.0
        %2796 = vmatpush1.msra.mxu0 0.0
        %2797 = vmatprep.subr.mxu0 0.0
        %2798 = vmatpush1.msra.mxu0 0.0
        %2799 = vmatprep.subr.mxu0 0.0
        %2800 = vmatpush1.msra.mxu0 0.0
        %2801 = vmatprep.subr.mxu0 0.0
        %2802 = vmatpush1.msra.mxu0 0.0
        %2803 = vmatprep.subr.mxu0 0.0
        %2804 = vmatpush1.msra.mxu0 0.0
        %2805 = vmatprep.subr.mxu0 0.0
        %2806 = vmatpush1.msra.mxu0 0.0
        %2807 = vmatprep.subr.mxu0 0.0
        %2808 = vmatpush1.msra.mxu0 0.0
        %2809 = vmatprep.subr.mxu0 0.0
        %2810 = vmatpush1.msra.mxu0 0.0
        %2811 = vmatprep.subr.mxu0 0.0
        %2812 = vmatpush1.msra.mxu0 0.0
        %2813 = vmatprep.subr.mxu0 0.0
        %2814 = vmatpush1.msra.mxu0 0.0
        %2815 = vmatprep.subr.mxu0 0.0
        %2816 = vmatpush1.msra.mxu0 0.0
        %2817 = vmatprep.subr.mxu0 0.0
        %2818 = vmatpush1.msra.mxu0 0.0
        %2819 = vmatprep.subr.mxu0 0.0
        %2820 = vmatpush1.msra.mxu0 0.0
        %2821 = vmatprep.subr.mxu0 0.0
        %2822 = vmatpush1.msra.mxu0 0.0
        %2823 = vmatprep.subr.mxu0 0.0
        %2824 = vmatpush1.msra.mxu0 0.0
        %2825 = vmatprep.subr.mxu0 0.0
        %2826 = vmatpush1.msra.mxu0 0.0
        %2827 = vmatprep.subr.mxu0 0.0
        %2828 = vmatpush1.msra.mxu0 0.0
        %2829 = vmatprep.subr.mxu0 0.0
        %2830 = vmatpush1.msra.mxu0 0.0
        %2831 = vmatprep.subr.mxu0 0.0
        %2832 = vmatpush1.msra.mxu0 0.0
        %2833 = vmatprep.subr.mxu0 0.0
        %2834 = vmatpush1.msra.mxu0 0.0
        %2835 = vmatprep.mubr.f32.mxu0 0.0
        %2836 = vmatmul.mubr.f32.gmra.mrb[0].mxu0 %v2769
        %v2837 = vpop.f32.mrb[0].mxu0
        %v2838 = vadd.f32 %v2765, %v2837
        %v2839 = vpop.f32.mrb[0].mxu0
        %2840 = vdwg.mxu0
        %v2841 = vadd.f32 %v2637, %v2838
        %2842 = vst.msk [vmem:[%s767] sm:$0xff] %vm788, %v2841
        %s2843 = sand.u32 %s570, 1
        %s2844 = scalar_lea.sflag [#allocation3], %s2843
        %s2845 = sand.u32 %s570, 1
        %s2846 = smul.addr %s2845, 8
        %s2847 = scalar_lea.vmem [#allocation2], %s2846
        // Predicated region
        $region117: #{decoder_layer.1} parent=115 // pred_check
          %p2848 = pneg %p580
        $region118: #{decoder_layer.1} parent=115 // pred_check_branch
          %2850 = sbr.rel (%p2848) target = $region120
        $region119: #{decoder_layer.1} parent=115 // pred_region
          %s2852 = ssub.s32 128, 128
          %2853 = vsyncadd %s2844, %s2852
          %s2854 = smul.addr %s38, 128
          %s2855 = scalar_lea.hbm %s24, %s2854
          %s2857 = sshll.u32 %s2847, 4
          %s2858 = int_to_ptr.vmem [resolvable:$true] %s2857
          %2860 = dma.vmem_to_hbm [thread:$0]  %s2858, 128, %s2855, %s2844
        $region120: #{decoder_layer.1} parent=115 // pred_fallthru
          _
      $region116: #{decoder_layer.1} parent=5 // pred_fallthru
        _
      %p2861 = scmp.le.s32.totalorder 2, %s33
      // Predicated region
      $region121: #{decoder_layer.1} parent=5 // pred_check
        %p2862 = pneg %p2861
      $region122: #{decoder_layer.1} parent=5 // pred_check_branch
        %2864 = sbr.rel (%p2862) target = $region124
      $region123: #{decoder_layer.1} parent=5 // pred_region
        %s2865 = ssub.s32 %s33, 2
        // Predicated region
        $region125: #{decoder_layer.1} parent=123 // pred_check
          %p2866 = pneg %p586
        $region126: #{decoder_layer.1} parent=123 // pred_check_branch
          %2868 = sbr.rel (%p2866) target = $region128
        $region127: #{decoder_layer.1} parent=123 // pred_region
          %s2869 = sand.u32 %s571, 1
          %s2870 = scalar_lea.sflag [#allocation3], %s2869
          %s2871 = sand.u32 %s571, 1
          %s2872 = smul.addr %s2871, 8
          %s2873 = scalar_lea.vmem [#allocation2], %s2872
          %2874 = dma.done %s2870, 128
        $region128: #{decoder_layer.1} parent=123 // pred_fallthru
          _
      $region124: #{decoder_layer.1} parent=5 // pred_fallthru
        _
    $region6: #{decoder_layer.1} parent=1 // loop_footer
      %s37 = sadd.s32 1, %s33
    $region7: #{decoder_layer.1} parent=1 // loop_footer_branch
      %32 = sbr.rel target = $region3
    $region8: #{decoder_layer.1} parent=1 // loop_exit
      _
    %2875 = vsyncpa [#allocation3], 1
    %s2876 = scalar_lea.sflag [#allocation3], 1
    %2877 = vsyncpa %s2876, 1

</llo_original>
